<compile_context>
chip_gen: v7x
topology: tpu7x:2x2x1
jax: 0.10.0
libtpu: 0.0.40
codegen_flags: <defaults>
</compile_context>

<pallas_src>
import functools

import jax
import jax.numpy as jnp
import numpy as np
from jax.experimental import pallas as pl
from jax.experimental.pallas import tpu as pltpu


# ---------------------------------------------------------------------------
# Pallas kernel
# ---------------------------------------------------------------------------
def _upsample_conv_kernel(fmap_ref, widx_ref, x_ref, w_ref, b_ref, o_ref,
                          acc_ref, *, fold_k):
    # Grid: (B, T_out, nH, 2).  Last axis j indexes the (at most) 2 distinct original
    # frames feeding one output frame; temporal tap weights are pre-summed per class.
    #   x_ref : (1, 1, tHh+2, W+2, Cin)   row window (+1 halo) of one original frame,
    #                                     replicate-padded spatially in the wrapper
    #   w_ref : (16, 4*Cin, Cout)  if fold_k else (64, Cin, Cout)   combined weights
    #   b_ref : (1, 2*Cout)               bias duplicated for the two W parities
    #   o_ref : (1, 1, 2*tHh, W, 2*Cout)  W parity packed into channels
    #   acc_ref: (2, tHh, W, 2*Cout) f32  accumulator over j (row parity major)
    t = pl.program_id(1)
    j = pl.program_id(3)

    tHh = acc_ref.shape[1]
    W = acc_ref.shape[2]
    Cout = acc_ref.shape[3] // 2
    Cin = x_ref.shape[-1]

    @pl.when(j == 0)
    def _init():
        acc_ref[...] = jnp.zeros_like(acc_ref)

    q = widx_ref[t, j]  # temporal weight-combo id for this step (from SMEM table)

    # 9 shifted slabs (row offset 0/1/2 x col offset 0/1/2); each loaded once, reused
    # by every parity class that needs it (all offsets are static -> plain slices).
    slabs = {}

    def slab(r0, c0):
        if (r0, c0) not in slabs:
            v = x_ref[0, 0, r0:r0 + tHh, c0:c0 + W, :]
            slabs[(r0, c0)] = v.reshape(tHh * W, Cin)
        return slabs[(r0, c0)]

    for ph in range(2):          # output row parity
        for pw in range(2):      # output col parity
            if fold_k:
                # Small Cin: fold the 2x2 spatial taps into K (K = 4*Cin), one matmul.
                xk = jnp.concatenate(
                    [slab(ph + a, pw + b) for a in range(2) for b in range(2)],
                    axis=-1)                                       # (tHh*W, 4*Cin)
                wk = w_ref[q * 4 + ph * 2 + pw]                     # (4*Cin, Cout)
                yk = jnp.dot(xk, wk, preferred_element_type=jnp.float32)
            else:
                # Large Cin: 4 accumulating K=Cin matmuls, no concat copies.
                yk = None
                for a in range(2):
                    for b in range(2):
                        wk = w_ref[q * 16 + ph * 8 + pw * 4 + a * 2 + b]  # (Cin, Cout)
                        d = jnp.dot(slab(ph + a, pw + b), wk,
                                    preferred_element_type=jnp.float32)
                        yk = d if yk is None else yk + d
            acc_ref[ph, :, :, pw * Cout:(pw + 1) * Cout] += yk.reshape(tHh, W, Cout)

    @pl.when(j == pl.num_programs(3) - 1)
    def _finalize():
        # Interleave even/odd output rows ONCE, add bias, store lane-dense.
        res = jnp.stack([acc_ref[0], acc_ref[1]], axis=1)          # (tHh, 2, W, 2*Cout)
        res = res + b_ref[...].astype(jnp.float32)
        res = res.reshape(2 * tHh, W, 2 * Cout)
        o_ref[0, 0] = res.astype(o_ref.dtype)


# ---------------------------------------------------------------------------
# Wrapper helpers
# ---------------------------------------------------------------------------
def _vmem_limit_bytes():
    try:
        kind = jax.devices()[0].device_kind.lower()
    except Exception:
        kind = ""
    if any(v in kind for v in ("v2", "v3")):
        return 12 * 1024 * 1024
    if any(v in kind for v in ("v4", "v5", "v6")):
        return 96 * 1024 * 1024          # 128 MiB physical VMEM -> use it with headroom
    return 48 * 1024 * 1024              # v7x (64 MiB physical) / unknown: stay conservative


def _pick_block_rows(H, W, Cin, Cout, in_itemsize, out_itemsize, budget_bytes):
    """Largest divisor tHh of H (original rows per tile) whose per-step VMEM fits."""
    best = 1
    for tHh in range(1, H + 1):
        if H % tHh:
            continue
        x_blk = (tHh + 2) * (W + 2) * Cin * in_itemsize            # input window
        o_blk = 2 * tHh * W * 2 * Cout * out_itemsize              # output tile
        acc = 2 * tHh * W * 2 * Cout * 4                           # f32 accumulator
        tmp = tHh * W * (4 * Cin * max(in_itemsize, 4) + 2 * Cout * 4)  # matmul temporaries
        if 2 * x_blk + 2 * o_blk + acc + tmp <= budget_bytes:
            best = tHh
    return best


# ---------------------------------------------------------------------------
# Wrapper: upsample (nearest, causal) + 3x3x3 causal conv, NCDHW in / NCDHW out
# ---------------------------------------------------------------------------
def hunyuan_upsample_causal3d(x, weight, bias, *, block_rows=None,
                              compute_dtype=None, fold_k=None):
    """x: (B, Cin, T, H, W); weight: (3,3,3,Cin,Cout) as (kt,kh,kw,ci,co); bias: (Cout,).

    Returns (B, Cout, 2T-1, 2H, 2W), matching HunyuanVideoUpsampleCausal3D.forward.
    """
    B, Cin, T, H, W = x.shape
    assert weight.shape[:4] == (3, 3, 3, Cin)
    Cout = weight.shape[-1]
    T_out, Ho, Wo = 2 * T - 1, 2 * H, 2 * W

    if fold_k is None:
        fold_k = Cin <= 64   # fold taps into K only when K would otherwise be tiny

    # ---- temporal tap -> (frame, weight-combo) tables (kt axis collapsed 3 -> 2) ----
    p = np.arange(T_out)[:, None] + np.arange(3)[None, :]   # padded-time index
    u = np.maximum(p - 2, 0)                                 # upsampled frame index
    g = np.where(u == 0, 0, 1 + (u - 1) // 2)                # original frame index (T_out, 3)
    class_a = g[:, 0] == g[:, 1]                             # taps (0,1) share a frame
    f0 = g[:, 0]
    f1 = np.where(class_a, g[:, 2], g[:, 1])
    fmap = jnp.asarray(np.stack([f0, f1], 1), jnp.int32)     # (T_out, 2) frame ids
    wcls = np.where(class_a, 0, 1)
    widx = jnp.asarray(np.stack([2 * wcls, 2 * wcls + 1], 1), jnp.int32)  # (T_out, 2)

    # ---- pre-combined weights ---------------------------------------------------------
    # temporal combos q: A0 = w0+w1, A1 = w2, B0 = w0, B1 = w1+w2
    tcomb = jnp.asarray(np.array([[1, 1, 0], [0, 0, 1], [1, 0, 0], [0, 1, 1]], np.float32))
    # spatial sub-pixel combos per output parity (x2 upsample + replicate pad folded in)
    sel = jnp.asarray(np.array([[[1, 0, 0], [0, 1, 1]],
                                [[1, 1, 0], [0, 0, 1]]], np.float32))   # (parity, tap, k)
    wc = jnp.einsum("qt,hak,wbl,tklio->qhwabio",
                    tcomb, sel, sel, weight.astype(jnp.float32))  # (4,2,2,2,2,Cin,Cout)
    bias2 = jnp.concatenate([bias, bias]).reshape(1, 2 * Cout).astype(jnp.float32)

    # ---- channels-last, replicate pad, per-tile row windows ----------------------------
    x_l = jnp.transpose(x, (0, 2, 3, 4, 1))                   # (B, T, H, W, Cin)
    in_dt = jnp.dtype(compute_dtype) if compute_dtype is not None else x_l.dtype
    x_l = x_l.astype(in_dt)
    wc = wc.astype(in_dt)
    out_dtype = x.dtype

    vmem_limit = _vmem_limit_bytes()
    w_bytes = 64 * Cin * Cout * jnp.dtype(in_dt).itemsize + bias2.size * 4
    if block_rows is None:
        budget = max(int(0.75 * vmem_limit) - w_bytes, vmem_limit // 8)
        block_rows = _pick_block_rows(H, W, Cin, Cout, jnp.dtype(in_dt).itemsize,
                                      jnp.dtype(out_dtype).itemsize, budget)
    tHh = int(block_rows)
    assert 1 <= tHh <= H and H % tHh == 0
    nH = H // tHh

    x_p = jnp.pad(x_l, ((0, 0), (0, 0), (1, 1), (1, 1), (0, 0)), mode="edge")
    # Overlapping row windows (+1-row halo each side), materialised once so the kernel
    # in_spec stays plain blocked indexing and each grid step DMAs only its own rows.
    # TODO(synk): use a pl.Element offset index_map to avoid this small window copy and
    #             add a Cout grid axis (tile 128/256) for very large channels on v7x.
    x_win = jnp.stack([x_p[:, :, h * tHh:h * tHh + tHh + 2] for h in range(nH)], axis=2)
    x_win = x_win.reshape(B, T * nH, tHh + 2, W + 2, Cin)

    wck = wc.reshape(16, 4 * Cin, Cout) if fold_k else wc.reshape(64, Cin, Cout)
    kernel = functools.partial(_upsample_conv_kernel, fold_k=fold_k)

    def build(resident_params):
        if resident_params:
            # weights/bias resident whole in VMEM: single copy, no per-step DMA
            w_spec = pl.BlockSpec(memory_space=pltpu.MemorySpace.VMEM)
            b_spec = pl.BlockSpec(memory_space=pltpu.MemorySpace.VMEM)
        else:
            # Compatibility fallback only: whole-array block, constant index (never
            # re-fetched, but the default pipeline keeps two copies of it in VMEM).
            w_spec = pl.BlockSpec(wck.shape, lambda b, t, h, j, fm, wi: (0, 0, 0))
            b_spec = pl.BlockSpec(bias2.shape, lambda b, t, h, j, fm, wi: (0, 0))
        return pl.pallas_call(
            kernel,
            out_shape=jax.ShapeDtypeStruct((B, T_out, Ho, W, 2 * Cout), out_dtype),
            grid_spec=pltpu.PrefetchScalarGridSpec(
                num_scalar_prefetch=2,
                grid=(B, T_out, nH, 2),
                in_specs=[
                    # only this H-tile's rows (+halo) of the selected original frame
                    pl.BlockSpec((1, 1, tHh + 2, W + 2, Cin),
                                 lambda b, t, h, j, fm, wi: (b, fm[t, j] * nH + h, 0, 0, 0)),
                    w_spec,
                    b_spec,
                ],
                out_specs=pl.BlockSpec((1, 1, 2 * tHh, W, 2 * Cout),
                                       lambda b, t, h, j, fm, wi: (b, t, h, 0, 0)),
                scratch_shapes=[pltpu.VMEM((2, tHh, W, 2 * Cout), jnp.float32)],
            ),
            compiler_params=pltpu.CompilerParams(
                dimension_semantics=("parallel", "parallel", "parallel", "arbitrary"),
                vmem_limit_bytes=vmem_limit,
            ),
        )

    try:
        y = build(True)(fmap, widx, x_win, wck, bias2)
    except Exception:
        # Narrow compatibility fallback for Pallas versions without memory-space-only
        # input specs; the kernel body is identical, so real bugs still surface here.
        y = build(False)(fmap, widx, x_win, wck, bias2)

    # Un-pack the W parity from channels back into width (row-major reshape -> free),
    # then back to NCDHW to match the nn.Module interface.
    y = y.reshape(B, T_out, Ho, Wo, Cout)
    return jnp.transpose(y, (0, 4, 1, 2, 3))


# ---------------------------------------------------------------------------
# Pure-JAX reference for verification
# ---------------------------------------------------------------------------
def _reference(x, weight, bias):
    B, C, T, H, W = x.shape
    first = x[:, :, :1]
    first_up = jnp.repeat(jnp.repeat(first, 2, axis=3), 2, axis=4)
    if T > 1:
        other = x[:, :, 1:]
        other_up = jnp.repeat(jnp.repeat(jnp.repeat(other, 2, axis=2), 2, axis=3), 2, axis=4)
        up = jnp.concatenate([first_up, other_up], axis=2)
    else:
        up = first_up
    up_pad = jnp.pad(up, ((0, 0), (0, 0), (2, 0), (1, 1), (1, 1)), mode="edge")
    w_oidhw = jnp.transpose(weight, (4, 3, 0, 1, 2))
    out = jax.lax.conv_general_dilated(
        up_pad, w_oidhw, window_strides=(1, 1, 1), padding="VALID",
        dimension_numbers=("NCDHW", "OIDHW", "NCDHW"))
    return out + bias.reshape(1, -1, 1, 1, 1)


# ---------------------------------------------------------------------------
# Main
# ---------------------------------------------------------------------------
if __name__ == "__main__":
    key = jax.random.PRNGKey(0)
    k_x, k_w, k_b = jax.random.split(key, 3)

    # small shapes: batch=2, in/out channels=4, T=3, H=W=8
    B, Cin, Cout, T, H, W = 2, 4, 4, 3, 8, 8

    x = jax.random.normal(k_x, (B, Cin, T, H, W), dtype=jnp.float32)
    weight = jax.random.normal(k_w, (3, 3, 3, Cin, Cout), dtype=jnp.float32) * 0.1
    bias = jax.random.normal(k_b, (Cout,), dtype=jnp.float32) * 0.1

    ref = jax.block_until_ready(_reference(x, weight, bias))
    assert ref.shape == (B, Cout, 2 * T - 1, 2 * H, 2 * W)

    # 1) f32 operands, K-folded matmul path, single H tile
    out_a = jax.block_until_ready(hunyuan_upsample_causal3d(x, weight, bias, fold_k=True))
    # 2) f32 operands, per-tap accumulating matmul path, two H tiles (exercises halos)
    out_b = jax.block_until_ready(
        hunyuan_upsample_causal3d(x, weight, bias, fold_k=False, block_rows=4))
    # 3) bf16 operands (production setting); accumulation stays f32 inside the kernel
    out_c = jax.block_until_ready(
        hunyuan_upsample_causal3d(x, weight, bias, compute_dtype=jnp.bfloat16))

    for out, tol in ((out_a, 1e-3), (out_b, 1e-3), (out_c, 1e-1)):
        assert out.shape == ref.shape, (out.shape, ref.shape)
        max_err = float(jnp.max(jnp.abs(out.astype(jnp.float32) - ref)))
        assert max_err < tol, max_err

    print("KERNEL_OK")
</pallas_src>

<mosaic_0001>
module attributes {stable_mosaic.version = 11 : i64} {
  func.func @_upsample_conv_kernel(%arg0: i32, %arg1: i32, %arg2: i32, %arg3: i32, %arg4: memref<5x2xi32, #tpu.memory_space<smem>>, %arg5: memref<5x2xi32, #tpu.memory_space<smem>>, %arg6: memref<1x1x10x10x4xf32, #tpu.memory_space<vmem>>, %arg7: memref<16x16x4xf32, #tpu.memory_space<vmem>>, %arg8: memref<1x8xf32, #tpu.memory_space<vmem>>, %arg9: memref<1x1x16x8x8xf32, #tpu.memory_space<vmem>>, %arg10: memref<2x8x8x8xf32, #tpu.memory_space<vmem>>) attributes {dimension_semantics = [#tpu.dimension_semantics<parallel>, #tpu.dimension_semantics<parallel>, #tpu.dimension_semantics<parallel>, #tpu.dimension_semantics<arbitrary>], iteration_bounds = array<i64: 2, 5, 1, 2>, scalar_prefetch = 2 : i64, scratch_operands = 1 : i64, tpu.core_type = #tpu.core_type<tc>, window_params = [{transform_indices = @transform_0, window_bounds = array<i64: 1, 1, 10, 10, 4>}, {pipeline_mode = #tpu.pipeline_mode<synchronous>, transform_indices = @transform_1, window_bounds = array<i64: 16, 16, 4>}, {pipeline_mode = #tpu.pipeline_mode<synchronous>, transform_indices = @transform_2, window_bounds = array<i64: 1, 8>}, {transform_indices = @transform_3, window_bounds = array<i64: 1, 1, 16, 8, 8>}]} {
    %c0_i32 = arith.constant 0 : i32
    %0 = arith.cmpi eq, %arg3, %c0_i32 : i32
    %1 = arith.extui %0 : i1 to i32
    %c0_i32_0 = arith.constant 0 : i32
    %2 = arith.cmpi ne, %1, %c0_i32_0 : i32
    scf.if %2 {
      %cst_96 = arith.constant 0.000000e+00 : f32
      %96 = vector.broadcast %cst_96 : f32 to vector<2x8x8x8xf32>
      %c0_97 = arith.constant 0 : index
      %c0_98 = arith.constant 0 : index
      %c0_99 = arith.constant 0 : index
      %c0_100 = arith.constant 0 : index
      %97 = vector.load %arg10[%c0_97, %c0_98, %c0_99, %c0_100] : memref<2x8x8x8xf32, #tpu.memory_space<vmem>>, vector<2x8x8x8xf32>
      tpu.vector_store %arg10[%c0_97, %c0_98, %c0_99, %c0_100], %96 {strides = array<i32>} : memref<2x8x8x8xf32, #tpu.memory_space<vmem>>, vector<2x8x8x8xf32>,
    } else {
    }
    %3 = arith.index_cast %arg1 : i32 to index
    %4 = arith.index_cast %arg3 : i32 to index
    %5 = memref.load %arg5[%3, %4] : memref<5x2xi32, #tpu.memory_space<smem>>
    %c0 = arith.constant 0 : index
    %c0_1 = arith.constant 0 : index
    %c0_2 = arith.constant 0 : index
    %c0_3 = arith.constant 0 : index
    %c0_4 = arith.constant 0 : index
    %6 = vector.load %arg6[%c0, %c0_1, %c0_2, %c0_3, %c0_4] : memref<1x1x10x10x4xf32, #tpu.memory_space<vmem>>, vector<1x1x8x8x4xf32>
    %7 = vector.shape_cast %6 : vector<1x1x8x8x4xf32> to vector<8x8x4xf32>
    %8 = vector.shape_cast %7 : vector<8x8x4xf32> to vector<64x4xf32>
    %c0_5 = arith.constant 0 : index
    %c0_6 = arith.constant 0 : index
    %c0_7 = arith.constant 0 : index
    %c1 = arith.constant 1 : index
    %c0_8 = arith.constant 0 : index
    %9 = vector.load %arg6[%c0_5, %c0_6, %c0_7, %c1, %c0_8] : memref<1x1x10x10x4xf32, #tpu.memory_space<vmem>>, vector<1x1x8x8x4xf32>
    %10 = vector.shape_cast %9 : vector<1x1x8x8x4xf32> to vector<8x8x4xf32>
    %11 = vector.shape_cast %10 : vector<8x8x4xf32> to vector<64x4xf32>
    %c0_9 = arith.constant 0 : index
    %c0_10 = arith.constant 0 : index
    %c1_11 = arith.constant 1 : index
    %c0_12 = arith.constant 0 : index
    %c0_13 = arith.constant 0 : index
    %12 = vector.load %arg6[%c0_9, %c0_10, %c1_11, %c0_12, %c0_13] : memref<1x1x10x10x4xf32, #tpu.memory_space<vmem>>, vector<1x1x8x8x4xf32>
    %13 = vector.shape_cast %12 : vector<1x1x8x8x4xf32> to vector<8x8x4xf32>
    %14 = vector.shape_cast %13 : vector<8x8x4xf32> to vector<64x4xf32>
    %c0_14 = arith.constant 0 : index
    %c0_15 = arith.constant 0 : index
    %c1_16 = arith.constant 1 : index
    %c1_17 = arith.constant 1 : index
    %c0_18 = arith.constant 0 : index
    %15 = vector.load %arg6[%c0_14, %c0_15, %c1_16, %c1_17, %c0_18] : memref<1x1x10x10x4xf32, #tpu.memory_space<vmem>>, vector<1x1x8x8x4xf32>
    %16 = vector.shape_cast %15 : vector<1x1x8x8x4xf32> to vector<8x8x4xf32>
    %17 = vector.shape_cast %16 : vector<8x8x4xf32> to vector<64x4xf32>
    %18 = tpu.concatenate %8, %11, %14, %17 in 1 : vector<64x4xf32>, vector<64x4xf32>, vector<64x4xf32>, vector<64x4xf32> -> vector<64x16xf32>
    %c4_i32 = arith.constant 4 : i32
    %19 = arith.muli %5, %c4_i32 : i32
    %c0_i32_19 = arith.constant 0 : i32
    %20 = arith.addi %19, %c0_i32_19 : i32
    %c0_i32_20 = arith.constant 0 : i32
    %21 = arith.addi %20, %c0_i32_20 : i32
    %22 = arith.index_cast %21 : i32 to index
    %c0_21 = arith.constant 0 : index
    %c0_22 = arith.constant 0 : index
    %23 = vector.load %arg7[%22, %c0_21, %c0_22] : memref<16x16x4xf32, #tpu.memory_space<vmem>>, vector<1x16x4xf32>
    %24 = vector.shape_cast %23 : vector<1x16x4xf32> to vector<16x4xf32>
    %cst = arith.constant dense<0.000000e+00> : vector<64x4xf32>
    %25 = tpu.matmul %18, %24, %cst {dimension_numbers = #tpu.dot_dimension_numbers<[1], [0], [0], [1], [0, 0, 1, 1], [], []>} : vector<64x16xf32>, vector<16x4xf32>, vector<64x4xf32> -> vector<64x4xf32>
    %c0_23 = arith.constant 0 : index
    %c0_24 = arith.constant 0 : index
    %c0_25 = arith.constant 0 : index
    %c0_26 = arith.constant 0 : index
    %26 = vector.load %arg10[%c0_23, %c0_24, %c0_25, %c0_26] : memref<2x8x8x8xf32, #tpu.memory_space<vmem>>, vector<1x8x8x4xf32>
    %27 = vector.shape_cast %26 : vector<1x8x8x4xf32> to vector<8x8x4xf32>
    %28 = vector.shape_cast %25 : vector<64x4xf32> to vector<8x8x4xf32>
    %29 = arith.addf %27, %28 : vector<8x8x4xf32>
    %c0_27 = arith.constant 0 : index
    %c0_28 = arith.constant 0 : index
    %c0_29 = arith.constant 0 : index
    %c0_30 = arith.constant 0 : index
    %30 = vector.load %arg10[%c0_27, %c0_28, %c0_29, %c0_30] : memref<2x8x8x8xf32, #tpu.memory_space<vmem>>, vector<1x8x8x4xf32>
    %31 = vector.shape_cast %30 : vector<1x8x8x4xf32> to vector<8x8x4xf32>
    %32 = vector.shape_cast %29 : vector<8x8x4xf32> to vector<1x8x8x4xf32>
    tpu.vector_store %arg10[%c0_27, %c0_28, %c0_29, %c0_30], %32 {strides = array<i32>} : memref<2x8x8x8xf32, #tpu.memory_space<vmem>>, vector<1x8x8x4xf32>,
    %c0_31 = arith.constant 0 : index
    %c0_32 = arith.constant 0 : index
    %c0_33 = arith.constant 0 : index
    %c2 = arith.constant 2 : index
    %c0_34 = arith.constant 0 : index
    %33 = vector.load %arg6[%c0_31, %c0_32, %c0_33, %c2, %c0_34] : memref<1x1x10x10x4xf32, #tpu.memory_space<vmem>>, vector<1x1x8x8x4xf32>
    %34 = vector.shape_cast %33 : vector<1x1x8x8x4xf32> to vector<8x8x4xf32>
    %35 = vector.shape_cast %34 : vector<8x8x4xf32> to vector<64x4xf32>
    %c0_35 = arith.constant 0 : index
    %c0_36 = arith.constant 0 : index
    %c1_37 = arith.constant 1 : index
    %c2_38 = arith.constant 2 : index
    %c0_39 = arith.constant 0 : index
    %36 = vector.load %arg6[%c0_35, %c0_36, %c1_37, %c2_38, %c0_39] : memref<1x1x10x10x4xf32, #tpu.memory_space<vmem>>, vector<1x1x8x8x4xf32>
    %37 = vector.shape_cast %36 : vector<1x1x8x8x4xf32> to vector<8x8x4xf32>
    %38 = vector.shape_cast %37 : vector<8x8x4xf32> to vector<64x4xf32>
    %39 = tpu.concatenate %11, %35, %17, %38 in 1 : vector<64x4xf32>, vector<64x4xf32>, vector<64x4xf32>, vector<64x4xf32> -> vector<64x16xf32>
    %c4_i32_40 = arith.constant 4 : i32
    %40 = arith.muli %5, %c4_i32_40 : i32
    %c0_i32_41 = arith.constant 0 : i32
    %41 = arith.addi %40, %c0_i32_41 : i32
    %c1_i32 = arith.constant 1 : i32
    %42 = arith.addi %41, %c1_i32 : i32
    %43 = arith.index_cast %42 : i32 to index
    %c0_42 = arith.constant 0 : index
    %c0_43 = arith.constant 0 : index
    %44 = vector.load %arg7[%43, %c0_42, %c0_43] : memref<16x16x4xf32, #tpu.memory_space<vmem>>, vector<1x16x4xf32>
    %45 = vector.shape_cast %44 : vector<1x16x4xf32> to vector<16x4xf32>
    %cst_44 = arith.constant dense<0.000000e+00> : vector<64x4xf32>
    %46 = tpu.matmul %39, %45, %cst_44 {dimension_numbers = #tpu.dot_dimension_numbers<[1], [0], [0], [1], [0, 0, 1, 1], [], []>} : vector<64x16xf32>, vector<16x4xf32>, vector<64x4xf32> -> vector<64x4xf32>
    %c0_45 = arith.constant 0 : index
    %c0_46 = arith.constant 0 : index
    %c0_47 = arith.constant 0 : index
    %c4 = arith.constant 4 : index
    %47 = vector.load %arg10[%c0_45, %c0_46, %c0_47, %c4] : memref<2x8x8x8xf32, #tpu.memory_space<vmem>>, vector<1x8x8x4xf32>
    %48 = vector.shape_cast %47 : vector<1x8x8x4xf32> to vector<8x8x4xf32>
    %49 = vector.shape_cast %46 : vector<64x4xf32> to vector<8x8x4xf32>
    %50 = arith.addf %48, %49 : vector<8x8x4xf32>
    %c0_48 = arith.constant 0 : index
    %c0_49 = arith.constant 0 : index
    %c0_50 = arith.constant 0 : index
    %c4_51 = arith.constant 4 : index
    %51 = vector.load %arg10[%c0_48, %c0_49, %c0_50, %c4_51] : memref<2x8x8x8xf32, #tpu.memory_space<vmem>>, vector<1x8x8x4xf32>
    %52 = vector.shape_cast %51 : vector<1x8x8x4xf32> to vector<8x8x4xf32>
    %53 = vector.shape_cast %50 : vector<8x8x4xf32> to vector<1x8x8x4xf32>
    tpu.vector_store %arg10[%c0_48, %c0_49, %c0_50, %c4_51], %53 {strides = array<i32>} : memref<2x8x8x8xf32, #tpu.memory_space<vmem>>, vector<1x8x8x4xf32>,
    %c0_52 = arith.constant 0 : index
    %c0_53 = arith.constant 0 : index
    %c2_54 = arith.constant 2 : index
    %c0_55 = arith.constant 0 : index
    %c0_56 = arith.constant 0 : index
    %54 = vector.load %arg6[%c0_52, %c0_53, %c2_54, %c0_55, %c0_56] : memref<1x1x10x10x4xf32, #tpu.memory_space<vmem>>, vector<1x1x8x8x4xf32>
    %55 = vector.shape_cast %54 : vector<1x1x8x8x4xf32> to vector<8x8x4xf32>
    %56 = vector.shape_cast %55 : vector<8x8x4xf32> to vector<64x4xf32>
    %c0_57 = arith.constant 0 : index
    %c0_58 = arith.constant 0 : index
    %c2_59 = arith.constant 2 : index
    %c1_60 = arith.constant 1 : index
    %c0_61 = arith.constant 0 : index
    %57 = vector.load %arg6[%c0_57, %c0_58, %c2_59, %c1_60, %c0_61] : memref<1x1x10x10x4xf32, #tpu.memory_space<vmem>>, vector<1x1x8x8x4xf32>
    %58 = vector.shape_cast %57 : vector<1x1x8x8x4xf32> to vector<8x8x4xf32>
    %59 = vector.shape_cast %58 : vector<8x8x4xf32> to vector<64x4xf32>
    %60 = tpu.concatenate %14, %17, %56, %59 in 1 : vector<64x4xf32>, vector<64x4xf32>, vector<64x4xf32>, vector<64x4xf32> -> vector<64x16xf32>
    %c4_i32_62 = arith.constant 4 : i32
    %61 = arith.muli %5, %c4_i32_62 : i32
    %c2_i32 = arith.constant 2 : i32
    %62 = arith.addi %61, %c2_i32 : i32
    %c0_i32_63 = arith.constant 0 : i32
    %63 = arith.addi %62, %c0_i32_63 : i32
    %64 = arith.index_cast %63 : i32 to index
    %c0_64 = arith.constant 0 : index
    %c0_65 = arith.constant 0 : index
    %65 = vector.load %arg7[%64, %c0_64, %c0_65] : memref<16x16x4xf32, #tpu.memory_space<vmem>>, vector<1x16x4xf32>
    %66 = vector.shape_cast %65 : vector<1x16x4xf32> to vector<16x4xf32>
    %cst_66 = arith.constant dense<0.000000e+00> : vector<64x4xf32>
    %67 = tpu.matmul %60, %66, %cst_66 {dimension_numbers = #tpu.dot_dimension_numbers<[1], [0], [0], [1], [0, 0, 1, 1], [], []>} : vector<64x16xf32>, vector<16x4xf32>, vector<64x4xf32> -> vector<64x4xf32>
    %c1_67 = arith.constant 1 : index
    %c0_68 = arith.constant 0 : index
    %c0_69 = arith.constant 0 : index
    %c0_70 = arith.constant 0 : index
    %68 = vector.load %arg10[%c1_67, %c0_68, %c0_69, %c0_70] : memref<2x8x8x8xf32, #tpu.memory_space<vmem>>, vector<1x8x8x4xf32>
    %69 = vector.shape_cast %68 : vector<1x8x8x4xf32> to vector<8x8x4xf32>
    %70 = vector.shape_cast %67 : vector<64x4xf32> to vector<8x8x4xf32>
    %71 = arith.addf %69, %70 : vector<8x8x4xf32>
    %c1_71 = arith.constant 1 : index
    %c0_72 = arith.constant 0 : index
    %c0_73 = arith.constant 0 : index
    %c0_74 = arith.constant 0 : index
    %72 = vector.load %arg10[%c1_71, %c0_72, %c0_73, %c0_74] : memref<2x8x8x8xf32, #tpu.memory_space<vmem>>, vector<1x8x8x4xf32>
    %73 = vector.shape_cast %72 : vector<1x8x8x4xf32> to vector<8x8x4xf32>
    %74 = vector.shape_cast %71 : vector<8x8x4xf32> to vector<1x8x8x4xf32>
    tpu.vector_store %arg10[%c1_71, %c0_72, %c0_73, %c0_74], %74 {strides = array<i32>} : memref<2x8x8x8xf32, #tpu.memory_space<vmem>>, vector<1x8x8x4xf32>,
    %c0_75 = arith.constant 0 : index
    %c0_76 = arith.constant 0 : index
    %c2_77 = arith.constant 2 : index
    %c2_78 = arith.constant 2 : index
    %c0_79 = arith.constant 0 : index
    %75 = vector.load %arg6[%c0_75, %c0_76, %c2_77, %c2_78, %c0_79] : memref<1x1x10x10x4xf32, #tpu.memory_space<vmem>>, vector<1x1x8x8x4xf32>
    %76 = vector.shape_cast %75 : vector<1x1x8x8x4xf32> to vector<8x8x4xf32>
    %77 = vector.shape_cast %76 : vector<8x8x4xf32> to vector<64x4xf32>
    %78 = tpu.concatenate %17, %38, %59, %77 in 1 : vector<64x4xf32>, vector<64x4xf32>, vector<64x4xf32>, vector<64x4xf32> -> vector<64x16xf32>
    %c4_i32_80 = arith.constant 4 : i32
    %79 = arith.muli %5, %c4_i32_80 : i32
    %c2_i32_81 = arith.constant 2 : i32
    %80 = arith.addi %79, %c2_i32_81 : i32
    %c1_i32_82 = arith.constant 1 : i32
    %81 = arith.addi %80, %c1_i32_82 : i32
    %82 = arith.index_cast %81 : i32 to index
    %c0_83 = arith.constant 0 : index
    %c0_84 = arith.constant 0 : index
    %83 = vector.load %arg7[%82, %c0_83, %c0_84] : memref<16x16x4xf32, #tpu.memory_space<vmem>>, vector<1x16x4xf32>
    %84 = vector.shape_cast %83 : vector<1x16x4xf32> to vector<16x4xf32>
    %cst_85 = arith.constant dense<0.000000e+00> : vector<64x4xf32>
    %85 = tpu.matmul %78, %84, %cst_85 {dimension_numbers = #tpu.dot_dimension_numbers<[1], [0], [0], [1], [0, 0, 1, 1], [], []>} : vector<64x16xf32>, vector<16x4xf32>, vector<64x4xf32> -> vector<64x4xf32>
    %c1_86 = arith.constant 1 : index
    %c0_87 = arith.constant 0 : index
    %c0_88 = arith.constant 0 : index
    %c4_89 = arith.constant 4 : index
    %86 = vector.load %arg10[%c1_86, %c0_87, %c0_88, %c4_89] : memref<2x8x8x8xf32, #tpu.memory_space<vmem>>, vector<1x8x8x4xf32>
    %87 = vector.shape_cast %86 : vector<1x8x8x4xf32> to vector<8x8x4xf32>
    %88 = vector.shape_cast %85 : vector<64x4xf32> to vector<8x8x4xf32>
    %89 = arith.addf %87, %88 : vector<8x8x4xf32>
    %c1_90 = arith.constant 1 : index
    %c0_91 = arith.constant 0 : index
    %c0_92 = arith.constant 0 : index
    %c4_93 = arith.constant 4 : index
    %90 = vector.load %arg10[%c1_90, %c0_91, %c0_92, %c4_93] : memref<2x8x8x8xf32, #tpu.memory_space<vmem>>, vector<1x8x8x4xf32>
    %91 = vector.shape_cast %90 : vector<1x8x8x4xf32> to vector<8x8x4xf32>
    %92 = vector.shape_cast %89 : vector<8x8x4xf32> to vector<1x8x8x4xf32>
    tpu.vector_store %arg10[%c1_90, %c0_91, %c0_92, %c4_93], %92 {strides = array<i32>} : memref<2x8x8x8xf32, #tpu.memory_space<vmem>>, vector<1x8x8x4xf32>,
    %c1_i32_94 = arith.constant 1 : i32
    %93 = arith.cmpi eq, %arg3, %c1_i32_94 : i32
    %94 = arith.extui %93 : i1 to i32
    %c0_i32_95 = arith.constant 0 : i32
    %95 = arith.cmpi ne, %94, %c0_i32_95 : i32
    scf.if %95 {
      %c0_96 = arith.constant 0 : index
      %c0_97 = arith.constant 0 : index
      %c0_98 = arith.constant 0 : index
      %c0_99 = arith.constant 0 : index
      %96 = vector.load %arg10[%c0_96, %c0_97, %c0_98, %c0_99] : memref<2x8x8x8xf32, #tpu.memory_space<vmem>>, vector<1x8x8x8xf32>
      %97 = vector.shape_cast %96 : vector<1x8x8x8xf32> to vector<8x8x8xf32>
      %c1_100 = arith.constant 1 : index
      %c0_101 = arith.constant 0 : index
      %c0_102 = arith.constant 0 : index
      %c0_103 = arith.constant 0 : index
      %98 = vector.load %arg10[%c1_100, %c0_101, %c0_102, %c0_103] : memref<2x8x8x8xf32, #tpu.memory_space<vmem>>, vector<1x8x8x8xf32>
      %99 = vector.shape_cast %98 : vector<1x8x8x8xf32> to vector<8x8x8xf32>
      %100 = vector.shape_cast %97 : vector<8x8x8xf32> to vector<8x1x8x8xf32>
      %101 = vector.shape_cast %99 : vector<8x8x8xf32> to vector<8x1x8x8xf32>
      %102 = tpu.concatenate %100, %101 in 1 : vector<8x1x8x8xf32>, vector<8x1x8x8xf32> -> vector<8x2x8x8xf32>
      %c0_104 = arith.constant 0 : index
      %c0_105 = arith.constant 0 : index
      %103 = vector.load %arg8[%c0_104, %c0_105] : memref<1x8xf32, #tpu.memory_space<vmem>>, vector<1x8xf32>
      %104 = vector.shape_cast %103 : vector<1x8xf32> to vector<1x1x1x8xf32>
      %105 = vector.broadcast %104 : vector<1x1x1x8xf32> to vector<8x2x8x8xf32>
      %106 = arith.addf %102, %105 : vector<8x2x8x8xf32>
      %107 = vector.shape_cast %106 : vector<8x2x8x8xf32> to vector<16x8x8xf32>
      %c0_106 = arith.constant 0 : index
      %c0_107 = arith.constant 0 : index
      %c0_108 = arith.constant 0 : index
      %c0_109 = arith.constant 0 : index
      %c0_110 = arith.constant 0 : index
      %108 = vector.load %arg9[%c0_106, %c0_107, %c0_108, %c0_109, %c0_110] : memref<1x1x16x8x8xf32, #tpu.memory_space<vmem>>, vector<1x1x16x8x8xf32>
      %109 = vector.shape_cast %108 : vector<1x1x16x8x8xf32> to vector<16x8x8xf32>
      %110 = vector.shape_cast %107 : vector<16x8x8xf32> to vector<1x1x16x8x8xf32>
      tpu.vector_store %arg9[%c0_106, %c0_107, %c0_108, %c0_109, %c0_110], %110 {strides = array<i32>} : memref<1x1x16x8x8xf32, #tpu.memory_space<vmem>>, vector<1x1x16x8x8xf32>,
    } else {
    }
    return
  }
  func.func @transform_0(%arg0: i32, %arg1: i32, %arg2: i32, %arg3: i32, %arg4: memref<5x2xi32, #tpu.memory_space<smem>>, %arg5: memref<5x2xi32, #tpu.memory_space<smem>>) -> (i32, i32, i32, i32, i32) {
    %0 = arith.index_cast %arg1 : i32 to index
    %1 = arith.index_cast %arg3 : i32 to index
    %2 = memref.load %arg4[%0, %1] : memref<5x2xi32, #tpu.memory_space<smem>>
    %c1_i32 = arith.constant 1 : i32
    %3 = arith.muli %2, %c1_i32 : i32
    %4 = arith.addi %3, %arg2 : i32
    %c0_i32 = arith.constant 0 : i32
    %c0_i32_0 = arith.constant 0 : i32
    %c0_i32_1 = arith.constant 0 : i32
    %c0_i32_2 = arith.constant 0 : i32
    return %arg0, %4, %c0_i32, %c0_i32_0, %c0_i32_1 : i32, i32, i32, i32, i32
  }
  func.func @transform_1(%arg0: i32, %arg1: i32, %arg2: i32, %arg3: i32, %arg4: memref<5x2xi32, #tpu.memory_space<smem>>, %arg5: memref<5x2xi32, #tpu.memory_space<smem>>) -> (i32, i32, i32) {
    %c0_i32 = arith.constant 0 : i32
    %c0_i32_0 = arith.constant 0 : i32
    %c0_i32_1 = arith.constant 0 : i32
    %c0_i32_2 = arith.constant 0 : i32
    return %c0_i32, %c0_i32_0, %c0_i32_1 : i32, i32, i32
  }
  func.func @transform_2(%arg0: i32, %arg1: i32, %arg2: i32, %arg3: i32, %arg4: memref<5x2xi32, #tpu.memory_space<smem>>, %arg5: memref<5x2xi32, #tpu.memory_space<smem>>) -> (i32, i32) {
    %c0_i32 = arith.constant 0 : i32
    %c0_i32_0 = arith.constant 0 : i32
    %c0_i32_1 = arith.constant 0 : i32
    return %c0_i32, %c0_i32_0 : i32, i32
  }
  func.func @transform_3(%arg0: i32, %arg1: i32, %arg2: i32, %arg3: i32, %arg4: memref<5x2xi32, #tpu.memory_space<smem>>, %arg5: memref<5x2xi32, #tpu.memory_space<smem>>) -> (i32, i32, i32, i32, i32) {
    %c0_i32 = arith.constant 0 : i32
    %c0_i32_0 = arith.constant 0 : i32
    %c0_i32_1 = arith.constant 0 : i32
    return %arg0, %arg1, %arg2, %c0_i32, %c0_i32_0 : i32, i32, i32, i32, i32
  }
}

module attributes {stable_mosaic.version = 11 : i64} {
  func.func @_upsample_conv_kernel(%arg0: i32, %arg1: i32, %arg2: i32, %arg3: i32, %arg4: memref<5x2xi32, #tpu.memory_space<smem>>, %arg5: memref<5x2xi32, #tpu.memory_space<smem>>, %arg6: memref<1x1x10x10x4xf32, #tpu.memory_space<vmem>>, %arg7: memref<16x16x4xf32, #tpu.memory_space<vmem>>, %arg8: memref<1x8xf32, #tpu.memory_space<vmem>>, %arg9: memref<1x1x16x8x8xf32, #tpu.memory_space<vmem>>, %arg10: memref<2x8x8x8xf32, #tpu.memory_space<vmem>>) attributes {dimension_semantics = [#tpu.dimension_semantics<parallel>, #tpu.dimension_semantics<parallel>, #tpu.dimension_semantics<parallel>, #tpu.dimension_semantics<arbitrary>], iteration_bounds = array<i64: 2, 5, 1, 2>, scalar_prefetch = 2 : i64, scratch_operands = 1 : i64, tpu.core_type = #tpu.core_type<tc>, window_params = [{transform_indices = @transform_0, window_bounds = array<i64: 1, 1, 10, 10, 4>}, {pipeline_mode = #tpu.pipeline_mode<synchronous>, transform_indices = @transform_1, window_bounds = array<i64: 16, 16, 4>}, {pipeline_mode = #tpu.pipeline_mode<synchronous>, transform_indices = @transform_2, window_bounds = array<i64: 1, 8>}, {transform_indices = @transform_3, window_bounds = array<i64: 1, 1, 16, 8, 8>}]} {
    %c0_i32 = arith.constant 0 : i32
    %0 = arith.cmpi eq, %arg3, %c0_i32 : i32
    %1 = arith.extui %0 : i1 to i32
    %c0_i32_0 = arith.constant 0 : i32
    %2 = arith.cmpi ne, %1, %c0_i32_0 : i32
    scf.if %2 {
      %cst_96 = arith.constant 0.000000e+00 : f32
      %96 = vector.broadcast %cst_96 : f32 to vector<2x8x8x8xf32>
      %c0_97 = arith.constant 0 : index
      %c0_98 = arith.constant 0 : index
      %c0_99 = arith.constant 0 : index
      %c0_100 = arith.constant 0 : index
      %97 = vector.load %arg10[%c0_97, %c0_98, %c0_99, %c0_100] : memref<2x8x8x8xf32, #tpu.memory_space<vmem>>, vector<2x8x8x8xf32>
      tpu.vector_store %arg10[%c0_97, %c0_98, %c0_99, %c0_100], %96 {strides = array<i32>} : memref<2x8x8x8xf32, #tpu.memory_space<vmem>>, vector<2x8x8x8xf32>,
    } else {
    }
    %3 = arith.index_cast %arg1 : i32 to index
    %4 = arith.index_cast %arg3 : i32 to index
    %5 = memref.load %arg5[%3, %4] : memref<5x2xi32, #tpu.memory_space<smem>>
    %c0 = arith.constant 0 : index
    %c0_1 = arith.constant 0 : index
    %c0_2 = arith.constant 0 : index
    %c0_3 = arith.constant 0 : index
    %c0_4 = arith.constant 0 : index
    %6 = vector.load %arg6[%c0, %c0_1, %c0_2, %c0_3, %c0_4] : memref<1x1x10x10x4xf32, #tpu.memory_space<vmem>>, vector<1x1x8x8x4xf32>
    %7 = vector.shape_cast %6 : vector<1x1x8x8x4xf32> to vector<8x8x4xf32>
    %8 = vector.shape_cast %7 : vector<8x8x4xf32> to vector<64x4xf32>
    %c0_5 = arith.constant 0 : index
    %c0_6 = arith.constant 0 : index
    %c0_7 = arith.constant 0 : index
    %c1 = arith.constant 1 : index
    %c0_8 = arith.constant 0 : index
    %9 = vector.load %arg6[%c0_5, %c0_6, %c0_7, %c1, %c0_8] : memref<1x1x10x10x4xf32, #tpu.memory_space<vmem>>, vector<1x1x8x8x4xf32>
    %10 = vector.shape_cast %9 : vector<1x1x8x8x4xf32> to vector<8x8x4xf32>
    %11 = vector.shape_cast %10 : vector<8x8x4xf32> to vector<64x4xf32>
    %c0_9 = arith.constant 0 : index
    %c0_10 = arith.constant 0 : index
    %c1_11 = arith.constant 1 : index
    %c0_12 = arith.constant 0 : index
    %c0_13 = arith.constant 0 : index
    %12 = vector.load %arg6[%c0_9, %c0_10, %c1_11, %c0_12, %c0_13] : memref<1x1x10x10x4xf32, #tpu.memory_space<vmem>>, vector<1x1x8x8x4xf32>
    %13 = vector.shape_cast %12 : vector<1x1x8x8x4xf32> to vector<8x8x4xf32>
    %14 = vector.shape_cast %13 : vector<8x8x4xf32> to vector<64x4xf32>
    %c0_14 = arith.constant 0 : index
    %c0_15 = arith.constant 0 : index
    %c1_16 = arith.constant 1 : index
    %c1_17 = arith.constant 1 : index
    %c0_18 = arith.constant 0 : index
    %15 = vector.load %arg6[%c0_14, %c0_15, %c1_16, %c1_17, %c0_18] : memref<1x1x10x10x4xf32, #tpu.memory_space<vmem>>, vector<1x1x8x8x4xf32>
    %16 = vector.shape_cast %15 : vector<1x1x8x8x4xf32> to vector<8x8x4xf32>
    %17 = vector.shape_cast %16 : vector<8x8x4xf32> to vector<64x4xf32>
    %18 = tpu.concatenate %8, %11, %14, %17 in 1 : vector<64x4xf32>, vector<64x4xf32>, vector<64x4xf32>, vector<64x4xf32> -> vector<64x16xf32>
    %c4_i32 = arith.constant 4 : i32
    %19 = arith.muli %5, %c4_i32 : i32
    %c0_i32_19 = arith.constant 0 : i32
    %20 = arith.addi %19, %c0_i32_19 : i32
    %c0_i32_20 = arith.constant 0 : i32
    %21 = arith.addi %20, %c0_i32_20 : i32
    %22 = arith.index_cast %21 : i32 to index
    %c0_21 = arith.constant 0 : index
    %c0_22 = arith.constant 0 : index
    %23 = vector.load %arg7[%22, %c0_21, %c0_22] : memref<16x16x4xf32, #tpu.memory_space<vmem>>, vector<1x16x4xf32>
    %24 = vector.shape_cast %23 : vector<1x16x4xf32> to vector<16x4xf32>
    %cst = arith.constant dense<0.000000e+00> : vector<64x4xf32>
    %25 = tpu.matmul %18, %24, %cst {dimension_numbers = #tpu.dot_dimension_numbers<[1], [0], [0], [1], [0, 0, 1, 1], [], []>} : vector<64x16xf32>, vector<16x4xf32>, vector<64x4xf32> -> vector<64x4xf32>
    %c0_23 = arith.constant 0 : index
    %c0_24 = arith.constant 0 : index
    %c0_25 = arith.constant 0 : index
    %c0_26 = arith.constant 0 : index
    %26 = vector.load %arg10[%c0_23, %c0_24, %c0_25, %c0_26] : memref<2x8x8x8xf32, #tpu.memory_space<vmem>>, vector<1x8x8x4xf32>
    %27 = vector.shape_cast %26 : vector<1x8x8x4xf32> to vector<8x8x4xf32>
    %28 = vector.shape_cast %25 : vector<64x4xf32> to vector<8x8x4xf32>
    %29 = arith.addf %27, %28 : vector<8x8x4xf32>
    %c0_27 = arith.constant 0 : index
    %c0_28 = arith.constant 0 : index
    %c0_29 = arith.constant 0 : index
    %c0_30 = arith.constant 0 : index
    %30 = vector.load %arg10[%c0_27, %c0_28, %c0_29, %c0_30] : memref<2x8x8x8xf32, #tpu.memory_space<vmem>>, vector<1x8x8x4xf32>
    %31 = vector.shape_cast %30 : vector<1x8x8x4xf32> to vector<8x8x4xf32>
    %32 = vector.shape_cast %29 : vector<8x8x4xf32> to vector<1x8x8x4xf32>
    tpu.vector_store %arg10[%c0_27, %c0_28, %c0_29, %c0_30], %32 {strides = array<i32>} : memref<2x8x8x8xf32, #tpu.memory_space<vmem>>, vector<1x8x8x4xf32>,
    %c0_31 = arith.constant 0 : index
    %c0_32 = arith.constant 0 : index
    %c0_33 = arith.constant 0 : index
    %c2 = arith.constant 2 : index
    %c0_34 = arith.constant 0 : index
    %33 = vector.load %arg6[%c0_31, %c0_32, %c0_33, %c2, %c0_34] : memref<1x1x10x10x4xf32, #tpu.memory_space<vmem>>, vector<1x1x8x8x4xf32>
    %34 = vector.shape_cast %33 : vector<1x1x8x8x4xf32> to vector<8x8x4xf32>
    %35 = vector.shape_cast %34 : vector<8x8x4xf32> to vector<64x4xf32>
    %c0_35 = arith.constant 0 : index
    %c0_36 = arith.constant 0 : index
    %c1_37 = arith.constant 1 : index
    %c2_38 = arith.constant 2 : index
    %c0_39 = arith.constant 0 : index
    %36 = vector.load %arg6[%c0_35, %c0_36, %c1_37, %c2_38, %c0_39] : memref<1x1x10x10x4xf32, #tpu.memory_space<vmem>>, vector<1x1x8x8x4xf32>
    %37 = vector.shape_cast %36 : vector<1x1x8x8x4xf32> to vector<8x8x4xf32>
    %38 = vector.shape_cast %37 : vector<8x8x4xf32> to vector<64x4xf32>
    %39 = tpu.concatenate %11, %35, %17, %38 in 1 : vector<64x4xf32>, vector<64x4xf32>, vector<64x4xf32>, vector<64x4xf32> -> vector<64x16xf32>
    %c4_i32_40 = arith.constant 4 : i32
    %40 = arith.muli %5, %c4_i32_40 : i32
    %c0_i32_41 = arith.constant 0 : i32
    %41 = arith.addi %40, %c0_i32_41 : i32
    %c1_i32 = arith.constant 1 : i32
    %42 = arith.addi %41, %c1_i32 : i32
    %43 = arith.index_cast %42 : i32 to index
    %c0_42 = arith.constant 0 : index
    %c0_43 = arith.constant 0 : index
    %44 = vector.load %arg7[%43, %c0_42, %c0_43] : memref<16x16x4xf32, #tpu.memory_space<vmem>>, vector<1x16x4xf32>
    %45 = vector.shape_cast %44 : vector<1x16x4xf32> to vector<16x4xf32>
    %cst_44 = arith.constant dense<0.000000e+00> : vector<64x4xf32>
    %46 = tpu.matmul %39, %45, %cst_44 {dimension_numbers = #tpu.dot_dimension_numbers<[1], [0], [0], [1], [0, 0, 1, 1], [], []>} : vector<64x16xf32>, vector<16x4xf32>, vector<64x4xf32> -> vector<64x4xf32>
    %c0_45 = arith.constant 0 : index
    %c0_46 = arith.constant 0 : index
    %c0_47 = arith.constant 0 : index
    %c4 = arith.constant 4 : index
    %47 = vector.load %arg10[%c0_45, %c0_46, %c0_47, %c4] : memref<2x8x8x8xf32, #tpu.memory_space<vmem>>, vector<1x8x8x4xf32>
    %48 = vector.shape_cast %47 : vector<1x8x8x4xf32> to vector<8x8x4xf32>
    %49 = vector.shape_cast %46 : vector<64x4xf32> to vector<8x8x4xf32>
    %50 = arith.addf %48, %49 : vector<8x8x4xf32>
    %c0_48 = arith.constant 0 : index
    %c0_49 = arith.constant 0 : index
    %c0_50 = arith.constant 0 : index
    %c4_51 = arith.constant 4 : index
    %51 = vector.load %arg10[%c0_48, %c0_49, %c0_50, %c4_51] : memref<2x8x8x8xf32, #tpu.memory_space<vmem>>, vector<1x8x8x4xf32>
    %52 = vector.shape_cast %51 : vector<1x8x8x4xf32> to vector<8x8x4xf32>
    %53 = vector.shape_cast %50 : vector<8x8x4xf32> to vector<1x8x8x4xf32>
    tpu.vector_store %arg10[%c0_48, %c0_49, %c0_50, %c4_51], %53 {strides = array<i32>} : memref<2x8x8x8xf32, #tpu.memory_space<vmem>>, vector<1x8x8x4xf32>,
    %c0_52 = arith.constant 0 : index
    %c0_53 = arith.constant 0 : index
    %c2_54 = arith.constant 2 : index
    %c0_55 = arith.constant 0 : index
    %c0_56 = arith.constant 0 : index
    %54 = vector.load %arg6[%c0_52, %c0_53, %c2_54, %c0_55, %c0_56] : memref<1x1x10x10x4xf32, #tpu.memory_space<vmem>>, vector<1x1x8x8x4xf32>
    %55 = vector.shape_cast %54 : vector<1x1x8x8x4xf32> to vector<8x8x4xf32>
    %56 = vector.shape_cast %55 : vector<8x8x4xf32> to vector<64x4xf32>
    %c0_57 = arith.constant 0 : index
    %c0_58 = arith.constant 0 : index
    %c2_59 = arith.constant 2 : index
    %c1_60 = arith.constant 1 : index
    %c0_61 = arith.constant 0 : index
    %57 = vector.load %arg6[%c0_57, %c0_58, %c2_59, %c1_60, %c0_61] : memref<1x1x10x10x4xf32, #tpu.memory_space<vmem>>, vector<1x1x8x8x4xf32>
    %58 = vector.shape_cast %57 : vector<1x1x8x8x4xf32> to vector<8x8x4xf32>
    %59 = vector.shape_cast %58 : vector<8x8x4xf32> to vector<64x4xf32>
    %60 = tpu.concatenate %14, %17, %56, %59 in 1 : vector<64x4xf32>, vector<64x4xf32>, vector<64x4xf32>, vector<64x4xf32> -> vector<64x16xf32>
    %c4_i32_62 = arith.constant 4 : i32
    %61 = arith.muli %5, %c4_i32_62 : i32
    %c2_i32 = arith.constant 2 : i32
    %62 = arith.addi %61, %c2_i32 : i32
    %c0_i32_63 = arith.constant 0 : i32
    %63 = arith.addi %62, %c0_i32_63 : i32
    %64 = arith.index_cast %63 : i32 to index
    %c0_64 = arith.constant 0 : index
    %c0_65 = arith.constant 0 : index
    %65 = vector.load %arg7[%64, %c0_64, %c0_65] : memref<16x16x4xf32, #tpu.memory_space<vmem>>, vector<1x16x4xf32>
    %66 = vector.shape_cast %65 : vector<1x16x4xf32> to vector<16x4xf32>
    %cst_66 = arith.constant dense<0.000000e+00> : vector<64x4xf32>
    %67 = tpu.matmul %60, %66, %cst_66 {dimension_numbers = #tpu.dot_dimension_numbers<[1], [0], [0], [1], [0, 0, 1, 1], [], []>} : vector<64x16xf32>, vector<16x4xf32>, vector<64x4xf32> -> vector<64x4xf32>
    %c1_67 = arith.constant 1 : index
    %c0_68 = arith.constant 0 : index
    %c0_69 = arith.constant 0 : index
    %c0_70 = arith.constant 0 : index
    %68 = vector.load %arg10[%c1_67, %c0_68, %c0_69, %c0_70] : memref<2x8x8x8xf32, #tpu.memory_space<vmem>>, vector<1x8x8x4xf32>
    %69 = vector.shape_cast %68 : vector<1x8x8x4xf32> to vector<8x8x4xf32>
    %70 = vector.shape_cast %67 : vector<64x4xf32> to vector<8x8x4xf32>
    %71 = arith.addf %69, %70 : vector<8x8x4xf32>
    %c1_71 = arith.constant 1 : index
    %c0_72 = arith.constant 0 : index
    %c0_73 = arith.constant 0 : index
    %c0_74 = arith.constant 0 : index
    %72 = vector.load %arg10[%c1_71, %c0_72, %c0_73, %c0_74] : memref<2x8x8x8xf32, #tpu.memory_space<vmem>>, vector<1x8x8x4xf32>
    %73 = vector.shape_cast %72 : vector<1x8x8x4xf32> to vector<8x8x4xf32>
    %74 = vector.shape_cast %71 : vector<8x8x4xf32> to vector<1x8x8x4xf32>
    tpu.vector_store %arg10[%c1_71, %c0_72, %c0_73, %c0_74], %74 {strides = array<i32>} : memref<2x8x8x8xf32, #tpu.memory_space<vmem>>, vector<1x8x8x4xf32>,
    %c0_75 = arith.constant 0 : index
    %c0_76 = arith.constant 0 : index
    %c2_77 = arith.constant 2 : index
    %c2_78 = arith.constant 2 : index
    %c0_79 = arith.constant 0 : index
    %75 = vector.load %arg6[%c0_75, %c0_76, %c2_77, %c2_78, %c0_79] : memref<1x1x10x10x4xf32, #tpu.memory_space<vmem>>, vector<1x1x8x8x4xf32>
    %76 = vector.shape_cast %75 : vector<1x1x8x8x4xf32> to vector<8x8x4xf32>
    %77 = vector.shape_cast %76 : vector<8x8x4xf32> to vector<64x4xf32>
    %78 = tpu.concatenate %17, %38, %59, %77 in 1 : vector<64x4xf32>, vector<64x4xf32>, vector<64x4xf32>, vector<64x4xf32> -> vector<64x16xf32>
    %c4_i32_80 = arith.constant 4 : i32
    %79 = arith.muli %5, %c4_i32_80 : i32
    %c2_i32_81 = arith.constant 2 : i32
    %80 = arith.addi %79, %c2_i32_81 : i32
    %c1_i32_82 = arith.constant 1 : i32
    %81 = arith.addi %80, %c1_i32_82 : i32
    %82 = arith.index_cast %81 : i32 to index
    %c0_83 = arith.constant 0 : index
    %c0_84 = arith.constant 0 : index
    %83 = vector.load %arg7[%82, %c0_83, %c0_84] : memref<16x16x4xf32, #tpu.memory_space<vmem>>, vector<1x16x4xf32>
    %84 = vector.shape_cast %83 : vector<1x16x4xf32> to vector<16x4xf32>
    %cst_85 = arith.constant dense<0.000000e+00> : vector<64x4xf32>
    %85 = tpu.matmul %78, %84, %cst_85 {dimension_numbers = #tpu.dot_dimension_numbers<[1], [0], [0], [1], [0, 0, 1, 1], [], []>} : vector<64x16xf32>, vector<16x4xf32>, vector<64x4xf32> -> vector<64x4xf32>
    %c1_86 = arith.constant 1 : index
    %c0_87 = arith.constant 0 : index
    %c0_88 = arith.constant 0 : index
    %c4_89 = arith.constant 4 : index
    %86 = vector.load %arg10[%c1_86, %c0_87, %c0_88, %c4_89] : memref<2x8x8x8xf32, #tpu.memory_space<vmem>>, vector<1x8x8x4xf32>
    %87 = vector.shape_cast %86 : vector<1x8x8x4xf32> to vector<8x8x4xf32>
    %88 = vector.shape_cast %85 : vector<64x4xf32> to vector<8x8x4xf32>
    %89 = arith.addf %87, %88 : vector<8x8x4xf32>
    %c1_90 = arith.constant 1 : index
    %c0_91 = arith.constant 0 : index
    %c0_92 = arith.constant 0 : index
    %c4_93 = arith.constant 4 : index
    %90 = vector.load %arg10[%c1_90, %c0_91, %c0_92, %c4_93] : memref<2x8x8x8xf32, #tpu.memory_space<vmem>>, vector<1x8x8x4xf32>
    %91 = vector.shape_cast %90 : vector<1x8x8x4xf32> to vector<8x8x4xf32>
    %92 = vector.shape_cast %89 : vector<8x8x4xf32> to vector<1x8x8x4xf32>
    tpu.vector_store %arg10[%c1_90, %c0_91, %c0_92, %c4_93], %92 {strides = array<i32>} : memref<2x8x8x8xf32, #tpu.memory_space<vmem>>, vector<1x8x8x4xf32>,
    %c1_i32_94 = arith.constant 1 : i32
    %93 = arith.cmpi eq, %arg3, %c1_i32_94 : i32
    %94 = arith.extui %93 : i1 to i32
    %c0_i32_95 = arith.constant 0 : i32
    %95 = arith.cmpi ne, %94, %c0_i32_95 : i32
    scf.if %95 {
      %c0_96 = arith.constant 0 : index
      %c0_97 = arith.constant 0 : index
      %c0_98 = arith.constant 0 : index
      %c0_99 = arith.constant 0 : index
      %96 = vector.load %arg10[%c0_96, %c0_97, %c0_98, %c0_99] : memref<2x8x8x8xf32, #tpu.memory_space<vmem>>, vector<1x8x8x8xf32>
      %97 = vector.shape_cast %96 : vector<1x8x8x8xf32> to vector<8x8x8xf32>
      %c1_100 = arith.constant 1 : index
      %c0_101 = arith.constant 0 : index
      %c0_102 = arith.constant 0 : index
      %c0_103 = arith.constant 0 : index
      %98 = vector.load %arg10[%c1_100, %c0_101, %c0_102, %c0_103] : memref<2x8x8x8xf32, #tpu.memory_space<vmem>>, vector<1x8x8x8xf32>
      %99 = vector.shape_cast %98 : vector<1x8x8x8xf32> to vector<8x8x8xf32>
      %100 = vector.shape_cast %97 : vector<8x8x8xf32> to vector<8x1x8x8xf32>
      %101 = vector.shape_cast %99 : vector<8x8x8xf32> to vector<8x1x8x8xf32>
      %102 = tpu.concatenate %100, %101 in 1 : vector<8x1x8x8xf32>, vector<8x1x8x8xf32> -> vector<8x2x8x8xf32>
      %c0_104 = arith.constant 0 : index
      %c0_105 = arith.constant 0 : index
      %103 = vector.load %arg8[%c0_104, %c0_105] : memref<1x8xf32, #tpu.memory_space<vmem>>, vector<1x8xf32>
      %104 = vector.shape_cast %103 : vector<1x8xf32> to vector<1x1x1x8xf32>
      %105 = vector.broadcast %104 : vector<1x1x1x8xf32> to vector<8x2x8x8xf32>
      %106 = arith.addf %102, %105 : vector<8x2x8x8xf32>
      %107 = vector.shape_cast %106 : vector<8x2x8x8xf32> to vector<16x8x8xf32>
      %c0_106 = arith.constant 0 : index
      %c0_107 = arith.constant 0 : index
      %c0_108 = arith.constant 0 : index
      %c0_109 = arith.constant 0 : index
      %c0_110 = arith.constant 0 : index
      %108 = vector.load %arg9[%c0_106, %c0_107, %c0_108, %c0_109, %c0_110] : memref<1x1x16x8x8xf32, #tpu.memory_space<vmem>>, vector<1x1x16x8x8xf32>
      %109 = vector.shape_cast %108 : vector<1x1x16x8x8xf32> to vector<16x8x8xf32>
      %110 = vector.shape_cast %107 : vector<16x8x8xf32> to vector<1x1x16x8x8xf32>
      tpu.vector_store %arg9[%c0_106, %c0_107, %c0_108, %c0_109, %c0_110], %110 {strides = array<i32>} : memref<1x1x16x8x8xf32, #tpu.memory_space<vmem>>, vector<1x1x16x8x8xf32>,
    } else {
    }
    return
  }
  func.func @transform_0(%arg0: i32, %arg1: i32, %arg2: i32, %arg3: i32, %arg4: memref<5x2xi32, #tpu.memory_space<smem>>, %arg5: memref<5x2xi32, #tpu.memory_space<smem>>) -> (i32, i32, i32, i32, i32) {
    %0 = arith.index_cast %arg1 : i32 to index
    %1 = arith.index_cast %arg3 : i32 to index
    %2 = memref.load %arg4[%0, %1] : memref<5x2xi32, #tpu.memory_space<smem>>
    %c1_i32 = arith.constant 1 : i32
    %3 = arith.muli %2, %c1_i32 : i32
    %4 = arith.addi %3, %arg2 : i32
    %c0_i32 = arith.constant 0 : i32
    %c0_i32_0 = arith.constant 0 : i32
    %c0_i32_1 = arith.constant 0 : i32
    %c0_i32_2 = arith.constant 0 : i32
    return %arg0, %4, %c0_i32, %c0_i32_0, %c0_i32_1 : i32, i32, i32, i32, i32
  }
  func.func @transform_1(%arg0: i32, %arg1: i32, %arg2: i32, %arg3: i32, %arg4: memref<5x2xi32, #tpu.memory_space<smem>>, %arg5: memref<5x2xi32, #tpu.memory_space<smem>>) -> (i32, i32, i32) {
    %c0_i32 = arith.constant 0 : i32
    %c0_i32_0 = arith.constant 0 : i32
    %c0_i32_1 = arith.constant 0 : i32
    %c0_i32_2 = arith.constant 0 : i32
    return %c0_i32, %c0_i32_0, %c0_i32_1 : i32, i32, i32
  }
  func.func @transform_2(%arg0: i32, %arg1: i32, %arg2: i32, %arg3: i32, %arg4: memref<5x2xi32, #tpu.memory_space<smem>>, %arg5: memref<5x2xi32, #tpu.memory_space<smem>>) -> (i32, i32) {
    %c0_i32 = arith.constant 0 : i32
    %c0_i32_0 = arith.constant 0 : i32
    %c0_i32_1 = arith.constant 0 : i32
    return %c0_i32, %c0_i32_0 : i32, i32
  }
  func.func @transform_3(%arg0: i32, %arg1: i32, %arg2: i32, %arg3: i32, %arg4: memref<5x2xi32, #tpu.memory_space<smem>>, %arg5: memref<5x2xi32, #tpu.memory_space<smem>>) -> (i32, i32, i32, i32, i32) {
    %c0_i32 = arith.constant 0 : i32
    %c0_i32_0 = arith.constant 0 : i32
    %c0_i32_1 = arith.constant 0 : i32
    return %arg0, %arg1, %arg2, %c0_i32, %c0_i32_0 : i32, i32, i32, i32, i32
  }
}

</mosaic_0001>

<llo_original>
// kernel: tpu_custom_call.1
$region0: #{tpu_custom_call.1}
  #allocation0 [shape = 'u32[]', space=smem, size = 0x4, offset = 0x4, fixed_abs, tag = 'smem constant byte address 0x4 - core index']
  #allocation1 [shape = 'u32[144,128]{1,0:T(1,128)}', space=vmem, size = 0x12000, scoped, tag = 'internal scratch']
  #allocation2 [shape = 'f32[2,8,8,8]{3,2,1,0:T(8,128)}', space=vmem, size = 0x10000, scoped, tag = 'scratch operand']
  #allocation3 [shape = 's32[1]{0}', space=sflag, size = 0x4, scoped, tag = 'scoped memory for tpu_custom_call.1']
  #allocation4 [shape = 'u8[4096]{0}', space=smem, size = 0x1000, scoped, tag = 'prefetched SMEM operand 0']
  #allocation5 [shape = 'u8[4096]{0}', space=smem, size = 0x1000, scoped, tag = 'prefetched SMEM operand 1']
  %s0 = inlined_call_operand.vmem [shape: s32[5,2], index: 0, kind: input, shape index: {}]
  %s1 = inlined_call_operand.vmem [shape: s32[5,2], index: 1, kind: input, shape index: {}]
  %s2 = inlined_call_operand.vmem [shape: f32[2,3,10,10,4], index: 2, kind: input, shape index: {}]
  %s3 = inlined_call_operand.vmem [shape: f32[16,16,4], index: 3, kind: input, shape index: {}]
  %s4 = inlined_call_operand.vmem [shape: f32[1,8], index: 4, kind: input, shape index: {}]
  %s5 = inlined_call_operand.vmem [shape: f32[2,5,16,8,8], index: 5, kind: output, shape index: {}]
  %s6 = sld [smem:[#allocation0]]
  $region53: #{tpu_custom_call.1} parent=0
    _
  %s8 = ssub.s32 1, %s6
  %s9 = scalar_select 0, %s8, %s6
  %s10 = sshll.u32 %s0, 4
  %s11 = int_to_ptr.vmem [resolvable:$true] %s10
  %13 = dma.vmem_to_smem %s11, 128, [#allocation4], [#allocation3]
  %s14 = sshll.u32 %s1, 4
  %s15 = int_to_ptr.vmem [resolvable:$true] %s14
  %17 = dma.vmem_to_smem %s15, 128, [#allocation5], [#allocation3]
  %18 = dma.done [#allocation3], 256
  %19 = sfence
  loop: start=0, step=1, limit=22
  $region2: #{tpu_custom_call.1} parent=0 // loop_pre_header
    _
  $region3: #{tpu_custom_call.1} parent=0 // loop_header
    %s21 = sphi 0, %s25
    %p22 = scmp.ge.s32.totalorder %s21, 22
    %s28 = sphi 0, %s54
    %s29 = sphi 0, %s50
    %s30 = sphi 0, %s46
    %s31 = sphi 0, %s42
    %s32 = sphi 0, %s28
    %s33 = sphi 0, %s29
    %s34 = sphi 0, %s30
    %s35 = sphi 0, %s31
    %s36 = sphi 0, %s32
    %s37 = sphi 0, %s33
    %s38 = sphi 0, %s34
    %s39 = sphi 0, %s35
    %s77 = sphi 0, %s79
    %s80 = sphi 0, %s77
    %s81 = sphi 0, %s80
    %s97 = sphi 0, %s81
    %s101 = sphi 0, %s101
    %s103 = sphi 0, %s101
    %s104 = sphi 0, %s103
    %s118 = sphi 0, %s104
    %s122 = sphi 0, %s122
    %s124 = sphi 0, %s122
    %s125 = sphi 0, %s124
    %s139 = sphi 0, %s125
    %s149 = sphi 0, %s151
    %s152 = sphi 0, %s149
    %s153 = sphi 0, %s152
    %s169 = sphi 0, %s153
  $region4: #{tpu_custom_call.1} parent=0 // loop_header_branch
    %24 = sbr.rel (%p22) target = $region8
  $region5: #{tpu_custom_call.1} parent=0 // loop_body
    %s26 = ssub.s32 %s21, 1
    %s27 = ssub.s32 %s21, 2
    %s40 = sadd.s32 1, %s31
    %p41 = scmp.ge.s32.totalorder %s40, 2
    %s42 = scalar_select %p41, 0, %s40
    %s43 = sadd.s32 1, %s30
    %s44 = scalar_select %p41, %s43, %s30
    %p45 = scmp.ge.s32.totalorder %s44, 1
    %s46 = scalar_select %p45, 0, %s44
    %s47 = sadd.s32 1, %s29
    %s48 = scalar_select %p45, %s47, %s29
    %p49 = scmp.ge.s32.totalorder %s48, 5
    %s50 = scalar_select %p49, 0, %s48
    %s51 = sadd.s32 1, %s28
    %s52 = scalar_select %p49, %s51, %s28
    %p53 = scmp.ge.s32.totalorder %s52, 2
    %s54 = scalar_select %p53, 0, %s52
    %s55 = sshra.s32 %s31, 7
    %s56 = sand.u32 %s31, 127
    %s57 = sadd.s32 %s55, %s29
    %s58 = smul.u32 %s57, 128
    %s59 = sshra.s32 %s31, 7
    %s60 = sand.u32 %s31, 127
    %s61 = sadd.s32 %s58, %s60
    %s62 = sld [smem:[#allocation4 + %s61]]
    %s63 = sadd.s32 %s62, %s30
    %s64 = sshra.s32 %s42, 7
    %s65 = sand.u32 %s42, 127
    %s66 = sadd.s32 %s64, %s50
    %s67 = smul.u32 %s66, 128
    %s68 = sshra.s32 %s42, 7
    %s69 = sand.u32 %s42, 127
    %s70 = sadd.s32 %s67, %s69
    %s71 = sld [smem:[#allocation4 + %s70]]
    %s72 = sadd.s32 %s71, %s46
    %s73 = ssub.s32 %s28, %s54
    %s74 = ssub.s32 %s63, %s72
    %s75 = sor.u32 %s73, %s74
    %p76 = scmp.eq.s32.totalorder %s75, 0
    %s78 = sadd.s32 %s77, 1
    %s79 = scalar_select %p76, %s77, %s78
    %p82 = pneg %p76
    %p83 = scmp.eq.s32.totalorder %s21, 19
    %p84 = por %p82, %p83
    %p85 = scmp.ne.s32.totalorder %s77, %s80
    %p86 = scmp.eq.s32.totalorder %s21, 0
    %p87 = por %p85, %p86
    %p88 = scmp.ne.s32.totalorder %s77, %s80
    %p89 = scmp.eq.s32.totalorder %s26, 19
    %p90 = por %p88, %p89
    %p91 = scmp.ne.s32.totalorder %s80, %s81
    %p92 = scmp.eq.s32.totalorder %s26, 0
    %p93 = por %p91, %p92
    %p94 = scmp.ne.s32.totalorder %s80, %s81
    %p95 = scmp.eq.s32.totalorder %s27, 19
    %p96 = por %p94, %p95
    %p98 = scmp.ne.s32.totalorder %s81, %s97
    %p99 = scmp.eq.s32.totalorder %s27, 0
    %p100 = por %p98, %p99
    %s102 = sadd.s32 %s101, 1
    %p105 = scmp.eq.s32.totalorder %s21, 19
    %p106 = scmp.ne.s32.totalorder %s101, %s103
    %p107 = scmp.eq.s32.totalorder %s21, 0
    %p108 = por %p106, %p107
    %p109 = scmp.ne.s32.totalorder %s101, %s103
    %p110 = scmp.eq.s32.totalorder %s26, 19
    %p111 = por %p109, %p110
    %p112 = scmp.ne.s32.totalorder %s103, %s104
    %p113 = scmp.eq.s32.totalorder %s26, 0
    %p114 = por %p112, %p113
    %p115 = scmp.ne.s32.totalorder %s103, %s104
    %p116 = scmp.eq.s32.totalorder %s27, 19
    %p117 = por %p115, %p116
    %p119 = scmp.ne.s32.totalorder %s104, %s118
    %p120 = scmp.eq.s32.totalorder %s27, 0
    %p121 = por %p119, %p120
    %s123 = sadd.s32 %s122, 1
    %p126 = scmp.eq.s32.totalorder %s21, 19
    %p127 = scmp.ne.s32.totalorder %s122, %s124
    %p128 = scmp.eq.s32.totalorder %s21, 0
    %p129 = por %p127, %p128
    %p130 = scmp.ne.s32.totalorder %s122, %s124
    %p131 = scmp.eq.s32.totalorder %s26, 19
    %p132 = por %p130, %p131
    %p133 = scmp.ne.s32.totalorder %s124, %s125
    %p134 = scmp.eq.s32.totalorder %s26, 0
    %p135 = por %p133, %p134
    %p136 = scmp.ne.s32.totalorder %s124, %s125
    %p137 = scmp.eq.s32.totalorder %s27, 19
    %p138 = por %p136, %p137
    %p140 = scmp.ne.s32.totalorder %s125, %s139
    %p141 = scmp.eq.s32.totalorder %s27, 0
    %p142 = por %p140, %p141
    %s143 = ssub.s32 %s28, %s54
    %s144 = ssub.s32 %s29, %s50
    %s145 = sor.u32 %s143, %s144
    %s146 = ssub.s32 %s30, %s46
    %s147 = sor.u32 %s145, %s146
    %p148 = scmp.eq.s32.totalorder %s147, 0
    %s150 = sadd.s32 %s149, 1
    %s151 = scalar_select %p148, %s149, %s150
    %p154 = pneg %p148
    %p155 = scmp.eq.s32.totalorder %s21, 19
    %p156 = por %p154, %p155
    %p157 = scmp.ne.s32.totalorder %s149, %s152
    %p158 = scmp.eq.s32.totalorder %s21, 0
    %p159 = por %p157, %p158
    %p160 = scmp.ne.s32.totalorder %s149, %s152
    %p161 = scmp.eq.s32.totalorder %s26, 19
    %p162 = por %p160, %p161
    %p163 = scmp.ne.s32.totalorder %s152, %s153
    %p164 = scmp.eq.s32.totalorder %s26, 0
    %p165 = por %p163, %p164
    %p166 = scmp.ne.s32.totalorder %s152, %s153
    %p167 = scmp.eq.s32.totalorder %s27, 19
    %p168 = por %p166, %p167
    %p170 = scmp.ne.s32.totalorder %s153, %s169
    %p171 = scmp.eq.s32.totalorder %s27, 0
    %p172 = por %p170, %p171
    %p173 = scmp.le.s32.totalorder 1, %s21
    %p174 = scmp.lt.s32.totalorder %s21, 21
    %p175 = pnand %p173, %p174
    %p176 = pneg %p175
    // Predicated region
    $region9: #{tpu_custom_call.1} parent=5 // pred_check
      _
    $region10: #{tpu_custom_call.1} parent=5 // pred_check_branch
      %178 = sbr.rel (%p175) target = $region12
    $region11: #{tpu_custom_call.1} parent=5 // pred_region
      %s179 = ssub.s32 %s21, 1
      // Predicated region
      $region13: #{tpu_custom_call.1} parent=11 // pred_check
        %p180 = pneg %p114
      $region14: #{tpu_custom_call.1} parent=11 // pred_check_branch
        %182 = sbr.rel (%p180) target = $region16
      $region15: #{tpu_custom_call.1} parent=11 // pred_region
        _
      $region16: #{tpu_custom_call.1} parent=11 // pred_fallthru
        _
      // Predicated region
      $region17: #{tpu_custom_call.1} parent=11 // pred_check
        %p183 = pneg %p135
      $region18: #{tpu_custom_call.1} parent=11 // pred_check_branch
        %185 = sbr.rel (%p183) target = $region20
      $region19: #{tpu_custom_call.1} parent=11 // pred_region
        _
      $region20: #{tpu_custom_call.1} parent=11 // pred_fallthru
        _
    $region12: #{tpu_custom_call.1} parent=5 // pred_fallthru
      _
    %p186 = scmp.lt.s32.totalorder %s21, 20
    // Predicated region
    $region21: #{tpu_custom_call.1} parent=5 // pred_check
      %p187 = pneg %p186
    $region22: #{tpu_custom_call.1} parent=5 // pred_check_branch
      %189 = sbr.rel (%p187) target = $region24
    $region23: #{tpu_custom_call.1} parent=5 // pred_region
      // Predicated region
      $region25: #{tpu_custom_call.1} parent=23 // pred_check
        %p190 = pneg %p87
      $region26: #{tpu_custom_call.1} parent=23 // pred_check_branch
        %192 = sbr.rel (%p190) target = $region28
      $region27: #{tpu_custom_call.1} parent=23 // pred_region
        %s193 = sshra.s32 %s31, 7
        %s194 = sand.u32 %s31, 127
        %s195 = sadd.s32 %s193, %s29
        %s196 = smul.u32 %s195, 128
        %s197 = sshra.s32 %s31, 7
        %s198 = sand.u32 %s31, 127
        %s199 = sadd.s32 %s196, %s198
        %s200 = sld [smem:[#allocation4 + %s199]]
        %s201 = sadd.s32 %s200, %s30
        %p202 = scmp.lt.s32.totalorder %s28, 1
        %s203 = scalar_select %p202, %s28, 1
        %p204 = scmp.lt.s32.totalorder %s201, 2
        %s205 = scalar_select %p204, %s201, 2
        %s206 = smul.addr %s205, 20
        %s207 = smul.addr %s203, 60
        %s208 = sadd.s32 %s206, %s207
        %s209 = smul.addr %s208, 8
        %s210 = scalar_lea.vmem %s2, %s209
        %s211 = sshra.s32 %s31, 7
        %s212 = sand.u32 %s31, 127
        %s213 = sadd.s32 %s211, %s29
        %s214 = smul.u32 %s213, 128
        %s215 = sshra.s32 %s31, 7
        %s216 = sand.u32 %s31, 127
        %s217 = sadd.s32 %s214, %s216
        %s218 = sld [smem:[#allocation4 + %s217]]
        %s219 = sadd.s32 %s218, %s30
      $region28: #{tpu_custom_call.1} parent=23 // pred_fallthru
        _
    $region24: #{tpu_custom_call.1} parent=5 // pred_fallthru
      _
    %p220 = scmp.le.s32.totalorder 1, %s21
    %p221 = scmp.lt.s32.totalorder %s21, 21
    %p222 = pnand %p220, %p221
    %p223 = pneg %p222
    // Predicated region
    $region29: #{tpu_custom_call.1} parent=5 // pred_check
      _
    $region30: #{tpu_custom_call.1} parent=5 // pred_check_branch
      %225 = sbr.rel (%p222) target = $region32
    $region31: #{tpu_custom_call.1} parent=5 // pred_region
      %s226 = ssub.s32 %s21, 1
      %s227 = sshra.s32 %s35, 7
      %s228 = sand.u32 %s35, 127
      %s229 = sadd.s32 %s227, %s33
      %s230 = smul.u32 %s229, 128
      %s231 = sshra.s32 %s35, 7
      %s232 = sand.u32 %s35, 127
      %s233 = sadd.s32 %s230, %s232
      %s234 = sld [smem:[#allocation4 + %s233]]
      %s235 = sadd.s32 %s234, %s34
      %p236 = scmp.lt.s32.totalorder %s32, 1
      %s237 = scalar_select %p236, %s32, 1
      %p238 = scmp.lt.s32.totalorder %s235, 2
      %s239 = scalar_select %p238, %s235, 2
      %s240 = smul.addr %s239, 20
      %s241 = smul.addr %s237, 60
      %s242 = sadd.s32 %s240, %s241
      %s243 = smul.addr %s242, 8
      %s244 = scalar_lea.vmem %s2, %s243
      %p245 = pneg %p93
      %p246 = pneg %p90
      %p247 = pneg %p114
      %p248 = pneg %p111
      %p249 = pneg %p135
      %p250 = pneg %p132
      %p251 = pneg %p165
      %p252 = pneg %p162
      %s253 = smul.u32 16, %s34
      %p254 = scmp.lt.s32.totalorder %s32, 1
      %s255 = scalar_select %p254, %s32, 1
      %p256 = scmp.lt.s32.totalorder %s33, 4
      %s257 = scalar_select %p256, %s33, 4
      %p258 = scmp.lt.s32.totalorder %s253, 15
      %s259 = scalar_select %p258, %s253, 15
      %s260 = smul.addr %s257, 16
      %s261 = sadd.s32 %s259, %s260
      %s262 = smul.addr %s255, 80
      %s263 = sadd.s32 %s261, %s262
      %s264 = smul.addr %s263, 8
      %s265 = scalar_lea.vmem %s5, %s264
      %s266 = sshra.s32 %s35, 7
      %s267 = sand.u32 %s35, 127
      %s268 = sadd.s32 %s266, %s33
      %s269 = smul.u32 %s268, 128
      %s270 = sshra.s32 %s35, 7
      %s271 = sand.u32 %s35, 127
      %s272 = sadd.s32 %s269, %s271
      %s273 = sld [smem:[#allocation4 + %s272]]
      %s274 = sadd.s32 %s273, %s34
      %p275 = scmp.lt.s32.totalorder %s32, 1
      %s276 = scalar_select %p275, %s32, 1
      %p277 = scmp.lt.s32.totalorder %s274, 2
      %s278 = scalar_select %p277, %s274, 2
      %s279 = smul.addr %s278, 20
      %s280 = smul.addr %s276, 60
      %s281 = sadd.s32 %s279, %s280
      %s282 = smul.addr %s281, 8
      %s283 = scalar_lea.vmem %s2, %s282
      %s284 = sshra.s32 %s35, 7
      %s285 = sand.u32 %s35, 127
      %s286 = sadd.s32 %s284, %s33
      %s287 = smul.u32 %s286, 128
      %s288 = sshra.s32 %s35, 7
      %s289 = sand.u32 %s35, 127
      %s290 = sadd.s32 %s287, %s289
      %s291 = sld [smem:[#allocation4 + %s290]]
      %s292 = sadd.s32 %s291, %s34
      %s293 = smul.u32 16, %s34
      %p294 = scmp.lt.s32.totalorder %s32, 1
      %s295 = scalar_select %p294, %s32, 1
      %p296 = scmp.lt.s32.totalorder %s33, 4
      %s297 = scalar_select %p296, %s33, 4
      %p298 = scmp.lt.s32.totalorder %s293, 15
      %s299 = scalar_select %p298, %s293, 15
      %s300 = smul.addr %s297, 16
      %s301 = sadd.s32 %s299, %s300
      %s302 = smul.addr %s295, 80
      %s303 = sadd.s32 %s301, %s302
      %s304 = smul.addr %s303, 8
      %s305 = scalar_lea.vmem %s5, %s304
      %s306 = smul.u32 16, %s34
      %p307 = scmp.eq.s32.totalorder %s35, 0
      // Predicated region
      $region33: #{tpu_custom_call.1} parent=31 // pred_check
        %p308 = pneg %p307
      $region34: #{tpu_custom_call.1} parent=31 // pred_check_branch
        %310 = sbr.rel (%p308) target = $region36
      $region35: #{tpu_custom_call.1} parent=31 // pred_region
        %vm311 = vcmask 64512
        %312 = vst.msk [vmem:[#allocation2] sm:$0xff] %vm311, 0.0
        %313 = vst.msk [vmem:[#allocation2 + $0x8] sm:$0xff] %vm311, 0.0
        %314 = vst.msk [vmem:[#allocation2 + $0x10] sm:$0xff] %vm311, 0.0
        %315 = vst.msk [vmem:[#allocation2 + $0x18] sm:$0xff] %vm311, 0.0
        %316 = vst.msk [vmem:[#allocation2 + $0x20] sm:$0xff] %vm311, 0.0
        %317 = vst.msk [vmem:[#allocation2 + $0x28] sm:$0xff] %vm311, 0.0
        %318 = vst.msk [vmem:[#allocation2 + $0x30] sm:$0xff] %vm311, 0.0
        %319 = vst.msk [vmem:[#allocation2 + $0x38] sm:$0xff] %vm311, 0.0
        %320 = vst.msk [vmem:[#allocation2 + $0x40] sm:$0xff] %vm311, 0.0
        %321 = vst.msk [vmem:[#allocation2 + $0x48] sm:$0xff] %vm311, 0.0
        %322 = vst.msk [vmem:[#allocation2 + $0x50] sm:$0xff] %vm311, 0.0
        %323 = vst.msk [vmem:[#allocation2 + $0x58] sm:$0xff] %vm311, 0.0
        %324 = vst.msk [vmem:[#allocation2 + $0x60] sm:$0xff] %vm311, 0.0
        %325 = vst.msk [vmem:[#allocation2 + $0x68] sm:$0xff] %vm311, 0.0
        %326 = vst.msk [vmem:[#allocation2 + $0x70] sm:$0xff] %vm311, 0.0
        %327 = vst.msk [vmem:[#allocation2 + $0x78] sm:$0xff] %vm311, 0.0
      $region36: #{tpu_custom_call.1} parent=31 // pred_fallthru
        _
      %s328 = sshra.s32 %s35, 7
      %s329 = sand.u32 %s35, 127
      %s330 = sadd.s32 %s328, %s33
      %s331 = smul.u32 %s330, 128
      %s332 = sshra.s32 %s35, 7
      %s333 = sand.u32 %s35, 127
      %s334 = sadd.s32 %s331, %s333
      %s335 = sld [smem:[#allocation5 + %s334]]
      %v336 = vld [vmem:[%s283] sm:$0xff]
      %v337 = vld [vmem:[%s283 + $0x10] sm:$0xff]
      %v338 = vld [vmem:[%s283 + $0x20] sm:$0xff]
      %v339 = vld [vmem:[%s283 + $0x30] sm:$0xff]
      %v340 = vld [vmem:[%s283 + $0x40] sm:$0xff]
      %v341 = vld [vmem:[%s283 + $0x50] sm:$0xff]
      %v342 = vld [vmem:[%s283 + $0x60] sm:$0xff]
      %v343 = vld [vmem:[%s283 + $0x70] sm:$0xff]
      %v344 = vld [vmem:[%s283 + $0x1] sm:$0xff]
      %v345 = vld [vmem:[%s283 + $0x11] sm:$0xff]
      %v346 = vld [vmem:[%s283 + $0x21] sm:$0xff]
      %v347 = vld [vmem:[%s283 + $0x31] sm:$0xff]
      %v348 = vld [vmem:[%s283 + $0x41] sm:$0xff]
      %v349 = vld [vmem:[%s283 + $0x51] sm:$0xff]
      %v350 = vld [vmem:[%s283 + $0x61] sm:$0xff]
      %v351 = vld [vmem:[%s283 + $0x71] sm:$0xff]
      %s352 = scalar_lea.vmem %s283, 16
      %v353 = vld [vmem:[%s352] sm:$0xff]
      %v354 = vld [vmem:[%s352 + $0x10] sm:$0xff]
      %v355 = vld [vmem:[%s352 + $0x20] sm:$0xff]
      %v356 = vld [vmem:[%s352 + $0x30] sm:$0xff]
      %v357 = vld [vmem:[%s352 + $0x40] sm:$0xff]
      %v358 = vld [vmem:[%s352 + $0x50] sm:$0xff]
      %v359 = vld [vmem:[%s352 + $0x60] sm:$0xff]
      %v360 = vld [vmem:[%s352 + $0x70] sm:$0xff]
      %v361 = vld [vmem:[%s352 + $0x1] sm:$0xff]
      %v362 = vld [vmem:[%s352 + $0x11] sm:$0xff]
      %v363 = vld [vmem:[%s352 + $0x21] sm:$0xff]
      %v364 = vld [vmem:[%s352 + $0x31] sm:$0xff]
      %v365 = vld [vmem:[%s352 + $0x41] sm:$0xff]
      %v366 = vld [vmem:[%s352 + $0x51] sm:$0xff]
      %v367 = vld [vmem:[%s352 + $0x61] sm:$0xff]
      %v368 = vld [vmem:[%s352 + $0x71] sm:$0xff]
      %377 = vrot.lane.b32.xlu0 %v344, 4
      %v378 = vpop.permute.xlu0 %377
      %379 = vrot.lane.b32.xlu0 %v345, 4
      %v380 = vpop.permute.xlu0 %379
      %381 = vrot.lane.b32.xlu0 %v346, 4
      %v382 = vpop.permute.xlu0 %381
      %383 = vrot.lane.b32.xlu0 %v347, 4
      %v384 = vpop.permute.xlu0 %383
      %385 = vrot.lane.b32.xlu0 %v348, 4
      %v386 = vpop.permute.xlu0 %385
      %387 = vrot.lane.b32.xlu0 %v349, 4
      %v388 = vpop.permute.xlu0 %387
      %389 = vrot.lane.b32.xlu0 %v350, 4
      %v390 = vpop.permute.xlu0 %389
      %391 = vrot.lane.b32.xlu0 %v351, 4
      %v392 = vpop.permute.xlu0 %391
      %409 = vrot.lane.b32.xlu0 %v353, 8
      %v410 = vpop.permute.xlu0 %409
      %411 = vrot.lane.b32.xlu0 %v354, 8
      %v412 = vpop.permute.xlu0 %411
      %413 = vrot.lane.b32.xlu0 %v355, 8
      %v414 = vpop.permute.xlu0 %413
      %415 = vrot.lane.b32.xlu0 %v356, 8
      %v416 = vpop.permute.xlu0 %415
      %417 = vrot.lane.b32.xlu0 %v357, 8
      %v418 = vpop.permute.xlu0 %417
      %419 = vrot.lane.b32.xlu0 %v358, 8
      %v420 = vpop.permute.xlu0 %419
      %421 = vrot.lane.b32.xlu0 %v359, 8
      %v422 = vpop.permute.xlu0 %421
      %423 = vrot.lane.b32.xlu0 %v360, 8
      %v424 = vpop.permute.xlu0 %423
      %441 = vrot.lane.b32.xlu0 %v361, 12
      %v442 = vpop.permute.xlu0 %441
      %443 = vrot.lane.b32.xlu0 %v362, 12
      %v444 = vpop.permute.xlu0 %443
      %445 = vrot.lane.b32.xlu0 %v363, 12
      %v446 = vpop.permute.xlu0 %445
      %447 = vrot.lane.b32.xlu0 %v364, 12
      %v448 = vpop.permute.xlu0 %447
      %449 = vrot.lane.b32.xlu0 %v365, 12
      %v450 = vpop.permute.xlu0 %449
      %451 = vrot.lane.b32.xlu0 %v366, 12
      %v452 = vpop.permute.xlu0 %451
      %453 = vrot.lane.b32.xlu0 %v367, 12
      %v454 = vpop.permute.xlu0 %453
      %455 = vrot.lane.b32.xlu0 %v368, 12
      %v456 = vpop.permute.xlu0 %455
      %vm465 = vcmask 31744
      %v466 = vsel %vm465, %v336, %v378
      %v467 = vsel %vm465, %v337, %v380
      %v468 = vsel %vm465, %v338, %v382
      %v469 = vsel %vm465, %v339, %v384
      %v470 = vsel %vm465, %v340, %v386
      %v471 = vsel %vm465, %v341, %v388
      %v472 = vsel %vm465, %v342, %v390
      %v473 = vsel %vm465, %v343, %v392
      %vm474 = vcmask 64512
      %v475 = vsel %vm474, %v466, %v410
      %v476 = vsel %vm474, %v467, %v412
      %v477 = vsel %vm474, %v468, %v414
      %v478 = vsel %vm474, %v469, %v416
      %v479 = vsel %vm474, %v470, %v418
      %v480 = vsel %vm474, %v471, %v420
      %v481 = vsel %vm474, %v472, %v422
      %v482 = vsel %vm474, %v473, %v424
      %vm483 = vcmask 97280
      %v484 = vsel %vm483, %v475, %v442
      %v485 = vsel %vm483, %v476, %v444
      %v486 = vsel %vm483, %v477, %v446
      %v487 = vsel %vm483, %v478, %v448
      %v488 = vsel %vm483, %v479, %v450
      %v489 = vsel %vm483, %v480, %v452
      %v490 = vsel %vm483, %v481, %v454
      %v491 = vsel %vm483, %v482, %v456
      %s492 = smul.u32 %s335, 4
      %s493 = smul.u32 %s492, 16
      %s494 = scalar_lea.vmem %s3, %s493
      %v495 = vld [vmem:[%s494] sm:$0xff]
      %v496 = vld [vmem:[%s494 + $0x8] sm:$0xff]
      %vm497 = vcmask 130048
      %v499 = vsel %vm497, %v484, 0
      %v502 = vsel %vm497, %v485, 0
      %v505 = vsel %vm497, %v486, 0
      %v508 = vsel %vm497, %v487, 0
      %v511 = vsel %vm497, %v488, 0
      %v514 = vsel %vm497, %v489, 0
      %v517 = vsel %vm497, %v490, 0
      %v520 = vsel %vm497, %v491, 0
      %522 = vmatprep.subr.mxu0 0.0
      %523 = vmatpush1.msra.mxu0 %v495
      %524 = vmatprep.subr.mxu0 0.0
      %525 = vmatpush1.msra.mxu0 %v496
      %526 = vmatprep.subr.mxu0 0.0
      %527 = vmatpush1.msra.mxu0 0.0
      %528 = vmatprep.subr.mxu0 0.0
      %529 = vmatpush1.msra.mxu0 0.0
      %530 = vmatprep.subr.mxu0 0.0
      %531 = vmatpush1.msra.mxu0 0.0
      %532 = vmatprep.subr.mxu0 0.0
      %533 = vmatpush1.msra.mxu0 0.0
      %534 = vmatprep.subr.mxu0 0.0
      %535 = vmatpush1.msra.mxu0 0.0
      %536 = vmatprep.subr.mxu0 0.0
      %537 = vmatpush1.msra.mxu0 0.0
      %538 = vmatprep.subr.mxu0 0.0
      %539 = vmatpush1.msra.mxu0 0.0
      %540 = vmatprep.subr.mxu0 0.0
      %541 = vmatpush1.msra.mxu0 0.0
      %542 = vmatprep.subr.mxu0 0.0
      %543 = vmatpush1.msra.mxu0 0.0
      %544 = vmatprep.subr.mxu0 0.0
      %545 = vmatpush1.msra.mxu0 0.0
      %546 = vmatprep.subr.mxu0 0.0
      %547 = vmatpush1.msra.mxu0 0.0
      %548 = vmatprep.subr.mxu0 0.0
      %549 = vmatpush1.msra.mxu0 0.0
      %550 = vmatprep.subr.mxu0 0.0
      %551 = vmatpush1.msra.mxu0 0.0
      %552 = vmatprep.subr.mxu0 0.0
      %553 = vmatpush1.msra.mxu0 0.0
      %554 = vmatprep.subr.mxu0 0.0
      %555 = vmatpush1.msra.mxu0 0.0
      %556 = vmatprep.subr.mxu0 0.0
      %557 = vmatpush1.msra.mxu0 0.0
      %558 = vmatprep.subr.mxu0 0.0
      %559 = vmatpush1.msra.mxu0 0.0
      %560 = vmatprep.subr.mxu0 0.0
      %561 = vmatpush1.msra.mxu0 0.0
      %562 = vmatprep.subr.mxu0 0.0
      %563 = vmatpush1.msra.mxu0 0.0
      %564 = vmatprep.subr.mxu0 0.0
      %565 = vmatpush1.msra.mxu0 0.0
      %566 = vmatprep.subr.mxu0 0.0
      %567 = vmatpush1.msra.mxu0 0.0
      %568 = vmatprep.subr.mxu0 0.0
      %569 = vmatpush1.msra.mxu0 0.0
      %570 = vmatprep.subr.mxu0 0.0
      %571 = vmatpush1.msra.mxu0 0.0
      %572 = vmatprep.subr.mxu0 0.0
      %573 = vmatpush1.msra.mxu0 0.0
      %574 = vmatprep.subr.mxu0 0.0
      %575 = vmatpush1.msra.mxu0 0.0
      %576 = vmatprep.subr.mxu0 0.0
      %577 = vmatpush1.msra.mxu0 0.0
      %578 = vmatprep.subr.mxu0 0.0
      %579 = vmatpush1.msra.mxu0 0.0
      %580 = vmatprep.subr.mxu0 0.0
      %581 = vmatpush1.msra.mxu0 0.0
      %582 = vmatprep.subr.mxu0 0.0
      %583 = vmatpush1.msra.mxu0 0.0
      %584 = vmatprep.subr.mxu0 0.0
      %585 = vmatpush1.msra.mxu0 0.0
      %586 = vmatprep.mubr.f32.mxu0 0.0
      %587 = vmatmul.mubr.f32.gmra.mrb[0].mxu0 %v499
      %v588 = vpop.f32.mrb[0].mxu0
      %v589 = vadd.f32 0.0, %v588
      %v590 = vpop.f32.mrb[0].mxu0
      %591 = vmatprep.mubr.f32.mxu0 0.0
      %592 = vmatmul.mubr.f32.gmra.mrb[0].mxu0 %v502
      %v593 = vpop.f32.mrb[0].mxu0
      %v594 = vadd.f32 0.0, %v593
      %v595 = vpop.f32.mrb[0].mxu0
      %596 = vmatprep.mubr.f32.mxu0 0.0
      %597 = vmatmul.mubr.f32.gmra.mrb[0].mxu0 %v505
      %v598 = vpop.f32.mrb[0].mxu0
      %v599 = vadd.f32 0.0, %v598
      %v600 = vpop.f32.mrb[0].mxu0
      %601 = vmatprep.mubr.f32.mxu0 0.0
      %602 = vmatmul.mubr.f32.gmra.mrb[0].mxu0 %v508
      %v603 = vpop.f32.mrb[0].mxu0
      %v604 = vadd.f32 0.0, %v603
      %v605 = vpop.f32.mrb[0].mxu0
      %606 = vmatprep.mubr.f32.mxu0 0.0
      %607 = vmatmul.mubr.f32.gmra.mrb[0].mxu0 %v511
      %v608 = vpop.f32.mrb[0].mxu0
      %v609 = vadd.f32 0.0, %v608
      %v610 = vpop.f32.mrb[0].mxu0
      %611 = vmatprep.mubr.f32.mxu0 0.0
      %612 = vmatmul.mubr.f32.gmra.mrb[0].mxu0 %v514
      %v613 = vpop.f32.mrb[0].mxu0
      %v614 = vadd.f32 0.0, %v613
      %v615 = vpop.f32.mrb[0].mxu0
      %616 = vmatprep.mubr.f32.mxu0 0.0
      %617 = vmatmul.mubr.f32.gmra.mrb[0].mxu0 %v517
      %v618 = vpop.f32.mrb[0].mxu0
      %v619 = vadd.f32 0.0, %v618
      %v620 = vpop.f32.mrb[0].mxu0
      %621 = vmatprep.mubr.f32.mxu0 0.0
      %622 = vmatmul.mubr.f32.gmra.mrb[0].mxu0 %v520
      %v623 = vpop.f32.mrb[0].mxu0
      %v624 = vadd.f32 0.0, %v623
      %v625 = vpop.f32.mrb[0].mxu0
      %626 = vdwg.mxu0
      %v627 = vld [vmem:[#allocation2] sm:$0xff]
      %v628 = vld [vmem:[#allocation2 + $0x8] sm:$0xff]
      %v629 = vld [vmem:[#allocation2 + $0x10] sm:$0xff]
      %v630 = vld [vmem:[#allocation2 + $0x18] sm:$0xff]
      %v631 = vld [vmem:[#allocation2 + $0x20] sm:$0xff]
      %v632 = vld [vmem:[#allocation2 + $0x28] sm:$0xff]
      %v633 = vld [vmem:[#allocation2 + $0x30] sm:$0xff]
      %v634 = vld [vmem:[#allocation2 + $0x38] sm:$0xff]
      %v635 = vadd.f32 %v627, %v589
      %v636 = vadd.f32 %v628, %v594
      %v637 = vadd.f32 %v629, %v599
      %v638 = vadd.f32 %v630, %v604
      %v639 = vadd.f32 %v631, %v609
      %v640 = vadd.f32 %v632, %v614
      %v641 = vadd.f32 %v633, %v619
      %v642 = vadd.f32 %v634, %v624
      %643 = vst.msk [vmem:[#allocation2] sm:$0xff] %vm465, %v635
      %644 = vst.msk [vmem:[#allocation2 + $0x8] sm:$0xff] %vm465, %v636
      %645 = vst.msk [vmem:[#allocation2 + $0x10] sm:$0xff] %vm465, %v637
      %646 = vst.msk [vmem:[#allocation2 + $0x18] sm:$0xff] %vm465, %v638
      %647 = vst.msk [vmem:[#allocation2 + $0x20] sm:$0xff] %vm465, %v639
      %648 = vst.msk [vmem:[#allocation2 + $0x28] sm:$0xff] %vm465, %v640
      %649 = vst.msk [vmem:[#allocation2 + $0x30] sm:$0xff] %vm465, %v641
      %650 = vst.msk [vmem:[#allocation2 + $0x38] sm:$0xff] %vm465, %v642
      %v651 = vld [vmem:[%s283 + $0x2] sm:$0xff]
      %v652 = vld [vmem:[%s283 + $0x12] sm:$0xff]
      %v653 = vld [vmem:[%s283 + $0x22] sm:$0xff]
      %v654 = vld [vmem:[%s283 + $0x32] sm:$0xff]
      %v655 = vld [vmem:[%s283 + $0x42] sm:$0xff]
      %v656 = vld [vmem:[%s283 + $0x52] sm:$0xff]
      %v657 = vld [vmem:[%s283 + $0x62] sm:$0xff]
      %v658 = vld [vmem:[%s283 + $0x72] sm:$0xff]
      %v659 = vld [vmem:[%s352 + $0x2] sm:$0xff]
      %v660 = vld [vmem:[%s352 + $0x12] sm:$0xff]
      %v661 = vld [vmem:[%s352 + $0x22] sm:$0xff]
      %v662 = vld [vmem:[%s352 + $0x32] sm:$0xff]
      %v663 = vld [vmem:[%s352 + $0x42] sm:$0xff]
      %v664 = vld [vmem:[%s352 + $0x52] sm:$0xff]
      %v665 = vld [vmem:[%s352 + $0x62] sm:$0xff]
      %v666 = vld [vmem:[%s352 + $0x72] sm:$0xff]
      %675 = vrot.lane.b32.xlu0 %v651, 4
      %v676 = vpop.permute.xlu0 %675
      %677 = vrot.lane.b32.xlu0 %v652, 4
      %v678 = vpop.permute.xlu0 %677
      %679 = vrot.lane.b32.xlu0 %v653, 4
      %v680 = vpop.permute.xlu0 %679
      %681 = vrot.lane.b32.xlu0 %v654, 4
      %v682 = vpop.permute.xlu0 %681
      %683 = vrot.lane.b32.xlu0 %v655, 4
      %v684 = vpop.permute.xlu0 %683
      %685 = vrot.lane.b32.xlu0 %v656, 4
      %v686 = vpop.permute.xlu0 %685
      %687 = vrot.lane.b32.xlu0 %v657, 4
      %v688 = vpop.permute.xlu0 %687
      %689 = vrot.lane.b32.xlu0 %v658, 4
      %v690 = vpop.permute.xlu0 %689
      %699 = vrot.lane.b32.xlu0 %v361, 8
      %v700 = vpop.permute.xlu0 %699
      %701 = vrot.lane.b32.xlu0 %v362, 8
      %v702 = vpop.permute.xlu0 %701
      %703 = vrot.lane.b32.xlu0 %v363, 8
      %v704 = vpop.permute.xlu0 %703
      %705 = vrot.lane.b32.xlu0 %v364, 8
      %v706 = vpop.permute.xlu0 %705
      %707 = vrot.lane.b32.xlu0 %v365, 8
      %v708 = vpop.permute.xlu0 %707
      %709 = vrot.lane.b32.xlu0 %v366, 8
      %v710 = vpop.permute.xlu0 %709
      %711 = vrot.lane.b32.xlu0 %v367, 8
      %v712 = vpop.permute.xlu0 %711
      %713 = vrot.lane.b32.xlu0 %v368, 8
      %v714 = vpop.permute.xlu0 %713
      %731 = vrot.lane.b32.xlu0 %v659, 12
      %v732 = vpop.permute.xlu0 %731
      %733 = vrot.lane.b32.xlu0 %v660, 12
      %v734 = vpop.permute.xlu0 %733
      %735 = vrot.lane.b32.xlu0 %v661, 12
      %v736 = vpop.permute.xlu0 %735
      %737 = vrot.lane.b32.xlu0 %v662, 12
      %v738 = vpop.permute.xlu0 %737
      %739 = vrot.lane.b32.xlu0 %v663, 12
      %v740 = vpop.permute.xlu0 %739
      %741 = vrot.lane.b32.xlu0 %v664, 12
      %v742 = vpop.permute.xlu0 %741
      %743 = vrot.lane.b32.xlu0 %v665, 12
      %v744 = vpop.permute.xlu0 %743
      %745 = vrot.lane.b32.xlu0 %v666, 12
      %v746 = vpop.permute.xlu0 %745
      %v755 = vsel %vm465, %v344, %v676
      %v756 = vsel %vm465, %v345, %v678
      %v757 = vsel %vm465, %v346, %v680
      %v758 = vsel %vm465, %v347, %v682
      %v759 = vsel %vm465, %v348, %v684
      %v760 = vsel %vm465, %v349, %v686
      %v761 = vsel %vm465, %v350, %v688
      %v762 = vsel %vm465, %v351, %v690
      %v763 = vsel %vm474, %v755, %v700
      %v764 = vsel %vm474, %v756, %v702
      %v765 = vsel %vm474, %v757, %v704
      %v766 = vsel %vm474, %v758, %v706
      %v767 = vsel %vm474, %v759, %v708
      %v768 = vsel %vm474, %v760, %v710
      %v769 = vsel %vm474, %v761, %v712
      %v770 = vsel %vm474, %v762, %v714
      %v771 = vsel %vm483, %v763, %v732
      %v772 = vsel %vm483, %v764, %v734
      %v773 = vsel %vm483, %v765, %v736
      %v774 = vsel %vm483, %v766, %v738
      %v775 = vsel %vm483, %v767, %v740
      %v776 = vsel %vm483, %v768, %v742
      %v777 = vsel %vm483, %v769, %v744
      %v778 = vsel %vm483, %v770, %v746
      %s779 = sadd.s32 %s492, 1
      %s780 = smul.u32 %s779, 16
      %s781 = scalar_lea.vmem %s3, %s780
      %v782 = vld [vmem:[%s781] sm:$0xff]
      %v783 = vld [vmem:[%s781 + $0x8] sm:$0xff]
      %v785 = vsel %vm497, %v771, 0
      %v788 = vsel %vm497, %v772, 0
      %v791 = vsel %vm497, %v773, 0
      %v794 = vsel %vm497, %v774, 0
      %v797 = vsel %vm497, %v775, 0
      %v800 = vsel %vm497, %v776, 0
      %v803 = vsel %vm497, %v777, 0
      %v806 = vsel %vm497, %v778, 0
      %808 = vmatprep.subr.mxu0 0.0
      %809 = vmatpush1.msra.mxu0 %v782
      %810 = vmatprep.subr.mxu0 0.0
      %811 = vmatpush1.msra.mxu0 %v783
      %812 = vmatprep.subr.mxu0 0.0
      %813 = vmatpush1.msra.mxu0 0.0
      %814 = vmatprep.subr.mxu0 0.0
      %815 = vmatpush1.msra.mxu0 0.0
      %816 = vmatprep.subr.mxu0 0.0
      %817 = vmatpush1.msra.mxu0 0.0
      %818 = vmatprep.subr.mxu0 0.0
      %819 = vmatpush1.msra.mxu0 0.0
      %820 = vmatprep.subr.mxu0 0.0
      %821 = vmatpush1.msra.mxu0 0.0
      %822 = vmatprep.subr.mxu0 0.0
      %823 = vmatpush1.msra.mxu0 0.0
      %824 = vmatprep.subr.mxu0 0.0
      %825 = vmatpush1.msra.mxu0 0.0
      %826 = vmatprep.subr.mxu0 0.0
      %827 = vmatpush1.msra.mxu0 0.0
      %828 = vmatprep.subr.mxu0 0.0
      %829 = vmatpush1.msra.mxu0 0.0
      %830 = vmatprep.subr.mxu0 0.0
      %831 = vmatpush1.msra.mxu0 0.0
      %832 = vmatprep.subr.mxu0 0.0
      %833 = vmatpush1.msra.mxu0 0.0
      %834 = vmatprep.subr.mxu0 0.0
      %835 = vmatpush1.msra.mxu0 0.0
      %836 = vmatprep.subr.mxu0 0.0
      %837 = vmatpush1.msra.mxu0 0.0
      %838 = vmatprep.subr.mxu0 0.0
      %839 = vmatpush1.msra.mxu0 0.0
      %840 = vmatprep.subr.mxu0 0.0
      %841 = vmatpush1.msra.mxu0 0.0
      %842 = vmatprep.subr.mxu0 0.0
      %843 = vmatpush1.msra.mxu0 0.0
      %844 = vmatprep.subr.mxu0 0.0
      %845 = vmatpush1.msra.mxu0 0.0
      %846 = vmatprep.subr.mxu0 0.0
      %847 = vmatpush1.msra.mxu0 0.0
      %848 = vmatprep.subr.mxu0 0.0
      %849 = vmatpush1.msra.mxu0 0.0
      %850 = vmatprep.subr.mxu0 0.0
      %851 = vmatpush1.msra.mxu0 0.0
      %852 = vmatprep.subr.mxu0 0.0
      %853 = vmatpush1.msra.mxu0 0.0
      %854 = vmatprep.subr.mxu0 0.0
      %855 = vmatpush1.msra.mxu0 0.0
      %856 = vmatprep.subr.mxu0 0.0
      %857 = vmatpush1.msra.mxu0 0.0
      %858 = vmatprep.subr.mxu0 0.0
      %859 = vmatpush1.msra.mxu0 0.0
      %860 = vmatprep.subr.mxu0 0.0
      %861 = vmatpush1.msra.mxu0 0.0
      %862 = vmatprep.subr.mxu0 0.0
      %863 = vmatpush1.msra.mxu0 0.0
      %864 = vmatprep.subr.mxu0 0.0
      %865 = vmatpush1.msra.mxu0 0.0
      %866 = vmatprep.subr.mxu0 0.0
      %867 = vmatpush1.msra.mxu0 0.0
      %868 = vmatprep.subr.mxu0 0.0
      %869 = vmatpush1.msra.mxu0 0.0
      %870 = vmatprep.subr.mxu0 0.0
      %871 = vmatpush1.msra.mxu0 0.0
      %872 = vmatprep.mubr.f32.mxu0 0.0
      %873 = vmatmul.mubr.f32.gmra.mrb[0].mxu0 %v785
      %v874 = vpop.f32.mrb[0].mxu0
      %v875 = vadd.f32 0.0, %v874
      %v876 = vpop.f32.mrb[0].mxu0
      %877 = vmatprep.mubr.f32.mxu0 0.0
      %878 = vmatmul.mubr.f32.gmra.mrb[0].mxu0 %v788
      %v879 = vpop.f32.mrb[0].mxu0
      %v880 = vadd.f32 0.0, %v879
      %v881 = vpop.f32.mrb[0].mxu0
      %882 = vmatprep.mubr.f32.mxu0 0.0
      %883 = vmatmul.mubr.f32.gmra.mrb[0].mxu0 %v791
      %v884 = vpop.f32.mrb[0].mxu0
      %v885 = vadd.f32 0.0, %v884
      %v886 = vpop.f32.mrb[0].mxu0
      %887 = vmatprep.mubr.f32.mxu0 0.0
      %888 = vmatmul.mubr.f32.gmra.mrb[0].mxu0 %v794
      %v889 = vpop.f32.mrb[0].mxu0
      %v890 = vadd.f32 0.0, %v889
      %v891 = vpop.f32.mrb[0].mxu0
      %892 = vmatprep.mubr.f32.mxu0 0.0
      %893 = vmatmul.mubr.f32.gmra.mrb[0].mxu0 %v797
      %v894 = vpop.f32.mrb[0].mxu0
      %v895 = vadd.f32 0.0, %v894
      %v896 = vpop.f32.mrb[0].mxu0
      %897 = vmatprep.mubr.f32.mxu0 0.0
      %898 = vmatmul.mubr.f32.gmra.mrb[0].mxu0 %v800
      %v899 = vpop.f32.mrb[0].mxu0
      %v900 = vadd.f32 0.0, %v899
      %v901 = vpop.f32.mrb[0].mxu0
      %902 = vmatprep.mubr.f32.mxu0 0.0
      %903 = vmatmul.mubr.f32.gmra.mrb[0].mxu0 %v803
      %v904 = vpop.f32.mrb[0].mxu0
      %v905 = vadd.f32 0.0, %v904
      %v906 = vpop.f32.mrb[0].mxu0
      %907 = vmatprep.mubr.f32.mxu0 0.0
      %908 = vmatmul.mubr.f32.gmra.mrb[0].mxu0 %v806
      %v909 = vpop.f32.mrb[0].mxu0
      %v910 = vadd.f32 0.0, %v909
      %v911 = vpop.f32.mrb[0].mxu0
      %912 = vdwg.mxu0
      %v913 = vld [vmem:[#allocation2] sm:$0xff]
      %v914 = vld [vmem:[#allocation2 + $0x8] sm:$0xff]
      %v915 = vld [vmem:[#allocation2 + $0x10] sm:$0xff]
      %v916 = vld [vmem:[#allocation2 + $0x18] sm:$0xff]
      %v917 = vld [vmem:[#allocation2 + $0x20] sm:$0xff]
      %v918 = vld [vmem:[#allocation2 + $0x28] sm:$0xff]
      %v919 = vld [vmem:[#allocation2 + $0x30] sm:$0xff]
      %v920 = vld [vmem:[#allocation2 + $0x38] sm:$0xff]
      %929 = vrot.lane.b32.xlu0 %v875, 4
      %v930 = vpop.permute.xlu0 %929
      %931 = vrot.lane.b32.xlu0 %v880, 4
      %v932 = vpop.permute.xlu0 %931
      %933 = vrot.lane.b32.xlu0 %v885, 4
      %v934 = vpop.permute.xlu0 %933
      %935 = vrot.lane.b32.xlu0 %v890, 4
      %v936 = vpop.permute.xlu0 %935
      %937 = vrot.lane.b32.xlu0 %v895, 4
      %v938 = vpop.permute.xlu0 %937
      %939 = vrot.lane.b32.xlu0 %v900, 4
      %v940 = vpop.permute.xlu0 %939
      %941 = vrot.lane.b32.xlu0 %v905, 4
      %v942 = vpop.permute.xlu0 %941
      %943 = vrot.lane.b32.xlu0 %v910, 4
      %v944 = vpop.permute.xlu0 %943
      %v953 = vadd.f32 %v913, %v930
      %v954 = vadd.f32 %v914, %v932
      %v955 = vadd.f32 %v915, %v934
      %v956 = vadd.f32 %v916, %v936
      %v957 = vadd.f32 %v917, %v938
      %v958 = vadd.f32 %v918, %v940
      %v959 = vadd.f32 %v919, %v942
      %v960 = vadd.f32 %v920, %v944
      %vm961 = vcmask 64544
      %962 = vst.msk [vmem:[#allocation2] sm:$0xff] %vm961, %v953
      %963 = vst.msk [vmem:[#allocation2 + $0x8] sm:$0xff] %vm961, %v954
      %964 = vst.msk [vmem:[#allocation2 + $0x10] sm:$0xff] %vm961, %v955
      %965 = vst.msk [vmem:[#allocation2 + $0x18] sm:$0xff] %vm961, %v956
      %966 = vst.msk [vmem:[#allocation2 + $0x20] sm:$0xff] %vm961, %v957
      %967 = vst.msk [vmem:[#allocation2 + $0x28] sm:$0xff] %vm961, %v958
      %968 = vst.msk [vmem:[#allocation2 + $0x30] sm:$0xff] %vm961, %v959
      %969 = vst.msk [vmem:[#allocation2 + $0x38] sm:$0xff] %vm961, %v960
      %s970 = scalar_lea.vmem %s283, 32
      %v971 = vld [vmem:[%s970] sm:$0xff]
      %v972 = vld [vmem:[%s970 + $0x10] sm:$0xff]
      %v973 = vld [vmem:[%s970 + $0x20] sm:$0xff]
      %v974 = vld [vmem:[%s970 + $0x30] sm:$0xff]
      %v975 = vld [vmem:[%s970 + $0x40] sm:$0xff]
      %v976 = vld [vmem:[%s970 + $0x50] sm:$0xff]
      %v977 = vld [vmem:[%s970 + $0x60] sm:$0xff]
      %v978 = vld [vmem:[%s970 + $0x70] sm:$0xff]
      %v979 = vld [vmem:[%s970 + $0x1] sm:$0xff]
      %v980 = vld [vmem:[%s970 + $0x11] sm:$0xff]
      %v981 = vld [vmem:[%s970 + $0x21] sm:$0xff]
      %v982 = vld [vmem:[%s970 + $0x31] sm:$0xff]
      %v983 = vld [vmem:[%s970 + $0x41] sm:$0xff]
      %v984 = vld [vmem:[%s970 + $0x51] sm:$0xff]
      %v985 = vld [vmem:[%s970 + $0x61] sm:$0xff]
      %v986 = vld [vmem:[%s970 + $0x71] sm:$0xff]
      %987 = vrot.lane.b32.xlu0 %v361, 4
      %v988 = vpop.permute.xlu0 %987
      %989 = vrot.lane.b32.xlu0 %v362, 4
      %v990 = vpop.permute.xlu0 %989
      %991 = vrot.lane.b32.xlu0 %v363, 4
      %v992 = vpop.permute.xlu0 %991
      %993 = vrot.lane.b32.xlu0 %v364, 4
      %v994 = vpop.permute.xlu0 %993
      %995 = vrot.lane.b32.xlu0 %v365, 4
      %v996 = vpop.permute.xlu0 %995
      %997 = vrot.lane.b32.xlu0 %v366, 4
      %v998 = vpop.permute.xlu0 %997
      %999 = vrot.lane.b32.xlu0 %v367, 4
      %v1000 = vpop.permute.xlu0 %999
      %1001 = vrot.lane.b32.xlu0 %v368, 4
      %v1002 = vpop.permute.xlu0 %1001
      %1019 = vrot.lane.b32.xlu0 %v971, 8
      %v1020 = vpop.permute.xlu0 %1019
      %1021 = vrot.lane.b32.xlu0 %v972, 8
      %v1022 = vpop.permute.xlu0 %1021
      %1023 = vrot.lane.b32.xlu0 %v973, 8
      %v1024 = vpop.permute.xlu0 %1023
      %1025 = vrot.lane.b32.xlu0 %v974, 8
      %v1026 = vpop.permute.xlu0 %1025
      %1027 = vrot.lane.b32.xlu0 %v975, 8
      %v1028 = vpop.permute.xlu0 %1027
      %1029 = vrot.lane.b32.xlu0 %v976, 8
      %v1030 = vpop.permute.xlu0 %1029
      %1031 = vrot.lane.b32.xlu0 %v977, 8
      %v1032 = vpop.permute.xlu0 %1031
      %1033 = vrot.lane.b32.xlu0 %v978, 8
      %v1034 = vpop.permute.xlu0 %1033
      %1051 = vrot.lane.b32.xlu0 %v979, 12
      %v1052 = vpop.permute.xlu0 %1051
      %1053 = vrot.lane.b32.xlu0 %v980, 12
      %v1054 = vpop.permute.xlu0 %1053
      %1055 = vrot.lane.b32.xlu0 %v981, 12
      %v1056 = vpop.permute.xlu0 %1055
      %1057 = vrot.lane.b32.xlu0 %v982, 12
      %v1058 = vpop.permute.xlu0 %1057
      %1059 = vrot.lane.b32.xlu0 %v983, 12
      %v1060 = vpop.permute.xlu0 %1059
      %1061 = vrot.lane.b32.xlu0 %v984, 12
      %v1062 = vpop.permute.xlu0 %1061
      %1063 = vrot.lane.b32.xlu0 %v985, 12
      %v1064 = vpop.permute.xlu0 %1063
      %1065 = vrot.lane.b32.xlu0 %v986, 12
      %v1066 = vpop.permute.xlu0 %1065
      %v1075 = vsel %vm465, %v353, %v988
      %v1076 = vsel %vm465, %v354, %v990
      %v1077 = vsel %vm465, %v355, %v992
      %v1078 = vsel %vm465, %v356, %v994
      %v1079 = vsel %vm465, %v357, %v996
      %v1080 = vsel %vm465, %v358, %v998
      %v1081 = vsel %vm465, %v359, %v1000
      %v1082 = vsel %vm465, %v360, %v1002
      %v1083 = vsel %vm474, %v1075, %v1020
      %v1084 = vsel %vm474, %v1076, %v1022
      %v1085 = vsel %vm474, %v1077, %v1024
      %v1086 = vsel %vm474, %v1078, %v1026
      %v1087 = vsel %vm474, %v1079, %v1028
      %v1088 = vsel %vm474, %v1080, %v1030
      %v1089 = vsel %vm474, %v1081, %v1032
      %v1090 = vsel %vm474, %v1082, %v1034
      %v1091 = vsel %vm483, %v1083, %v1052
      %v1092 = vsel %vm483, %v1084, %v1054
      %v1093 = vsel %vm483, %v1085, %v1056
      %v1094 = vsel %vm483, %v1086, %v1058
      %v1095 = vsel %vm483, %v1087, %v1060
      %v1096 = vsel %vm483, %v1088, %v1062
      %v1097 = vsel %vm483, %v1089, %v1064
      %v1098 = vsel %vm483, %v1090, %v1066
      %s1099 = sadd.s32 %s492, 2
      %s1100 = smul.u32 %s1099, 16
      %s1101 = scalar_lea.vmem %s3, %s1100
      %v1102 = vld [vmem:[%s1101] sm:$0xff]
      %v1103 = vld [vmem:[%s1101 + $0x8] sm:$0xff]
      %v1105 = vsel %vm497, %v1091, 0
      %v1108 = vsel %vm497, %v1092, 0
      %v1111 = vsel %vm497, %v1093, 0
      %v1114 = vsel %vm497, %v1094, 0
      %v1117 = vsel %vm497, %v1095, 0
      %v1120 = vsel %vm497, %v1096, 0
      %v1123 = vsel %vm497, %v1097, 0
      %v1126 = vsel %vm497, %v1098, 0
      %1128 = vmatprep.subr.mxu0 0.0
      %1129 = vmatpush1.msra.mxu0 %v1102
      %1130 = vmatprep.subr.mxu0 0.0
      %1131 = vmatpush1.msra.mxu0 %v1103
      %1132 = vmatprep.subr.mxu0 0.0
      %1133 = vmatpush1.msra.mxu0 0.0
      %1134 = vmatprep.subr.mxu0 0.0
      %1135 = vmatpush1.msra.mxu0 0.0
      %1136 = vmatprep.subr.mxu0 0.0
      %1137 = vmatpush1.msra.mxu0 0.0
      %1138 = vmatprep.subr.mxu0 0.0
      %1139 = vmatpush1.msra.mxu0 0.0
      %1140 = vmatprep.subr.mxu0 0.0
      %1141 = vmatpush1.msra.mxu0 0.0
      %1142 = vmatprep.subr.mxu0 0.0
      %1143 = vmatpush1.msra.mxu0 0.0
      %1144 = vmatprep.subr.mxu0 0.0
      %1145 = vmatpush1.msra.mxu0 0.0
      %1146 = vmatprep.subr.mxu0 0.0
      %1147 = vmatpush1.msra.mxu0 0.0
      %1148 = vmatprep.subr.mxu0 0.0
      %1149 = vmatpush1.msra.mxu0 0.0
      %1150 = vmatprep.subr.mxu0 0.0
      %1151 = vmatpush1.msra.mxu0 0.0
      %1152 = vmatprep.subr.mxu0 0.0
      %1153 = vmatpush1.msra.mxu0 0.0
      %1154 = vmatprep.subr.mxu0 0.0
      %1155 = vmatpush1.msra.mxu0 0.0
      %1156 = vmatprep.subr.mxu0 0.0
      %1157 = vmatpush1.msra.mxu0 0.0
      %1158 = vmatprep.subr.mxu0 0.0
      %1159 = vmatpush1.msra.mxu0 0.0
      %1160 = vmatprep.subr.mxu0 0.0
      %1161 = vmatpush1.msra.mxu0 0.0
      %1162 = vmatprep.subr.mxu0 0.0
      %1163 = vmatpush1.msra.mxu0 0.0
      %1164 = vmatprep.subr.mxu0 0.0
      %1165 = vmatpush1.msra.mxu0 0.0
      %1166 = vmatprep.subr.mxu0 0.0
      %1167 = vmatpush1.msra.mxu0 0.0
      %1168 = vmatprep.subr.mxu0 0.0
      %1169 = vmatpush1.msra.mxu0 0.0
      %1170 = vmatprep.subr.mxu0 0.0
      %1171 = vmatpush1.msra.mxu0 0.0
      %1172 = vmatprep.subr.mxu0 0.0
      %1173 = vmatpush1.msra.mxu0 0.0
      %1174 = vmatprep.subr.mxu0 0.0
      %1175 = vmatpush1.msra.mxu0 0.0
      %1176 = vmatprep.subr.mxu0 0.0
      %1177 = vmatpush1.msra.mxu0 0.0
      %1178 = vmatprep.subr.mxu0 0.0
      %1179 = vmatpush1.msra.mxu0 0.0
      %1180 = vmatprep.subr.mxu0 0.0
      %1181 = vmatpush1.msra.mxu0 0.0
      %1182 = vmatprep.subr.mxu0 0.0
      %1183 = vmatpush1.msra.mxu0 0.0
      %1184 = vmatprep.subr.mxu0 0.0
      %1185 = vmatpush1.msra.mxu0 0.0
      %1186 = vmatprep.subr.mxu0 0.0
      %1187 = vmatpush1.msra.mxu0 0.0
      %1188 = vmatprep.subr.mxu0 0.0
      %1189 = vmatpush1.msra.mxu0 0.0
      %1190 = vmatprep.subr.mxu0 0.0
      %1191 = vmatpush1.msra.mxu0 0.0
      %1192 = vmatprep.mubr.f32.mxu0 0.0
      %1193 = vmatmul.mubr.f32.gmra.mrb[0].mxu0 %v1105
      %v1194 = vpop.f32.mrb[0].mxu0
      %v1195 = vadd.f32 0.0, %v1194
      %v1196 = vpop.f32.mrb[0].mxu0
      %1197 = vmatprep.mubr.f32.mxu0 0.0
      %1198 = vmatmul.mubr.f32.gmra.mrb[0].mxu0 %v1108
      %v1199 = vpop.f32.mrb[0].mxu0
      %v1200 = vadd.f32 0.0, %v1199
      %v1201 = vpop.f32.mrb[0].mxu0
      %1202 = vmatprep.mubr.f32.mxu0 0.0
      %1203 = vmatmul.mubr.f32.gmra.mrb[0].mxu0 %v1111
      %v1204 = vpop.f32.mrb[0].mxu0
      %v1205 = vadd.f32 0.0, %v1204
      %v1206 = vpop.f32.mrb[0].mxu0
      %1207 = vmatprep.mubr.f32.mxu0 0.0
      %1208 = vmatmul.mubr.f32.gmra.mrb[0].mxu0 %v1114
      %v1209 = vpop.f32.mrb[0].mxu0
      %v1210 = vadd.f32 0.0, %v1209
      %v1211 = vpop.f32.mrb[0].mxu0
      %1212 = vmatprep.mubr.f32.mxu0 0.0
      %1213 = vmatmul.mubr.f32.gmra.mrb[0].mxu0 %v1117
      %v1214 = vpop.f32.mrb[0].mxu0
      %v1215 = vadd.f32 0.0, %v1214
      %v1216 = vpop.f32.mrb[0].mxu0
      %1217 = vmatprep.mubr.f32.mxu0 0.0
      %1218 = vmatmul.mubr.f32.gmra.mrb[0].mxu0 %v1120
      %v1219 = vpop.f32.mrb[0].mxu0
      %v1220 = vadd.f32 0.0, %v1219
      %v1221 = vpop.f32.mrb[0].mxu0
      %1222 = vmatprep.mubr.f32.mxu0 0.0
      %1223 = vmatmul.mubr.f32.gmra.mrb[0].mxu0 %v1123
      %v1224 = vpop.f32.mrb[0].mxu0
      %v1225 = vadd.f32 0.0, %v1224
      %v1226 = vpop.f32.mrb[0].mxu0
      %1227 = vmatprep.mubr.f32.mxu0 0.0
      %1228 = vmatmul.mubr.f32.gmra.mrb[0].mxu0 %v1126
      %v1229 = vpop.f32.mrb[0].mxu0
      %v1230 = vadd.f32 0.0, %v1229
      %v1231 = vpop.f32.mrb[0].mxu0
      %1232 = vdwg.mxu0
      %s1233 = scalar_lea.vmem [#allocation2], 64
      %v1234 = vld [vmem:[%s1233] sm:$0xff]
      %v1235 = vld [vmem:[%s1233 + $0x8] sm:$0xff]
      %v1236 = vld [vmem:[%s1233 + $0x10] sm:$0xff]
      %v1237 = vld [vmem:[%s1233 + $0x18] sm:$0xff]
      %v1238 = vld [vmem:[%s1233 + $0x20] sm:$0xff]
      %v1239 = vld [vmem:[%s1233 + $0x28] sm:$0xff]
      %v1240 = vld [vmem:[%s1233 + $0x30] sm:$0xff]
      %v1241 = vld [vmem:[%s1233 + $0x38] sm:$0xff]
      %v1242 = vadd.f32 %v1234, %v1195
      %v1243 = vadd.f32 %v1235, %v1200
      %v1244 = vadd.f32 %v1236, %v1205
      %v1245 = vadd.f32 %v1237, %v1210
      %v1246 = vadd.f32 %v1238, %v1215
      %v1247 = vadd.f32 %v1239, %v1220
      %v1248 = vadd.f32 %v1240, %v1225
      %v1249 = vadd.f32 %v1241, %v1230
      %1250 = vst.msk [vmem:[%s1233] sm:$0xff] %vm465, %v1242
      %1251 = vst.msk [vmem:[%s1233 + $0x8] sm:$0xff] %vm465, %v1243
      %1252 = vst.msk [vmem:[%s1233 + $0x10] sm:$0xff] %vm465, %v1244
      %1253 = vst.msk [vmem:[%s1233 + $0x18] sm:$0xff] %vm465, %v1245
      %1254 = vst.msk [vmem:[%s1233 + $0x20] sm:$0xff] %vm465, %v1246
      %1255 = vst.msk [vmem:[%s1233 + $0x28] sm:$0xff] %vm465, %v1247
      %1256 = vst.msk [vmem:[%s1233 + $0x30] sm:$0xff] %vm465, %v1248
      %1257 = vst.msk [vmem:[%s1233 + $0x38] sm:$0xff] %vm465, %v1249
      %v1258 = vld [vmem:[%s970 + $0x2] sm:$0xff]
      %v1259 = vld [vmem:[%s970 + $0x12] sm:$0xff]
      %v1260 = vld [vmem:[%s970 + $0x22] sm:$0xff]
      %v1261 = vld [vmem:[%s970 + $0x32] sm:$0xff]
      %v1262 = vld [vmem:[%s970 + $0x42] sm:$0xff]
      %v1263 = vld [vmem:[%s970 + $0x52] sm:$0xff]
      %v1264 = vld [vmem:[%s970 + $0x62] sm:$0xff]
      %v1265 = vld [vmem:[%s970 + $0x72] sm:$0xff]
      %1266 = vrot.lane.b32.xlu0 %v659, 4
      %v1267 = vpop.permute.xlu0 %1266
      %1268 = vrot.lane.b32.xlu0 %v660, 4
      %v1269 = vpop.permute.xlu0 %1268
      %1270 = vrot.lane.b32.xlu0 %v661, 4
      %v1271 = vpop.permute.xlu0 %1270
      %1272 = vrot.lane.b32.xlu0 %v662, 4
      %v1273 = vpop.permute.xlu0 %1272
      %1274 = vrot.lane.b32.xlu0 %v663, 4
      %v1275 = vpop.permute.xlu0 %1274
      %1276 = vrot.lane.b32.xlu0 %v664, 4
      %v1277 = vpop.permute.xlu0 %1276
      %1278 = vrot.lane.b32.xlu0 %v665, 4
      %v1279 = vpop.permute.xlu0 %1278
      %1280 = vrot.lane.b32.xlu0 %v666, 4
      %v1281 = vpop.permute.xlu0 %1280
      %1290 = vrot.lane.b32.xlu0 %v979, 8
      %v1291 = vpop.permute.xlu0 %1290
      %1292 = vrot.lane.b32.xlu0 %v980, 8
      %v1293 = vpop.permute.xlu0 %1292
      %1294 = vrot.lane.b32.xlu0 %v981, 8
      %v1295 = vpop.permute.xlu0 %1294
      %1296 = vrot.lane.b32.xlu0 %v982, 8
      %v1297 = vpop.permute.xlu0 %1296
      %1298 = vrot.lane.b32.xlu0 %v983, 8
      %v1299 = vpop.permute.xlu0 %1298
      %1300 = vrot.lane.b32.xlu0 %v984, 8
      %v1301 = vpop.permute.xlu0 %1300
      %1302 = vrot.lane.b32.xlu0 %v985, 8
      %v1303 = vpop.permute.xlu0 %1302
      %1304 = vrot.lane.b32.xlu0 %v986, 8
      %v1305 = vpop.permute.xlu0 %1304
      %1322 = vrot.lane.b32.xlu0 %v1258, 12
      %v1323 = vpop.permute.xlu0 %1322
      %1324 = vrot.lane.b32.xlu0 %v1259, 12
      %v1325 = vpop.permute.xlu0 %1324
      %1326 = vrot.lane.b32.xlu0 %v1260, 12
      %v1327 = vpop.permute.xlu0 %1326
      %1328 = vrot.lane.b32.xlu0 %v1261, 12
      %v1329 = vpop.permute.xlu0 %1328
      %1330 = vrot.lane.b32.xlu0 %v1262, 12
      %v1331 = vpop.permute.xlu0 %1330
      %1332 = vrot.lane.b32.xlu0 %v1263, 12
      %v1333 = vpop.permute.xlu0 %1332
      %1334 = vrot.lane.b32.xlu0 %v1264, 12
      %v1335 = vpop.permute.xlu0 %1334
      %1336 = vrot.lane.b32.xlu0 %v1265, 12
      %v1337 = vpop.permute.xlu0 %1336
      %v1346 = vsel %vm465, %v361, %v1267
      %v1347 = vsel %vm465, %v362, %v1269
      %v1348 = vsel %vm465, %v363, %v1271
      %v1349 = vsel %vm465, %v364, %v1273
      %v1350 = vsel %vm465, %v365, %v1275
      %v1351 = vsel %vm465, %v366, %v1277
      %v1352 = vsel %vm465, %v367, %v1279
      %v1353 = vsel %vm465, %v368, %v1281
      %v1354 = vsel %vm474, %v1346, %v1291
      %v1355 = vsel %vm474, %v1347, %v1293
      %v1356 = vsel %vm474, %v1348, %v1295
      %v1357 = vsel %vm474, %v1349, %v1297
      %v1358 = vsel %vm474, %v1350, %v1299
      %v1359 = vsel %vm474, %v1351, %v1301
      %v1360 = vsel %vm474, %v1352, %v1303
      %v1361 = vsel %vm474, %v1353, %v1305
      %v1362 = vsel %vm483, %v1354, %v1323
      %v1363 = vsel %vm483, %v1355, %v1325
      %v1364 = vsel %vm483, %v1356, %v1327
      %v1365 = vsel %vm483, %v1357, %v1329
      %v1366 = vsel %vm483, %v1358, %v1331
      %v1367 = vsel %vm483, %v1359, %v1333
      %v1368 = vsel %vm483, %v1360, %v1335
      %v1369 = vsel %vm483, %v1361, %v1337
      %s1370 = sadd.s32 %s492, 3
      %s1371 = smul.u32 %s1370, 16
      %s1372 = scalar_lea.vmem %s3, %s1371
      %v1373 = vld [vmem:[%s1372] sm:$0xff]
      %v1374 = vld [vmem:[%s1372 + $0x8] sm:$0xff]
      %v1376 = vsel %vm497, %v1362, 0
      %v1379 = vsel %vm497, %v1363, 0
      %v1382 = vsel %vm497, %v1364, 0
      %v1385 = vsel %vm497, %v1365, 0
      %v1388 = vsel %vm497, %v1366, 0
      %v1391 = vsel %vm497, %v1367, 0
      %v1394 = vsel %vm497, %v1368, 0
      %v1397 = vsel %vm497, %v1369, 0
      %1399 = vmatprep.subr.mxu0 0.0
      %1400 = vmatpush1.msra.mxu0 %v1373
      %1401 = vmatprep.subr.mxu0 0.0
      %1402 = vmatpush1.msra.mxu0 %v1374
      %1403 = vmatprep.subr.mxu0 0.0
      %1404 = vmatpush1.msra.mxu0 0.0
      %1405 = vmatprep.subr.mxu0 0.0
      %1406 = vmatpush1.msra.mxu0 0.0
      %1407 = vmatprep.subr.mxu0 0.0
      %1408 = vmatpush1.msra.mxu0 0.0
      %1409 = vmatprep.subr.mxu0 0.0
      %1410 = vmatpush1.msra.mxu0 0.0
      %1411 = vmatprep.subr.mxu0 0.0
      %1412 = vmatpush1.msra.mxu0 0.0
      %1413 = vmatprep.subr.mxu0 0.0
      %1414 = vmatpush1.msra.mxu0 0.0
      %1415 = vmatprep.subr.mxu0 0.0
      %1416 = vmatpush1.msra.mxu0 0.0
      %1417 = vmatprep.subr.mxu0 0.0
      %1418 = vmatpush1.msra.mxu0 0.0
      %1419 = vmatprep.subr.mxu0 0.0
      %1420 = vmatpush1.msra.mxu0 0.0
      %1421 = vmatprep.subr.mxu0 0.0
      %1422 = vmatpush1.msra.mxu0 0.0
      %1423 = vmatprep.subr.mxu0 0.0
      %1424 = vmatpush1.msra.mxu0 0.0
      %1425 = vmatprep.subr.mxu0 0.0
      %1426 = vmatpush1.msra.mxu0 0.0
      %1427 = vmatprep.subr.mxu0 0.0
      %1428 = vmatpush1.msra.mxu0 0.0
      %1429 = vmatprep.subr.mxu0 0.0
      %1430 = vmatpush1.msra.mxu0 0.0
      %1431 = vmatprep.subr.mxu0 0.0
      %1432 = vmatpush1.msra.mxu0 0.0
      %1433 = vmatprep.subr.mxu0 0.0
      %1434 = vmatpush1.msra.mxu0 0.0
      %1435 = vmatprep.subr.mxu0 0.0
      %1436 = vmatpush1.msra.mxu0 0.0
      %1437 = vmatprep.subr.mxu0 0.0
      %1438 = vmatpush1.msra.mxu0 0.0
      %1439 = vmatprep.subr.mxu0 0.0
      %1440 = vmatpush1.msra.mxu0 0.0
      %1441 = vmatprep.subr.mxu0 0.0
      %1442 = vmatpush1.msra.mxu0 0.0
      %1443 = vmatprep.subr.mxu0 0.0
      %1444 = vmatpush1.msra.mxu0 0.0
      %1445 = vmatprep.subr.mxu0 0.0
      %1446 = vmatpush1.msra.mxu0 0.0
      %1447 = vmatprep.subr.mxu0 0.0
      %1448 = vmatpush1.msra.mxu0 0.0
      %1449 = vmatprep.subr.mxu0 0.0
      %1450 = vmatpush1.msra.mxu0 0.0
      %1451 = vmatprep.subr.mxu0 0.0
      %1452 = vmatpush1.msra.mxu0 0.0
      %1453 = vmatprep.subr.mxu0 0.0
      %1454 = vmatpush1.msra.mxu0 0.0
      %1455 = vmatprep.subr.mxu0 0.0
      %1456 = vmatpush1.msra.mxu0 0.0
      %1457 = vmatprep.subr.mxu0 0.0
      %1458 = vmatpush1.msra.mxu0 0.0
      %1459 = vmatprep.subr.mxu0 0.0
      %1460 = vmatpush1.msra.mxu0 0.0
      %1461 = vmatprep.subr.mxu0 0.0
      %1462 = vmatpush1.msra.mxu0 0.0
      %1463 = vmatprep.mubr.f32.mxu0 0.0
      %1464 = vmatmul.mubr.f32.gmra.mrb[0].mxu0 %v1376
      %v1465 = vpop.f32.mrb[0].mxu0
      %v1466 = vadd.f32 0.0, %v1465
      %v1467 = vpop.f32.mrb[0].mxu0
      %1468 = vmatprep.mubr.f32.mxu0 0.0
      %1469 = vmatmul.mubr.f32.gmra.mrb[0].mxu0 %v1379
      %v1470 = vpop.f32.mrb[0].mxu0
      %v1471 = vadd.f32 0.0, %v1470
      %v1472 = vpop.f32.mrb[0].mxu0
      %1473 = vmatprep.mubr.f32.mxu0 0.0
      %1474 = vmatmul.mubr.f32.gmra.mrb[0].mxu0 %v1382
      %v1475 = vpop.f32.mrb[0].mxu0
      %v1476 = vadd.f32 0.0, %v1475
      %v1477 = vpop.f32.mrb[0].mxu0
      %1478 = vmatprep.mubr.f32.mxu0 0.0
      %1479 = vmatmul.mubr.f32.gmra.mrb[0].mxu0 %v1385
      %v1480 = vpop.f32.mrb[0].mxu0
      %v1481 = vadd.f32 0.0, %v1480
      %v1482 = vpop.f32.mrb[0].mxu0
      %1483 = vmatprep.mubr.f32.mxu0 0.0
      %1484 = vmatmul.mubr.f32.gmra.mrb[0].mxu0 %v1388
      %v1485 = vpop.f32.mrb[0].mxu0
      %v1486 = vadd.f32 0.0, %v1485
      %v1487 = vpop.f32.mrb[0].mxu0
      %1488 = vmatprep.mubr.f32.mxu0 0.0
      %1489 = vmatmul.mubr.f32.gmra.mrb[0].mxu0 %v1391
      %v1490 = vpop.f32.mrb[0].mxu0
      %v1491 = vadd.f32 0.0, %v1490
      %v1492 = vpop.f32.mrb[0].mxu0
      %1493 = vmatprep.mubr.f32.mxu0 0.0
      %1494 = vmatmul.mubr.f32.gmra.mrb[0].mxu0 %v1394
      %v1495 = vpop.f32.mrb[0].mxu0
      %v1496 = vadd.f32 0.0, %v1495
      %v1497 = vpop.f32.mrb[0].mxu0
      %1498 = vmatprep.mubr.f32.mxu0 0.0
      %1499 = vmatmul.mubr.f32.gmra.mrb[0].mxu0 %v1397
      %v1500 = vpop.f32.mrb[0].mxu0
      %v1501 = vadd.f32 0.0, %v1500
      %v1502 = vpop.f32.mrb[0].mxu0
      %1503 = vdwg.mxu0
      %v1504 = vld [vmem:[%s1233] sm:$0xff]
      %v1505 = vld [vmem:[%s1233 + $0x8] sm:$0xff]
      %v1506 = vld [vmem:[%s1233 + $0x10] sm:$0xff]
      %v1507 = vld [vmem:[%s1233 + $0x18] sm:$0xff]
      %v1508 = vld [vmem:[%s1233 + $0x20] sm:$0xff]
      %v1509 = vld [vmem:[%s1233 + $0x28] sm:$0xff]
      %v1510 = vld [vmem:[%s1233 + $0x30] sm:$0xff]
      %v1511 = vld [vmem:[%s1233 + $0x38] sm:$0xff]
      %1520 = vrot.lane.b32.xlu0 %v1466, 4
      %v1521 = vpop.permute.xlu0 %1520
      %1522 = vrot.lane.b32.xlu0 %v1471, 4
      %v1523 = vpop.permute.xlu0 %1522
      %1524 = vrot.lane.b32.xlu0 %v1476, 4
      %v1525 = vpop.permute.xlu0 %1524
      %1526 = vrot.lane.b32.xlu0 %v1481, 4
      %v1527 = vpop.permute.xlu0 %1526
      %1528 = vrot.lane.b32.xlu0 %v1486, 4
      %v1529 = vpop.permute.xlu0 %1528
      %1530 = vrot.lane.b32.xlu0 %v1491, 4
      %v1531 = vpop.permute.xlu0 %1530
      %1532 = vrot.lane.b32.xlu0 %v1496, 4
      %v1533 = vpop.permute.xlu0 %1532
      %1534 = vrot.lane.b32.xlu0 %v1501, 4
      %v1535 = vpop.permute.xlu0 %1534
      %v1544 = vadd.f32 %v1504, %v1521
      %v1545 = vadd.f32 %v1505, %v1523
      %v1546 = vadd.f32 %v1506, %v1525
      %v1547 = vadd.f32 %v1507, %v1527
      %v1548 = vadd.f32 %v1508, %v1529
      %v1549 = vadd.f32 %v1509, %v1531
      %v1550 = vadd.f32 %v1510, %v1533
      %v1551 = vadd.f32 %v1511, %v1535
      %1552 = vst.msk [vmem:[%s1233] sm:$0xff] %vm961, %v1544
      %1553 = vst.msk [vmem:[%s1233 + $0x8] sm:$0xff] %vm961, %v1545
      %1554 = vst.msk [vmem:[%s1233 + $0x10] sm:$0xff] %vm961, %v1546
      %1555 = vst.msk [vmem:[%s1233 + $0x18] sm:$0xff] %vm961, %v1547
      %1556 = vst.msk [vmem:[%s1233 + $0x20] sm:$0xff] %vm961, %v1548
      %1557 = vst.msk [vmem:[%s1233 + $0x28] sm:$0xff] %vm961, %v1549
      %1558 = vst.msk [vmem:[%s1233 + $0x30] sm:$0xff] %vm961, %v1550
      %1559 = vst.msk [vmem:[%s1233 + $0x38] sm:$0xff] %vm961, %v1551
      %p1560 = scmp.eq.s32.totalorder %s35, 1
      // Predicated region
      $region37: #{tpu_custom_call.1} parent=31 // pred_check
        %p1561 = pneg %p1560
      $region38: #{tpu_custom_call.1} parent=31 // pred_check_branch
        %1563 = sbr.rel (%p1561) target = $region40
      $region39: #{tpu_custom_call.1} parent=31 // pred_region
        %v1564 = vld [vmem:[#allocation2] sm:$0xff]
        %v1565 = vld [vmem:[#allocation2 + $0x8] sm:$0xff]
        %v1566 = vld [vmem:[#allocation2 + $0x10] sm:$0xff]
        %v1567 = vld [vmem:[#allocation2 + $0x18] sm:$0xff]
        %v1568 = vld [vmem:[#allocation2 + $0x20] sm:$0xff]
        %v1569 = vld [vmem:[#allocation2 + $0x28] sm:$0xff]
        %v1570 = vld [vmem:[#allocation2 + $0x30] sm:$0xff]
        %v1571 = vld [vmem:[#allocation2 + $0x38] sm:$0xff]
        %v1572 = vld [vmem:[%s1233] sm:$0xff]
        %v1573 = vld [vmem:[%s1233 + $0x8] sm:$0xff]
        %v1574 = vld [vmem:[%s1233 + $0x10] sm:$0xff]
        %v1575 = vld [vmem:[%s1233 + $0x18] sm:$0xff]
        %v1576 = vld [vmem:[%s1233 + $0x20] sm:$0xff]
        %v1577 = vld [vmem:[%s1233 + $0x28] sm:$0xff]
        %v1578 = vld [vmem:[%s1233 + $0x30] sm:$0xff]
        %v1579 = vld [vmem:[%s1233 + $0x38] sm:$0xff]
        %v1580 = vld [vmem:[%s4] sm:$0x1]
        %v1582 = vlaneseq
        %v1583 = vshrl.u32 %v1582, 7
        %v1584 = vsub.s32 0, %v1583
        %v1585 = vrot.slane %v1580, %v1584
        %v1587 = vadd.f32 %v1564, %v1585
        %v1588 = vadd.f32 %v1572, %v1585
        %v1589 = vadd.f32 %v1565, %v1585
        %v1590 = vadd.f32 %v1573, %v1585
        %v1591 = vadd.f32 %v1566, %v1585
        %v1592 = vadd.f32 %v1574, %v1585
        %v1593 = vadd.f32 %v1567, %v1585
        %v1594 = vadd.f32 %v1575, %v1585
        %v1595 = vadd.f32 %v1568, %v1585
        %v1596 = vadd.f32 %v1576, %v1585
        %v1597 = vadd.f32 %v1569, %v1585
        %v1598 = vadd.f32 %v1577, %v1585
        %v1599 = vadd.f32 %v1570, %v1585
        %v1600 = vadd.f32 %v1578, %v1585
        %v1601 = vadd.f32 %v1571, %v1585
        %v1602 = vadd.f32 %v1579, %v1585
        %1603 = vst.msk [vmem:[%s305] sm:$0xff] %vm474, %v1587
        %1604 = vst.msk [vmem:[%s305 + $0x8] sm:$0xff] %vm474, %v1588
        %1605 = vst.msk [vmem:[%s305 + $0x10] sm:$0xff] %vm474, %v1589
        %1606 = vst.msk [vmem:[%s305 + $0x18] sm:$0xff] %vm474, %v1590
        %1607 = vst.msk [vmem:[%s305 + $0x20] sm:$0xff] %vm474, %v1591
        %1608 = vst.msk [vmem:[%s305 + $0x28] sm:$0xff] %vm474, %v1592
        %1609 = vst.msk [vmem:[%s305 + $0x30] sm:$0xff] %vm474, %v1593
        %1610 = vst.msk [vmem:[%s305 + $0x38] sm:$0xff] %vm474, %v1594
        %1611 = vst.msk [vmem:[%s305 + $0x40] sm:$0xff] %vm474, %v1595
        %1612 = vst.msk [vmem:[%s305 + $0x48] sm:$0xff] %vm474, %v1596
        %1613 = vst.msk [vmem:[%s305 + $0x50] sm:$0xff] %vm474, %v1597
        %1614 = vst.msk [vmem:[%s305 + $0x58] sm:$0xff] %vm474, %v1598
        %1615 = vst.msk [vmem:[%s305 + $0x60] sm:$0xff] %vm474, %v1599
        %1616 = vst.msk [vmem:[%s305 + $0x68] sm:$0xff] %vm474, %v1600
        %1617 = vst.msk [vmem:[%s305 + $0x70] sm:$0xff] %vm474, %v1601
        %1618 = vst.msk [vmem:[%s305 + $0x78] sm:$0xff] %vm474, %v1602
      $region40: #{tpu_custom_call.1} parent=31 // pred_fallthru
        _
      %s1619 = smul.u32 16, %s34
      %p1620 = scmp.lt.s32.totalorder %s32, 1
      %s1621 = scalar_select %p1620, %s32, 1
      %p1622 = scmp.lt.s32.totalorder %s33, 4
      %s1623 = scalar_select %p1622, %s33, 4
      %p1624 = scmp.lt.s32.totalorder %s1619, 15
      %s1625 = scalar_select %p1624, %s1619, 15
      %s1626 = smul.addr %s1623, 16
      %s1627 = sadd.s32 %s1625, %s1626
      %s1628 = smul.addr %s1621, 80
      %s1629 = sadd.s32 %s1627, %s1628
      %s1630 = smul.addr %s1629, 8
      %s1631 = scalar_lea.vmem %s5, %s1630
      // Predicated region
      $region41: #{tpu_custom_call.1} parent=31 // pred_check
        %p1632 = pneg %p162
      $region42: #{tpu_custom_call.1} parent=31 // pred_check_branch
        %1634 = sbr.rel (%p1632) target = $region44
      $region43: #{tpu_custom_call.1} parent=31 // pred_region
        %s1635 = smul.u32 16, %s34
      $region44: #{tpu_custom_call.1} parent=31 // pred_fallthru
        _
    $region32: #{tpu_custom_call.1} parent=5 // pred_fallthru
      _
    %p1636 = scmp.le.s32.totalorder 2, %s21
    // Predicated region
    $region45: #{tpu_custom_call.1} parent=5 // pred_check
      %p1637 = pneg %p1636
    $region46: #{tpu_custom_call.1} parent=5 // pred_check_branch
      %1639 = sbr.rel (%p1637) target = $region48
    $region47: #{tpu_custom_call.1} parent=5 // pred_region
      %s1640 = ssub.s32 %s21, 2
      // Predicated region
      $region49: #{tpu_custom_call.1} parent=47 // pred_check
        %p1641 = pneg %p168
      $region50: #{tpu_custom_call.1} parent=47 // pred_check_branch
        %1643 = sbr.rel (%p1641) target = $region52
      $region51: #{tpu_custom_call.1} parent=47 // pred_region
        %s1644 = smul.u32 16, %s38
        %p1645 = scmp.lt.s32.totalorder %s36, 1
        %s1646 = scalar_select %p1645, %s36, 1
        %p1647 = scmp.lt.s32.totalorder %s37, 4
        %s1648 = scalar_select %p1647, %s37, 4
        %p1649 = scmp.lt.s32.totalorder %s1644, 15
        %s1650 = scalar_select %p1649, %s1644, 15
        %s1651 = smul.addr %s1648, 16
        %s1652 = sadd.s32 %s1650, %s1651
        %s1653 = smul.addr %s1646, 80
        %s1654 = sadd.s32 %s1652, %s1653
        %s1655 = smul.addr %s1654, 8
        %s1656 = scalar_lea.vmem %s5, %s1655
      $region52: #{tpu_custom_call.1} parent=47 // pred_fallthru
        _
    $region48: #{tpu_custom_call.1} parent=5 // pred_fallthru
      _
  $region6: #{tpu_custom_call.1} parent=0 // loop_footer
    %s25 = sadd.s32 1, %s21
  $region7: #{tpu_custom_call.1} parent=0 // loop_footer_branch
    %20 = sbr.rel target = $region3
  $region8: #{tpu_custom_call.1} parent=0 // loop_exit
    _

// kernel: tpu_custom_call.1
$region0: #{tpu_custom_call.1}
  #allocation0 [shape = 'u32[]', space=smem, size = 0x4, offset = 0x4, fixed_abs, tag = 'smem constant byte address 0x4 - core index']
  #allocation1 [shape = 'u32[144,128]{1,0:T(1,128)}', space=vmem, size = 0x12000, scoped, tag = 'internal scratch']
  #allocation2 [shape = 'f32[2,8,8,8]{3,2,1,0:T(8,128)}', space=vmem, size = 0x10000, scoped, tag = 'scratch operand']
  #allocation3 [shape = 's32[1]{0}', space=sflag, size = 0x4, scoped, tag = 'scoped memory for tpu_custom_call.1']
  #allocation4 [shape = 'u8[4096]{0}', space=smem, size = 0x1000, scoped, tag = 'prefetched SMEM operand 0']
  #allocation5 [shape = 'u8[4096]{0}', space=smem, size = 0x1000, scoped, tag = 'prefetched SMEM operand 1']
  %s0 = inlined_call_operand.vmem [shape: s32[5,2], index: 0, kind: input, shape index: {}]
  %s1 = inlined_call_operand.vmem [shape: s32[5,2], index: 1, kind: input, shape index: {}]
  %s2 = inlined_call_operand.vmem [shape: f32[2,3,10,10,4], index: 2, kind: input, shape index: {}]
  %s3 = inlined_call_operand.vmem [shape: f32[16,16,4], index: 3, kind: input, shape index: {}]
  %s4 = inlined_call_operand.vmem [shape: f32[1,8], index: 4, kind: input, shape index: {}]
  %s5 = inlined_call_operand.vmem [shape: f32[2,5,16,8,8], index: 5, kind: output, shape index: {}]
  %s6 = sld [smem:[#allocation0]]
  $region53: #{tpu_custom_call.1} parent=0
    _
  %s8 = ssub.s32 1, %s6
  %s9 = scalar_select 0, %s8, %s6
  %s10 = sshll.u32 %s0, 4
  %s11 = int_to_ptr.vmem [resolvable:$true] %s10
  %13 = dma.vmem_to_smem %s11, 128, [#allocation4], [#allocation3]
  %s14 = sshll.u32 %s1, 4
  %s15 = int_to_ptr.vmem [resolvable:$true] %s14
  %17 = dma.vmem_to_smem %s15, 128, [#allocation5], [#allocation3]
  %18 = dma.done [#allocation3], 256
  %19 = sfence
  loop: start=0, step=1, limit=22
  $region2: #{tpu_custom_call.1} parent=0 // loop_pre_header
    _
  $region3: #{tpu_custom_call.1} parent=0 // loop_header
    %s21 = sphi 0, %s25
    %p22 = scmp.ge.s32.totalorder %s21, 22
    %s28 = sphi 0, %s54
    %s29 = sphi 0, %s50
    %s30 = sphi 0, %s46
    %s31 = sphi 0, %s42
    %s32 = sphi 0, %s28
    %s33 = sphi 0, %s29
    %s34 = sphi 0, %s30
    %s35 = sphi 0, %s31
    %s36 = sphi 0, %s32
    %s37 = sphi 0, %s33
    %s38 = sphi 0, %s34
    %s39 = sphi 0, %s35
    %s77 = sphi 0, %s79
    %s80 = sphi 0, %s77
    %s81 = sphi 0, %s80
    %s97 = sphi 0, %s81
    %s101 = sphi 0, %s101
    %s103 = sphi 0, %s101
    %s104 = sphi 0, %s103
    %s118 = sphi 0, %s104
    %s122 = sphi 0, %s122
    %s124 = sphi 0, %s122
    %s125 = sphi 0, %s124
    %s139 = sphi 0, %s125
    %s149 = sphi 0, %s151
    %s152 = sphi 0, %s149
    %s153 = sphi 0, %s152
    %s169 = sphi 0, %s153
  $region4: #{tpu_custom_call.1} parent=0 // loop_header_branch
    %24 = sbr.rel (%p22) target = $region8
  $region5: #{tpu_custom_call.1} parent=0 // loop_body
    %s26 = ssub.s32 %s21, 1
    %s27 = ssub.s32 %s21, 2
    %s40 = sadd.s32 1, %s31
    %p41 = scmp.ge.s32.totalorder %s40, 2
    %s42 = scalar_select %p41, 0, %s40
    %s43 = sadd.s32 1, %s30
    %s44 = scalar_select %p41, %s43, %s30
    %p45 = scmp.ge.s32.totalorder %s44, 1
    %s46 = scalar_select %p45, 0, %s44
    %s47 = sadd.s32 1, %s29
    %s48 = scalar_select %p45, %s47, %s29
    %p49 = scmp.ge.s32.totalorder %s48, 5
    %s50 = scalar_select %p49, 0, %s48
    %s51 = sadd.s32 1, %s28
    %s52 = scalar_select %p49, %s51, %s28
    %p53 = scmp.ge.s32.totalorder %s52, 2
    %s54 = scalar_select %p53, 0, %s52
    %s55 = sshra.s32 %s31, 7
    %s56 = sand.u32 %s31, 127
    %s57 = sadd.s32 %s55, %s29
    %s58 = smul.u32 %s57, 128
    %s59 = sshra.s32 %s31, 7
    %s60 = sand.u32 %s31, 127
    %s61 = sadd.s32 %s58, %s60
    %s62 = sld [smem:[#allocation4 + %s61]]
    %s63 = sadd.s32 %s62, %s30
    %s64 = sshra.s32 %s42, 7
    %s65 = sand.u32 %s42, 127
    %s66 = sadd.s32 %s64, %s50
    %s67 = smul.u32 %s66, 128
    %s68 = sshra.s32 %s42, 7
    %s69 = sand.u32 %s42, 127
    %s70 = sadd.s32 %s67, %s69
    %s71 = sld [smem:[#allocation4 + %s70]]
    %s72 = sadd.s32 %s71, %s46
    %s73 = ssub.s32 %s28, %s54
    %s74 = ssub.s32 %s63, %s72
    %s75 = sor.u32 %s73, %s74
    %p76 = scmp.eq.s32.totalorder %s75, 0
    %s78 = sadd.s32 %s77, 1
    %s79 = scalar_select %p76, %s77, %s78
    %p82 = pneg %p76
    %p83 = scmp.eq.s32.totalorder %s21, 19
    %p84 = por %p82, %p83
    %p85 = scmp.ne.s32.totalorder %s77, %s80
    %p86 = scmp.eq.s32.totalorder %s21, 0
    %p87 = por %p85, %p86
    %p88 = scmp.ne.s32.totalorder %s77, %s80
    %p89 = scmp.eq.s32.totalorder %s26, 19
    %p90 = por %p88, %p89
    %p91 = scmp.ne.s32.totalorder %s80, %s81
    %p92 = scmp.eq.s32.totalorder %s26, 0
    %p93 = por %p91, %p92
    %p94 = scmp.ne.s32.totalorder %s80, %s81
    %p95 = scmp.eq.s32.totalorder %s27, 19
    %p96 = por %p94, %p95
    %p98 = scmp.ne.s32.totalorder %s81, %s97
    %p99 = scmp.eq.s32.totalorder %s27, 0
    %p100 = por %p98, %p99
    %s102 = sadd.s32 %s101, 1
    %p105 = scmp.eq.s32.totalorder %s21, 19
    %p106 = scmp.ne.s32.totalorder %s101, %s103
    %p107 = scmp.eq.s32.totalorder %s21, 0
    %p108 = por %p106, %p107
    %p109 = scmp.ne.s32.totalorder %s101, %s103
    %p110 = scmp.eq.s32.totalorder %s26, 19
    %p111 = por %p109, %p110
    %p112 = scmp.ne.s32.totalorder %s103, %s104
    %p113 = scmp.eq.s32.totalorder %s26, 0
    %p114 = por %p112, %p113
    %p115 = scmp.ne.s32.totalorder %s103, %s104
    %p116 = scmp.eq.s32.totalorder %s27, 19
    %p117 = por %p115, %p116
    %p119 = scmp.ne.s32.totalorder %s104, %s118
    %p120 = scmp.eq.s32.totalorder %s27, 0
    %p121 = por %p119, %p120
    %s123 = sadd.s32 %s122, 1
    %p126 = scmp.eq.s32.totalorder %s21, 19
    %p127 = scmp.ne.s32.totalorder %s122, %s124
    %p128 = scmp.eq.s32.totalorder %s21, 0
    %p129 = por %p127, %p128
    %p130 = scmp.ne.s32.totalorder %s122, %s124
    %p131 = scmp.eq.s32.totalorder %s26, 19
    %p132 = por %p130, %p131
    %p133 = scmp.ne.s32.totalorder %s124, %s125
    %p134 = scmp.eq.s32.totalorder %s26, 0
    %p135 = por %p133, %p134
    %p136 = scmp.ne.s32.totalorder %s124, %s125
    %p137 = scmp.eq.s32.totalorder %s27, 19
    %p138 = por %p136, %p137
    %p140 = scmp.ne.s32.totalorder %s125, %s139
    %p141 = scmp.eq.s32.totalorder %s27, 0
    %p142 = por %p140, %p141
    %s143 = ssub.s32 %s28, %s54
    %s144 = ssub.s32 %s29, %s50
    %s145 = sor.u32 %s143, %s144
    %s146 = ssub.s32 %s30, %s46
    %s147 = sor.u32 %s145, %s146
    %p148 = scmp.eq.s32.totalorder %s147, 0
    %s150 = sadd.s32 %s149, 1
    %s151 = scalar_select %p148, %s149, %s150
    %p154 = pneg %p148
    %p155 = scmp.eq.s32.totalorder %s21, 19
    %p156 = por %p154, %p155
    %p157 = scmp.ne.s32.totalorder %s149, %s152
    %p158 = scmp.eq.s32.totalorder %s21, 0
    %p159 = por %p157, %p158
    %p160 = scmp.ne.s32.totalorder %s149, %s152
    %p161 = scmp.eq.s32.totalorder %s26, 19
    %p162 = por %p160, %p161
    %p163 = scmp.ne.s32.totalorder %s152, %s153
    %p164 = scmp.eq.s32.totalorder %s26, 0
    %p165 = por %p163, %p164
    %p166 = scmp.ne.s32.totalorder %s152, %s153
    %p167 = scmp.eq.s32.totalorder %s27, 19
    %p168 = por %p166, %p167
    %p170 = scmp.ne.s32.totalorder %s153, %s169
    %p171 = scmp.eq.s32.totalorder %s27, 0
    %p172 = por %p170, %p171
    %p173 = scmp.le.s32.totalorder 1, %s21
    %p174 = scmp.lt.s32.totalorder %s21, 21
    %p175 = pnand %p173, %p174
    %p176 = pneg %p175
    // Predicated region
    $region9: #{tpu_custom_call.1} parent=5 // pred_check
      _
    $region10: #{tpu_custom_call.1} parent=5 // pred_check_branch
      %178 = sbr.rel (%p175) target = $region12
    $region11: #{tpu_custom_call.1} parent=5 // pred_region
      %s179 = ssub.s32 %s21, 1
      // Predicated region
      $region13: #{tpu_custom_call.1} parent=11 // pred_check
        %p180 = pneg %p114
      $region14: #{tpu_custom_call.1} parent=11 // pred_check_branch
        %182 = sbr.rel (%p180) target = $region16
      $region15: #{tpu_custom_call.1} parent=11 // pred_region
        _
      $region16: #{tpu_custom_call.1} parent=11 // pred_fallthru
        _
      // Predicated region
      $region17: #{tpu_custom_call.1} parent=11 // pred_check
        %p183 = pneg %p135
      $region18: #{tpu_custom_call.1} parent=11 // pred_check_branch
        %185 = sbr.rel (%p183) target = $region20
      $region19: #{tpu_custom_call.1} parent=11 // pred_region
        _
      $region20: #{tpu_custom_call.1} parent=11 // pred_fallthru
        _
    $region12: #{tpu_custom_call.1} parent=5 // pred_fallthru
      _
    %p186 = scmp.lt.s32.totalorder %s21, 20
    // Predicated region
    $region21: #{tpu_custom_call.1} parent=5 // pred_check
      %p187 = pneg %p186
    $region22: #{tpu_custom_call.1} parent=5 // pred_check_branch
      %189 = sbr.rel (%p187) target = $region24
    $region23: #{tpu_custom_call.1} parent=5 // pred_region
      // Predicated region
      $region25: #{tpu_custom_call.1} parent=23 // pred_check
        %p190 = pneg %p87
      $region26: #{tpu_custom_call.1} parent=23 // pred_check_branch
        %192 = sbr.rel (%p190) target = $region28
      $region27: #{tpu_custom_call.1} parent=23 // pred_region
        %s193 = sshra.s32 %s31, 7
        %s194 = sand.u32 %s31, 127
        %s195 = sadd.s32 %s193, %s29
        %s196 = smul.u32 %s195, 128
        %s197 = sshra.s32 %s31, 7
        %s198 = sand.u32 %s31, 127
        %s199 = sadd.s32 %s196, %s198
        %s200 = sld [smem:[#allocation4 + %s199]]
        %s201 = sadd.s32 %s200, %s30
        %p202 = scmp.lt.s32.totalorder %s28, 1
        %s203 = scalar_select %p202, %s28, 1
        %p204 = scmp.lt.s32.totalorder %s201, 2
        %s205 = scalar_select %p204, %s201, 2
        %s206 = smul.addr %s205, 20
        %s207 = smul.addr %s203, 60
        %s208 = sadd.s32 %s206, %s207
        %s209 = smul.addr %s208, 8
        %s210 = scalar_lea.vmem %s2, %s209
        %s211 = sshra.s32 %s31, 7
        %s212 = sand.u32 %s31, 127
        %s213 = sadd.s32 %s211, %s29
        %s214 = smul.u32 %s213, 128
        %s215 = sshra.s32 %s31, 7
        %s216 = sand.u32 %s31, 127
        %s217 = sadd.s32 %s214, %s216
        %s218 = sld [smem:[#allocation4 + %s217]]
        %s219 = sadd.s32 %s218, %s30
      $region28: #{tpu_custom_call.1} parent=23 // pred_fallthru
        _
    $region24: #{tpu_custom_call.1} parent=5 // pred_fallthru
      _
    %p220 = scmp.le.s32.totalorder 1, %s21
    %p221 = scmp.lt.s32.totalorder %s21, 21
    %p222 = pnand %p220, %p221
    %p223 = pneg %p222
    // Predicated region
    $region29: #{tpu_custom_call.1} parent=5 // pred_check
      _
    $region30: #{tpu_custom_call.1} parent=5 // pred_check_branch
      %225 = sbr.rel (%p222) target = $region32
    $region31: #{tpu_custom_call.1} parent=5 // pred_region
      %s226 = ssub.s32 %s21, 1
      %s227 = sshra.s32 %s35, 7
      %s228 = sand.u32 %s35, 127
      %s229 = sadd.s32 %s227, %s33
      %s230 = smul.u32 %s229, 128
      %s231 = sshra.s32 %s35, 7
      %s232 = sand.u32 %s35, 127
      %s233 = sadd.s32 %s230, %s232
      %s234 = sld [smem:[#allocation4 + %s233]]
      %s235 = sadd.s32 %s234, %s34
      %p236 = scmp.lt.s32.totalorder %s32, 1
      %s237 = scalar_select %p236, %s32, 1
      %p238 = scmp.lt.s32.totalorder %s235, 2
      %s239 = scalar_select %p238, %s235, 2
      %s240 = smul.addr %s239, 20
      %s241 = smul.addr %s237, 60
      %s242 = sadd.s32 %s240, %s241
      %s243 = smul.addr %s242, 8
      %s244 = scalar_lea.vmem %s2, %s243
      %p245 = pneg %p93
      %p246 = pneg %p90
      %p247 = pneg %p114
      %p248 = pneg %p111
      %p249 = pneg %p135
      %p250 = pneg %p132
      %p251 = pneg %p165
      %p252 = pneg %p162
      %s253 = smul.u32 16, %s34
      %p254 = scmp.lt.s32.totalorder %s32, 1
      %s255 = scalar_select %p254, %s32, 1
      %p256 = scmp.lt.s32.totalorder %s33, 4
      %s257 = scalar_select %p256, %s33, 4
      %p258 = scmp.lt.s32.totalorder %s253, 15
      %s259 = scalar_select %p258, %s253, 15
      %s260 = smul.addr %s257, 16
      %s261 = sadd.s32 %s259, %s260
      %s262 = smul.addr %s255, 80
      %s263 = sadd.s32 %s261, %s262
      %s264 = smul.addr %s263, 8
      %s265 = scalar_lea.vmem %s5, %s264
      %s266 = sshra.s32 %s35, 7
      %s267 = sand.u32 %s35, 127
      %s268 = sadd.s32 %s266, %s33
      %s269 = smul.u32 %s268, 128
      %s270 = sshra.s32 %s35, 7
      %s271 = sand.u32 %s35, 127
      %s272 = sadd.s32 %s269, %s271
      %s273 = sld [smem:[#allocation4 + %s272]]
      %s274 = sadd.s32 %s273, %s34
      %p275 = scmp.lt.s32.totalorder %s32, 1
      %s276 = scalar_select %p275, %s32, 1
      %p277 = scmp.lt.s32.totalorder %s274, 2
      %s278 = scalar_select %p277, %s274, 2
      %s279 = smul.addr %s278, 20
      %s280 = smul.addr %s276, 60
      %s281 = sadd.s32 %s279, %s280
      %s282 = smul.addr %s281, 8
      %s283 = scalar_lea.vmem %s2, %s282
      %s284 = sshra.s32 %s35, 7
      %s285 = sand.u32 %s35, 127
      %s286 = sadd.s32 %s284, %s33
      %s287 = smul.u32 %s286, 128
      %s288 = sshra.s32 %s35, 7
      %s289 = sand.u32 %s35, 127
      %s290 = sadd.s32 %s287, %s289
      %s291 = sld [smem:[#allocation4 + %s290]]
      %s292 = sadd.s32 %s291, %s34
      %s293 = smul.u32 16, %s34
      %p294 = scmp.lt.s32.totalorder %s32, 1
      %s295 = scalar_select %p294, %s32, 1
      %p296 = scmp.lt.s32.totalorder %s33, 4
      %s297 = scalar_select %p296, %s33, 4
      %p298 = scmp.lt.s32.totalorder %s293, 15
      %s299 = scalar_select %p298, %s293, 15
      %s300 = smul.addr %s297, 16
      %s301 = sadd.s32 %s299, %s300
      %s302 = smul.addr %s295, 80
      %s303 = sadd.s32 %s301, %s302
      %s304 = smul.addr %s303, 8
      %s305 = scalar_lea.vmem %s5, %s304
      %s306 = smul.u32 16, %s34
      %p307 = scmp.eq.s32.totalorder %s35, 0
      // Predicated region
      $region33: #{tpu_custom_call.1} parent=31 // pred_check
        %p308 = pneg %p307
      $region34: #{tpu_custom_call.1} parent=31 // pred_check_branch
        %310 = sbr.rel (%p308) target = $region36
      $region35: #{tpu_custom_call.1} parent=31 // pred_region
        %vm311 = vcmask 64512
        %312 = vst.msk [vmem:[#allocation2] sm:$0xff] %vm311, 0.0
        %313 = vst.msk [vmem:[#allocation2 + $0x8] sm:$0xff] %vm311, 0.0
        %314 = vst.msk [vmem:[#allocation2 + $0x10] sm:$0xff] %vm311, 0.0
        %315 = vst.msk [vmem:[#allocation2 + $0x18] sm:$0xff] %vm311, 0.0
        %316 = vst.msk [vmem:[#allocation2 + $0x20] sm:$0xff] %vm311, 0.0
        %317 = vst.msk [vmem:[#allocation2 + $0x28] sm:$0xff] %vm311, 0.0
        %318 = vst.msk [vmem:[#allocation2 + $0x30] sm:$0xff] %vm311, 0.0
        %319 = vst.msk [vmem:[#allocation2 + $0x38] sm:$0xff] %vm311, 0.0
        %320 = vst.msk [vmem:[#allocation2 + $0x40] sm:$0xff] %vm311, 0.0
        %321 = vst.msk [vmem:[#allocation2 + $0x48] sm:$0xff] %vm311, 0.0
        %322 = vst.msk [vmem:[#allocation2 + $0x50] sm:$0xff] %vm311, 0.0
        %323 = vst.msk [vmem:[#allocation2 + $0x58] sm:$0xff] %vm311, 0.0
        %324 = vst.msk [vmem:[#allocation2 + $0x60] sm:$0xff] %vm311, 0.0
        %325 = vst.msk [vmem:[#allocation2 + $0x68] sm:$0xff] %vm311, 0.0
        %326 = vst.msk [vmem:[#allocation2 + $0x70] sm:$0xff] %vm311, 0.0
        %327 = vst.msk [vmem:[#allocation2 + $0x78] sm:$0xff] %vm311, 0.0
      $region36: #{tpu_custom_call.1} parent=31 // pred_fallthru
        _
      %s328 = sshra.s32 %s35, 7
      %s329 = sand.u32 %s35, 127
      %s330 = sadd.s32 %s328, %s33
      %s331 = smul.u32 %s330, 128
      %s332 = sshra.s32 %s35, 7
      %s333 = sand.u32 %s35, 127
      %s334 = sadd.s32 %s331, %s333
      %s335 = sld [smem:[#allocation5 + %s334]]
      %v336 = vld [vmem:[%s283] sm:$0xff]
      %v337 = vld [vmem:[%s283 + $0x10] sm:$0xff]
      %v338 = vld [vmem:[%s283 + $0x20] sm:$0xff]
      %v339 = vld [vmem:[%s283 + $0x30] sm:$0xff]
      %v340 = vld [vmem:[%s283 + $0x40] sm:$0xff]
      %v341 = vld [vmem:[%s283 + $0x50] sm:$0xff]
      %v342 = vld [vmem:[%s283 + $0x60] sm:$0xff]
      %v343 = vld [vmem:[%s283 + $0x70] sm:$0xff]
      %v344 = vld [vmem:[%s283 + $0x1] sm:$0xff]
      %v345 = vld [vmem:[%s283 + $0x11] sm:$0xff]
      %v346 = vld [vmem:[%s283 + $0x21] sm:$0xff]
      %v347 = vld [vmem:[%s283 + $0x31] sm:$0xff]
      %v348 = vld [vmem:[%s283 + $0x41] sm:$0xff]
      %v349 = vld [vmem:[%s283 + $0x51] sm:$0xff]
      %v350 = vld [vmem:[%s283 + $0x61] sm:$0xff]
      %v351 = vld [vmem:[%s283 + $0x71] sm:$0xff]
      %s352 = scalar_lea.vmem %s283, 16
      %v353 = vld [vmem:[%s352] sm:$0xff]
      %v354 = vld [vmem:[%s352 + $0x10] sm:$0xff]
      %v355 = vld [vmem:[%s352 + $0x20] sm:$0xff]
      %v356 = vld [vmem:[%s352 + $0x30] sm:$0xff]
      %v357 = vld [vmem:[%s352 + $0x40] sm:$0xff]
      %v358 = vld [vmem:[%s352 + $0x50] sm:$0xff]
      %v359 = vld [vmem:[%s352 + $0x60] sm:$0xff]
      %v360 = vld [vmem:[%s352 + $0x70] sm:$0xff]
      %v361 = vld [vmem:[%s352 + $0x1] sm:$0xff]
      %v362 = vld [vmem:[%s352 + $0x11] sm:$0xff]
      %v363 = vld [vmem:[%s352 + $0x21] sm:$0xff]
      %v364 = vld [vmem:[%s352 + $0x31] sm:$0xff]
      %v365 = vld [vmem:[%s352 + $0x41] sm:$0xff]
      %v366 = vld [vmem:[%s352 + $0x51] sm:$0xff]
      %v367 = vld [vmem:[%s352 + $0x61] sm:$0xff]
      %v368 = vld [vmem:[%s352 + $0x71] sm:$0xff]
      %377 = vrot.lane.b32.xlu0 %v344, 4
      %v378 = vpop.permute.xlu0 %377
      %379 = vrot.lane.b32.xlu0 %v345, 4
      %v380 = vpop.permute.xlu0 %379
      %381 = vrot.lane.b32.xlu0 %v346, 4
      %v382 = vpop.permute.xlu0 %381
      %383 = vrot.lane.b32.xlu0 %v347, 4
      %v384 = vpop.permute.xlu0 %383
      %385 = vrot.lane.b32.xlu0 %v348, 4
      %v386 = vpop.permute.xlu0 %385
      %387 = vrot.lane.b32.xlu0 %v349, 4
      %v388 = vpop.permute.xlu0 %387
      %389 = vrot.lane.b32.xlu0 %v350, 4
      %v390 = vpop.permute.xlu0 %389
      %391 = vrot.lane.b32.xlu0 %v351, 4
      %v392 = vpop.permute.xlu0 %391
      %409 = vrot.lane.b32.xlu0 %v353, 8
      %v410 = vpop.permute.xlu0 %409
      %411 = vrot.lane.b32.xlu0 %v354, 8
      %v412 = vpop.permute.xlu0 %411
      %413 = vrot.lane.b32.xlu0 %v355, 8
      %v414 = vpop.permute.xlu0 %413
      %415 = vrot.lane.b32.xlu0 %v356, 8
      %v416 = vpop.permute.xlu0 %415
      %417 = vrot.lane.b32.xlu0 %v357, 8
      %v418 = vpop.permute.xlu0 %417
      %419 = vrot.lane.b32.xlu0 %v358, 8
      %v420 = vpop.permute.xlu0 %419
      %421 = vrot.lane.b32.xlu0 %v359, 8
      %v422 = vpop.permute.xlu0 %421
      %423 = vrot.lane.b32.xlu0 %v360, 8
      %v424 = vpop.permute.xlu0 %423
      %441 = vrot.lane.b32.xlu0 %v361, 12
      %v442 = vpop.permute.xlu0 %441
      %443 = vrot.lane.b32.xlu0 %v362, 12
      %v444 = vpop.permute.xlu0 %443
      %445 = vrot.lane.b32.xlu0 %v363, 12
      %v446 = vpop.permute.xlu0 %445
      %447 = vrot.lane.b32.xlu0 %v364, 12
      %v448 = vpop.permute.xlu0 %447
      %449 = vrot.lane.b32.xlu0 %v365, 12
      %v450 = vpop.permute.xlu0 %449
      %451 = vrot.lane.b32.xlu0 %v366, 12
      %v452 = vpop.permute.xlu0 %451
      %453 = vrot.lane.b32.xlu0 %v367, 12
      %v454 = vpop.permute.xlu0 %453
      %455 = vrot.lane.b32.xlu0 %v368, 12
      %v456 = vpop.permute.xlu0 %455
      %vm465 = vcmask 31744
      %v466 = vsel %vm465, %v336, %v378
      %v467 = vsel %vm465, %v337, %v380
      %v468 = vsel %vm465, %v338, %v382
      %v469 = vsel %vm465, %v339, %v384
      %v470 = vsel %vm465, %v340, %v386
      %v471 = vsel %vm465, %v341, %v388
      %v472 = vsel %vm465, %v342, %v390
      %v473 = vsel %vm465, %v343, %v392
      %vm474 = vcmask 64512
      %v475 = vsel %vm474, %v466, %v410
      %v476 = vsel %vm474, %v467, %v412
      %v477 = vsel %vm474, %v468, %v414
      %v478 = vsel %vm474, %v469, %v416
      %v479 = vsel %vm474, %v470, %v418
      %v480 = vsel %vm474, %v471, %v420
      %v481 = vsel %vm474, %v472, %v422
      %v482 = vsel %vm474, %v473, %v424
      %vm483 = vcmask 97280
      %v484 = vsel %vm483, %v475, %v442
      %v485 = vsel %vm483, %v476, %v444
      %v486 = vsel %vm483, %v477, %v446
      %v487 = vsel %vm483, %v478, %v448
      %v488 = vsel %vm483, %v479, %v450
      %v489 = vsel %vm483, %v480, %v452
      %v490 = vsel %vm483, %v481, %v454
      %v491 = vsel %vm483, %v482, %v456
      %s492 = smul.u32 %s335, 4
      %s493 = smul.u32 %s492, 16
      %s494 = scalar_lea.vmem %s3, %s493
      %v495 = vld [vmem:[%s494] sm:$0xff]
      %v496 = vld [vmem:[%s494 + $0x8] sm:$0xff]
      %vm497 = vcmask 130048
      %v499 = vsel %vm497, %v484, 0
      %v502 = vsel %vm497, %v485, 0
      %v505 = vsel %vm497, %v486, 0
      %v508 = vsel %vm497, %v487, 0
      %v511 = vsel %vm497, %v488, 0
      %v514 = vsel %vm497, %v489, 0
      %v517 = vsel %vm497, %v490, 0
      %v520 = vsel %vm497, %v491, 0
      %522 = vmatprep.subr.mxu0 0.0
      %523 = vmatpush1.msra.mxu0 %v495
      %524 = vmatprep.subr.mxu0 0.0
      %525 = vmatpush1.msra.mxu0 %v496
      %526 = vmatprep.subr.mxu0 0.0
      %527 = vmatpush1.msra.mxu0 0.0
      %528 = vmatprep.subr.mxu0 0.0
      %529 = vmatpush1.msra.mxu0 0.0
      %530 = vmatprep.subr.mxu0 0.0
      %531 = vmatpush1.msra.mxu0 0.0
      %532 = vmatprep.subr.mxu0 0.0
      %533 = vmatpush1.msra.mxu0 0.0
      %534 = vmatprep.subr.mxu0 0.0
      %535 = vmatpush1.msra.mxu0 0.0
      %536 = vmatprep.subr.mxu0 0.0
      %537 = vmatpush1.msra.mxu0 0.0
      %538 = vmatprep.subr.mxu0 0.0
      %539 = vmatpush1.msra.mxu0 0.0
      %540 = vmatprep.subr.mxu0 0.0
      %541 = vmatpush1.msra.mxu0 0.0
      %542 = vmatprep.subr.mxu0 0.0
      %543 = vmatpush1.msra.mxu0 0.0
      %544 = vmatprep.subr.mxu0 0.0
      %545 = vmatpush1.msra.mxu0 0.0
      %546 = vmatprep.subr.mxu0 0.0
      %547 = vmatpush1.msra.mxu0 0.0
      %548 = vmatprep.subr.mxu0 0.0
      %549 = vmatpush1.msra.mxu0 0.0
      %550 = vmatprep.subr.mxu0 0.0
      %551 = vmatpush1.msra.mxu0 0.0
      %552 = vmatprep.subr.mxu0 0.0
      %553 = vmatpush1.msra.mxu0 0.0
      %554 = vmatprep.subr.mxu0 0.0
      %555 = vmatpush1.msra.mxu0 0.0
      %556 = vmatprep.subr.mxu0 0.0
      %557 = vmatpush1.msra.mxu0 0.0
      %558 = vmatprep.subr.mxu0 0.0
      %559 = vmatpush1.msra.mxu0 0.0
      %560 = vmatprep.subr.mxu0 0.0
      %561 = vmatpush1.msra.mxu0 0.0
      %562 = vmatprep.subr.mxu0 0.0
      %563 = vmatpush1.msra.mxu0 0.0
      %564 = vmatprep.subr.mxu0 0.0
      %565 = vmatpush1.msra.mxu0 0.0
      %566 = vmatprep.subr.mxu0 0.0
      %567 = vmatpush1.msra.mxu0 0.0
      %568 = vmatprep.subr.mxu0 0.0
      %569 = vmatpush1.msra.mxu0 0.0
      %570 = vmatprep.subr.mxu0 0.0
      %571 = vmatpush1.msra.mxu0 0.0
      %572 = vmatprep.subr.mxu0 0.0
      %573 = vmatpush1.msra.mxu0 0.0
      %574 = vmatprep.subr.mxu0 0.0
      %575 = vmatpush1.msra.mxu0 0.0
      %576 = vmatprep.subr.mxu0 0.0
      %577 = vmatpush1.msra.mxu0 0.0
      %578 = vmatprep.subr.mxu0 0.0
      %579 = vmatpush1.msra.mxu0 0.0
      %580 = vmatprep.subr.mxu0 0.0
      %581 = vmatpush1.msra.mxu0 0.0
      %582 = vmatprep.subr.mxu0 0.0
      %583 = vmatpush1.msra.mxu0 0.0
      %584 = vmatprep.subr.mxu0 0.0
      %585 = vmatpush1.msra.mxu0 0.0
      %586 = vmatprep.mubr.f32.mxu0 0.0
      %587 = vmatmul.mubr.f32.gmra.mrb[0].mxu0 %v499
      %v588 = vpop.f32.mrb[0].mxu0
      %v589 = vadd.f32 0.0, %v588
      %v590 = vpop.f32.mrb[0].mxu0
      %591 = vmatprep.mubr.f32.mxu0 0.0
      %592 = vmatmul.mubr.f32.gmra.mrb[0].mxu0 %v502
      %v593 = vpop.f32.mrb[0].mxu0
      %v594 = vadd.f32 0.0, %v593
      %v595 = vpop.f32.mrb[0].mxu0
      %596 = vmatprep.mubr.f32.mxu0 0.0
      %597 = vmatmul.mubr.f32.gmra.mrb[0].mxu0 %v505
      %v598 = vpop.f32.mrb[0].mxu0
      %v599 = vadd.f32 0.0, %v598
      %v600 = vpop.f32.mrb[0].mxu0
      %601 = vmatprep.mubr.f32.mxu0 0.0
      %602 = vmatmul.mubr.f32.gmra.mrb[0].mxu0 %v508
      %v603 = vpop.f32.mrb[0].mxu0
      %v604 = vadd.f32 0.0, %v603
      %v605 = vpop.f32.mrb[0].mxu0
      %606 = vmatprep.mubr.f32.mxu0 0.0
      %607 = vmatmul.mubr.f32.gmra.mrb[0].mxu0 %v511
      %v608 = vpop.f32.mrb[0].mxu0
      %v609 = vadd.f32 0.0, %v608
      %v610 = vpop.f32.mrb[0].mxu0
      %611 = vmatprep.mubr.f32.mxu0 0.0
      %612 = vmatmul.mubr.f32.gmra.mrb[0].mxu0 %v514
      %v613 = vpop.f32.mrb[0].mxu0
      %v614 = vadd.f32 0.0, %v613
      %v615 = vpop.f32.mrb[0].mxu0
      %616 = vmatprep.mubr.f32.mxu0 0.0
      %617 = vmatmul.mubr.f32.gmra.mrb[0].mxu0 %v517
      %v618 = vpop.f32.mrb[0].mxu0
      %v619 = vadd.f32 0.0, %v618
      %v620 = vpop.f32.mrb[0].mxu0
      %621 = vmatprep.mubr.f32.mxu0 0.0
      %622 = vmatmul.mubr.f32.gmra.mrb[0].mxu0 %v520
      %v623 = vpop.f32.mrb[0].mxu0
      %v624 = vadd.f32 0.0, %v623
      %v625 = vpop.f32.mrb[0].mxu0
      %626 = vdwg.mxu0
      %v627 = vld [vmem:[#allocation2] sm:$0xff]
      %v628 = vld [vmem:[#allocation2 + $0x8] sm:$0xff]
      %v629 = vld [vmem:[#allocation2 + $0x10] sm:$0xff]
      %v630 = vld [vmem:[#allocation2 + $0x18] sm:$0xff]
      %v631 = vld [vmem:[#allocation2 + $0x20] sm:$0xff]
      %v632 = vld [vmem:[#allocation2 + $0x28] sm:$0xff]
      %v633 = vld [vmem:[#allocation2 + $0x30] sm:$0xff]
      %v634 = vld [vmem:[#allocation2 + $0x38] sm:$0xff]
      %v635 = vadd.f32 %v627, %v589
      %v636 = vadd.f32 %v628, %v594
      %v637 = vadd.f32 %v629, %v599
      %v638 = vadd.f32 %v630, %v604
      %v639 = vadd.f32 %v631, %v609
      %v640 = vadd.f32 %v632, %v614
      %v641 = vadd.f32 %v633, %v619
      %v642 = vadd.f32 %v634, %v624
      %643 = vst.msk [vmem:[#allocation2] sm:$0xff] %vm465, %v635
      %644 = vst.msk [vmem:[#allocation2 + $0x8] sm:$0xff] %vm465, %v636
      %645 = vst.msk [vmem:[#allocation2 + $0x10] sm:$0xff] %vm465, %v637
      %646 = vst.msk [vmem:[#allocation2 + $0x18] sm:$0xff] %vm465, %v638
      %647 = vst.msk [vmem:[#allocation2 + $0x20] sm:$0xff] %vm465, %v639
      %648 = vst.msk [vmem:[#allocation2 + $0x28] sm:$0xff] %vm465, %v640
      %649 = vst.msk [vmem:[#allocation2 + $0x30] sm:$0xff] %vm465, %v641
      %650 = vst.msk [vmem:[#allocation2 + $0x38] sm:$0xff] %vm465, %v642
      %v651 = vld [vmem:[%s283 + $0x2] sm:$0xff]
      %v652 = vld [vmem:[%s283 + $0x12] sm:$0xff]
      %v653 = vld [vmem:[%s283 + $0x22] sm:$0xff]
      %v654 = vld [vmem:[%s283 + $0x32] sm:$0xff]
      %v655 = vld [vmem:[%s283 + $0x42] sm:$0xff]
      %v656 = vld [vmem:[%s283 + $0x52] sm:$0xff]
      %v657 = vld [vmem:[%s283 + $0x62] sm:$0xff]
      %v658 = vld [vmem:[%s283 + $0x72] sm:$0xff]
      %v659 = vld [vmem:[%s352 + $0x2] sm:$0xff]
      %v660 = vld [vmem:[%s352 + $0x12] sm:$0xff]
      %v661 = vld [vmem:[%s352 + $0x22] sm:$0xff]
      %v662 = vld [vmem:[%s352 + $0x32] sm:$0xff]
      %v663 = vld [vmem:[%s352 + $0x42] sm:$0xff]
      %v664 = vld [vmem:[%s352 + $0x52] sm:$0xff]
      %v665 = vld [vmem:[%s352 + $0x62] sm:$0xff]
      %v666 = vld [vmem:[%s352 + $0x72] sm:$0xff]
      %675 = vrot.lane.b32.xlu0 %v651, 4
      %v676 = vpop.permute.xlu0 %675
      %677 = vrot.lane.b32.xlu0 %v652, 4
      %v678 = vpop.permute.xlu0 %677
      %679 = vrot.lane.b32.xlu0 %v653, 4
      %v680 = vpop.permute.xlu0 %679
      %681 = vrot.lane.b32.xlu0 %v654, 4
      %v682 = vpop.permute.xlu0 %681
      %683 = vrot.lane.b32.xlu0 %v655, 4
      %v684 = vpop.permute.xlu0 %683
      %685 = vrot.lane.b32.xlu0 %v656, 4
      %v686 = vpop.permute.xlu0 %685
      %687 = vrot.lane.b32.xlu0 %v657, 4
      %v688 = vpop.permute.xlu0 %687
      %689 = vrot.lane.b32.xlu0 %v658, 4
      %v690 = vpop.permute.xlu0 %689
      %699 = vrot.lane.b32.xlu0 %v361, 8
      %v700 = vpop.permute.xlu0 %699
      %701 = vrot.lane.b32.xlu0 %v362, 8
      %v702 = vpop.permute.xlu0 %701
      %703 = vrot.lane.b32.xlu0 %v363, 8
      %v704 = vpop.permute.xlu0 %703
      %705 = vrot.lane.b32.xlu0 %v364, 8
      %v706 = vpop.permute.xlu0 %705
      %707 = vrot.lane.b32.xlu0 %v365, 8
      %v708 = vpop.permute.xlu0 %707
      %709 = vrot.lane.b32.xlu0 %v366, 8
      %v710 = vpop.permute.xlu0 %709
      %711 = vrot.lane.b32.xlu0 %v367, 8
      %v712 = vpop.permute.xlu0 %711
      %713 = vrot.lane.b32.xlu0 %v368, 8
      %v714 = vpop.permute.xlu0 %713
      %731 = vrot.lane.b32.xlu0 %v659, 12
      %v732 = vpop.permute.xlu0 %731
      %733 = vrot.lane.b32.xlu0 %v660, 12
      %v734 = vpop.permute.xlu0 %733
      %735 = vrot.lane.b32.xlu0 %v661, 12
      %v736 = vpop.permute.xlu0 %735
      %737 = vrot.lane.b32.xlu0 %v662, 12
      %v738 = vpop.permute.xlu0 %737
      %739 = vrot.lane.b32.xlu0 %v663, 12
      %v740 = vpop.permute.xlu0 %739
      %741 = vrot.lane.b32.xlu0 %v664, 12
      %v742 = vpop.permute.xlu0 %741
      %743 = vrot.lane.b32.xlu0 %v665, 12
      %v744 = vpop.permute.xlu0 %743
      %745 = vrot.lane.b32.xlu0 %v666, 12
      %v746 = vpop.permute.xlu0 %745
      %v755 = vsel %vm465, %v344, %v676
      %v756 = vsel %vm465, %v345, %v678
      %v757 = vsel %vm465, %v346, %v680
      %v758 = vsel %vm465, %v347, %v682
      %v759 = vsel %vm465, %v348, %v684
      %v760 = vsel %vm465, %v349, %v686
      %v761 = vsel %vm465, %v350, %v688
      %v762 = vsel %vm465, %v351, %v690
      %v763 = vsel %vm474, %v755, %v700
      %v764 = vsel %vm474, %v756, %v702
      %v765 = vsel %vm474, %v757, %v704
      %v766 = vsel %vm474, %v758, %v706
      %v767 = vsel %vm474, %v759, %v708
      %v768 = vsel %vm474, %v760, %v710
      %v769 = vsel %vm474, %v761, %v712
      %v770 = vsel %vm474, %v762, %v714
      %v771 = vsel %vm483, %v763, %v732
      %v772 = vsel %vm483, %v764, %v734
      %v773 = vsel %vm483, %v765, %v736
      %v774 = vsel %vm483, %v766, %v738
      %v775 = vsel %vm483, %v767, %v740
      %v776 = vsel %vm483, %v768, %v742
      %v777 = vsel %vm483, %v769, %v744
      %v778 = vsel %vm483, %v770, %v746
      %s779 = sadd.s32 %s492, 1
      %s780 = smul.u32 %s779, 16
      %s781 = scalar_lea.vmem %s3, %s780
      %v782 = vld [vmem:[%s781] sm:$0xff]
      %v783 = vld [vmem:[%s781 + $0x8] sm:$0xff]
      %v785 = vsel %vm497, %v771, 0
      %v788 = vsel %vm497, %v772, 0
      %v791 = vsel %vm497, %v773, 0
      %v794 = vsel %vm497, %v774, 0
      %v797 = vsel %vm497, %v775, 0
      %v800 = vsel %vm497, %v776, 0
      %v803 = vsel %vm497, %v777, 0
      %v806 = vsel %vm497, %v778, 0
      %808 = vmatprep.subr.mxu0 0.0
      %809 = vmatpush1.msra.mxu0 %v782
      %810 = vmatprep.subr.mxu0 0.0
      %811 = vmatpush1.msra.mxu0 %v783
      %812 = vmatprep.subr.mxu0 0.0
      %813 = vmatpush1.msra.mxu0 0.0
      %814 = vmatprep.subr.mxu0 0.0
      %815 = vmatpush1.msra.mxu0 0.0
      %816 = vmatprep.subr.mxu0 0.0
      %817 = vmatpush1.msra.mxu0 0.0
      %818 = vmatprep.subr.mxu0 0.0
      %819 = vmatpush1.msra.mxu0 0.0
      %820 = vmatprep.subr.mxu0 0.0
      %821 = vmatpush1.msra.mxu0 0.0
      %822 = vmatprep.subr.mxu0 0.0
      %823 = vmatpush1.msra.mxu0 0.0
      %824 = vmatprep.subr.mxu0 0.0
      %825 = vmatpush1.msra.mxu0 0.0
      %826 = vmatprep.subr.mxu0 0.0
      %827 = vmatpush1.msra.mxu0 0.0
      %828 = vmatprep.subr.mxu0 0.0
      %829 = vmatpush1.msra.mxu0 0.0
      %830 = vmatprep.subr.mxu0 0.0
      %831 = vmatpush1.msra.mxu0 0.0
      %832 = vmatprep.subr.mxu0 0.0
      %833 = vmatpush1.msra.mxu0 0.0
      %834 = vmatprep.subr.mxu0 0.0
      %835 = vmatpush1.msra.mxu0 0.0
      %836 = vmatprep.subr.mxu0 0.0
      %837 = vmatpush1.msra.mxu0 0.0
      %838 = vmatprep.subr.mxu0 0.0
      %839 = vmatpush1.msra.mxu0 0.0
      %840 = vmatprep.subr.mxu0 0.0
      %841 = vmatpush1.msra.mxu0 0.0
      %842 = vmatprep.subr.mxu0 0.0
      %843 = vmatpush1.msra.mxu0 0.0
      %844 = vmatprep.subr.mxu0 0.0
      %845 = vmatpush1.msra.mxu0 0.0
      %846 = vmatprep.subr.mxu0 0.0
      %847 = vmatpush1.msra.mxu0 0.0
      %848 = vmatprep.subr.mxu0 0.0
      %849 = vmatpush1.msra.mxu0 0.0
      %850 = vmatprep.subr.mxu0 0.0
      %851 = vmatpush1.msra.mxu0 0.0
      %852 = vmatprep.subr.mxu0 0.0
      %853 = vmatpush1.msra.mxu0 0.0
      %854 = vmatprep.subr.mxu0 0.0
      %855 = vmatpush1.msra.mxu0 0.0
      %856 = vmatprep.subr.mxu0 0.0
      %857 = vmatpush1.msra.mxu0 0.0
      %858 = vmatprep.subr.mxu0 0.0
      %859 = vmatpush1.msra.mxu0 0.0
      %860 = vmatprep.subr.mxu0 0.0
      %861 = vmatpush1.msra.mxu0 0.0
      %862 = vmatprep.subr.mxu0 0.0
      %863 = vmatpush1.msra.mxu0 0.0
      %864 = vmatprep.subr.mxu0 0.0
      %865 = vmatpush1.msra.mxu0 0.0
      %866 = vmatprep.subr.mxu0 0.0
      %867 = vmatpush1.msra.mxu0 0.0
      %868 = vmatprep.subr.mxu0 0.0
      %869 = vmatpush1.msra.mxu0 0.0
      %870 = vmatprep.subr.mxu0 0.0
      %871 = vmatpush1.msra.mxu0 0.0
      %872 = vmatprep.mubr.f32.mxu0 0.0
      %873 = vmatmul.mubr.f32.gmra.mrb[0].mxu0 %v785
      %v874 = vpop.f32.mrb[0].mxu0
      %v875 = vadd.f32 0.0, %v874
      %v876 = vpop.f32.mrb[0].mxu0
      %877 = vmatprep.mubr.f32.mxu0 0.0
      %878 = vmatmul.mubr.f32.gmra.mrb[0].mxu0 %v788
      %v879 = vpop.f32.mrb[0].mxu0
      %v880 = vadd.f32 0.0, %v879
      %v881 = vpop.f32.mrb[0].mxu0
      %882 = vmatprep.mubr.f32.mxu0 0.0
      %883 = vmatmul.mubr.f32.gmra.mrb[0].mxu0 %v791
      %v884 = vpop.f32.mrb[0].mxu0
      %v885 = vadd.f32 0.0, %v884
      %v886 = vpop.f32.mrb[0].mxu0
      %887 = vmatprep.mubr.f32.mxu0 0.0
      %888 = vmatmul.mubr.f32.gmra.mrb[0].mxu0 %v794
      %v889 = vpop.f32.mrb[0].mxu0
      %v890 = vadd.f32 0.0, %v889
      %v891 = vpop.f32.mrb[0].mxu0
      %892 = vmatprep.mubr.f32.mxu0 0.0
      %893 = vmatmul.mubr.f32.gmra.mrb[0].mxu0 %v797
      %v894 = vpop.f32.mrb[0].mxu0
      %v895 = vadd.f32 0.0, %v894
      %v896 = vpop.f32.mrb[0].mxu0
      %897 = vmatprep.mubr.f32.mxu0 0.0
      %898 = vmatmul.mubr.f32.gmra.mrb[0].mxu0 %v800
      %v899 = vpop.f32.mrb[0].mxu0
      %v900 = vadd.f32 0.0, %v899
      %v901 = vpop.f32.mrb[0].mxu0
      %902 = vmatprep.mubr.f32.mxu0 0.0
      %903 = vmatmul.mubr.f32.gmra.mrb[0].mxu0 %v803
      %v904 = vpop.f32.mrb[0].mxu0
      %v905 = vadd.f32 0.0, %v904
      %v906 = vpop.f32.mrb[0].mxu0
      %907 = vmatprep.mubr.f32.mxu0 0.0
      %908 = vmatmul.mubr.f32.gmra.mrb[0].mxu0 %v806
      %v909 = vpop.f32.mrb[0].mxu0
      %v910 = vadd.f32 0.0, %v909
      %v911 = vpop.f32.mrb[0].mxu0
      %912 = vdwg.mxu0
      %v913 = vld [vmem:[#allocation2] sm:$0xff]
      %v914 = vld [vmem:[#allocation2 + $0x8] sm:$0xff]
      %v915 = vld [vmem:[#allocation2 + $0x10] sm:$0xff]
      %v916 = vld [vmem:[#allocation2 + $0x18] sm:$0xff]
      %v917 = vld [vmem:[#allocation2 + $0x20] sm:$0xff]
      %v918 = vld [vmem:[#allocation2 + $0x28] sm:$0xff]
      %v919 = vld [vmem:[#allocation2 + $0x30] sm:$0xff]
      %v920 = vld [vmem:[#allocation2 + $0x38] sm:$0xff]
      %929 = vrot.lane.b32.xlu0 %v875, 4
      %v930 = vpop.permute.xlu0 %929
      %931 = vrot.lane.b32.xlu0 %v880, 4
      %v932 = vpop.permute.xlu0 %931
      %933 = vrot.lane.b32.xlu0 %v885, 4
      %v934 = vpop.permute.xlu0 %933
      %935 = vrot.lane.b32.xlu0 %v890, 4
      %v936 = vpop.permute.xlu0 %935
      %937 = vrot.lane.b32.xlu0 %v895, 4
      %v938 = vpop.permute.xlu0 %937
      %939 = vrot.lane.b32.xlu0 %v900, 4
      %v940 = vpop.permute.xlu0 %939
      %941 = vrot.lane.b32.xlu0 %v905, 4
      %v942 = vpop.permute.xlu0 %941
      %943 = vrot.lane.b32.xlu0 %v910, 4
      %v944 = vpop.permute.xlu0 %943
      %v953 = vadd.f32 %v913, %v930
      %v954 = vadd.f32 %v914, %v932
      %v955 = vadd.f32 %v915, %v934
      %v956 = vadd.f32 %v916, %v936
      %v957 = vadd.f32 %v917, %v938
      %v958 = vadd.f32 %v918, %v940
      %v959 = vadd.f32 %v919, %v942
      %v960 = vadd.f32 %v920, %v944
      %vm961 = vcmask 64544
      %962 = vst.msk [vmem:[#allocation2] sm:$0xff] %vm961, %v953
      %963 = vst.msk [vmem:[#allocation2 + $0x8] sm:$0xff] %vm961, %v954
      %964 = vst.msk [vmem:[#allocation2 + $0x10] sm:$0xff] %vm961, %v955
      %965 = vst.msk [vmem:[#allocation2 + $0x18] sm:$0xff] %vm961, %v956
      %966 = vst.msk [vmem:[#allocation2 + $0x20] sm:$0xff] %vm961, %v957
      %967 = vst.msk [vmem:[#allocation2 + $0x28] sm:$0xff] %vm961, %v958
      %968 = vst.msk [vmem:[#allocation2 + $0x30] sm:$0xff] %vm961, %v959
      %969 = vst.msk [vmem:[#allocation2 + $0x38] sm:$0xff] %vm961, %v960
      %s970 = scalar_lea.vmem %s283, 32
      %v971 = vld [vmem:[%s970] sm:$0xff]
      %v972 = vld [vmem:[%s970 + $0x10] sm:$0xff]
      %v973 = vld [vmem:[%s970 + $0x20] sm:$0xff]
      %v974 = vld [vmem:[%s970 + $0x30] sm:$0xff]
      %v975 = vld [vmem:[%s970 + $0x40] sm:$0xff]
      %v976 = vld [vmem:[%s970 + $0x50] sm:$0xff]
      %v977 = vld [vmem:[%s970 + $0x60] sm:$0xff]
      %v978 = vld [vmem:[%s970 + $0x70] sm:$0xff]
      %v979 = vld [vmem:[%s970 + $0x1] sm:$0xff]
      %v980 = vld [vmem:[%s970 + $0x11] sm:$0xff]
      %v981 = vld [vmem:[%s970 + $0x21] sm:$0xff]
      %v982 = vld [vmem:[%s970 + $0x31] sm:$0xff]
      %v983 = vld [vmem:[%s970 + $0x41] sm:$0xff]
      %v984 = vld [vmem:[%s970 + $0x51] sm:$0xff]
      %v985 = vld [vmem:[%s970 + $0x61] sm:$0xff]
      %v986 = vld [vmem:[%s970 + $0x71] sm:$0xff]
      %987 = vrot.lane.b32.xlu0 %v361, 4
      %v988 = vpop.permute.xlu0 %987
      %989 = vrot.lane.b32.xlu0 %v362, 4
      %v990 = vpop.permute.xlu0 %989
      %991 = vrot.lane.b32.xlu0 %v363, 4
      %v992 = vpop.permute.xlu0 %991
      %993 = vrot.lane.b32.xlu0 %v364, 4
      %v994 = vpop.permute.xlu0 %993
      %995 = vrot.lane.b32.xlu0 %v365, 4
      %v996 = vpop.permute.xlu0 %995
      %997 = vrot.lane.b32.xlu0 %v366, 4
      %v998 = vpop.permute.xlu0 %997
      %999 = vrot.lane.b32.xlu0 %v367, 4
      %v1000 = vpop.permute.xlu0 %999
      %1001 = vrot.lane.b32.xlu0 %v368, 4
      %v1002 = vpop.permute.xlu0 %1001
      %1019 = vrot.lane.b32.xlu0 %v971, 8
      %v1020 = vpop.permute.xlu0 %1019
      %1021 = vrot.lane.b32.xlu0 %v972, 8
      %v1022 = vpop.permute.xlu0 %1021
      %1023 = vrot.lane.b32.xlu0 %v973, 8
      %v1024 = vpop.permute.xlu0 %1023
      %1025 = vrot.lane.b32.xlu0 %v974, 8
      %v1026 = vpop.permute.xlu0 %1025
      %1027 = vrot.lane.b32.xlu0 %v975, 8
      %v1028 = vpop.permute.xlu0 %1027
      %1029 = vrot.lane.b32.xlu0 %v976, 8
      %v1030 = vpop.permute.xlu0 %1029
      %1031 = vrot.lane.b32.xlu0 %v977, 8
      %v1032 = vpop.permute.xlu0 %1031
      %1033 = vrot.lane.b32.xlu0 %v978, 8
      %v1034 = vpop.permute.xlu0 %1033
      %1051 = vrot.lane.b32.xlu0 %v979, 12
      %v1052 = vpop.permute.xlu0 %1051
      %1053 = vrot.lane.b32.xlu0 %v980, 12
      %v1054 = vpop.permute.xlu0 %1053
      %1055 = vrot.lane.b32.xlu0 %v981, 12
      %v1056 = vpop.permute.xlu0 %1055
      %1057 = vrot.lane.b32.xlu0 %v982, 12
      %v1058 = vpop.permute.xlu0 %1057
      %1059 = vrot.lane.b32.xlu0 %v983, 12
      %v1060 = vpop.permute.xlu0 %1059
      %1061 = vrot.lane.b32.xlu0 %v984, 12
      %v1062 = vpop.permute.xlu0 %1061
      %1063 = vrot.lane.b32.xlu0 %v985, 12
      %v1064 = vpop.permute.xlu0 %1063
      %1065 = vrot.lane.b32.xlu0 %v986, 12
      %v1066 = vpop.permute.xlu0 %1065
      %v1075 = vsel %vm465, %v353, %v988
      %v1076 = vsel %vm465, %v354, %v990
      %v1077 = vsel %vm465, %v355, %v992
      %v1078 = vsel %vm465, %v356, %v994
      %v1079 = vsel %vm465, %v357, %v996
      %v1080 = vsel %vm465, %v358, %v998
      %v1081 = vsel %vm465, %v359, %v1000
      %v1082 = vsel %vm465, %v360, %v1002
      %v1083 = vsel %vm474, %v1075, %v1020
      %v1084 = vsel %vm474, %v1076, %v1022
      %v1085 = vsel %vm474, %v1077, %v1024
      %v1086 = vsel %vm474, %v1078, %v1026
      %v1087 = vsel %vm474, %v1079, %v1028
      %v1088 = vsel %vm474, %v1080, %v1030
      %v1089 = vsel %vm474, %v1081, %v1032
      %v1090 = vsel %vm474, %v1082, %v1034
      %v1091 = vsel %vm483, %v1083, %v1052
      %v1092 = vsel %vm483, %v1084, %v1054
      %v1093 = vsel %vm483, %v1085, %v1056
      %v1094 = vsel %vm483, %v1086, %v1058
      %v1095 = vsel %vm483, %v1087, %v1060
      %v1096 = vsel %vm483, %v1088, %v1062
      %v1097 = vsel %vm483, %v1089, %v1064
      %v1098 = vsel %vm483, %v1090, %v1066
      %s1099 = sadd.s32 %s492, 2
      %s1100 = smul.u32 %s1099, 16
      %s1101 = scalar_lea.vmem %s3, %s1100
      %v1102 = vld [vmem:[%s1101] sm:$0xff]
      %v1103 = vld [vmem:[%s1101 + $0x8] sm:$0xff]
      %v1105 = vsel %vm497, %v1091, 0
      %v1108 = vsel %vm497, %v1092, 0
      %v1111 = vsel %vm497, %v1093, 0
      %v1114 = vsel %vm497, %v1094, 0
      %v1117 = vsel %vm497, %v1095, 0
      %v1120 = vsel %vm497, %v1096, 0
      %v1123 = vsel %vm497, %v1097, 0
      %v1126 = vsel %vm497, %v1098, 0
      %1128 = vmatprep.subr.mxu0 0.0
      %1129 = vmatpush1.msra.mxu0 %v1102
      %1130 = vmatprep.subr.mxu0 0.0
      %1131 = vmatpush1.msra.mxu0 %v1103
      %1132 = vmatprep.subr.mxu0 0.0
      %1133 = vmatpush1.msra.mxu0 0.0
      %1134 = vmatprep.subr.mxu0 0.0
      %1135 = vmatpush1.msra.mxu0 0.0
      %1136 = vmatprep.subr.mxu0 0.0
      %1137 = vmatpush1.msra.mxu0 0.0
      %1138 = vmatprep.subr.mxu0 0.0
      %1139 = vmatpush1.msra.mxu0 0.0
      %1140 = vmatprep.subr.mxu0 0.0
      %1141 = vmatpush1.msra.mxu0 0.0
      %1142 = vmatprep.subr.mxu0 0.0
      %1143 = vmatpush1.msra.mxu0 0.0
      %1144 = vmatprep.subr.mxu0 0.0
      %1145 = vmatpush1.msra.mxu0 0.0
      %1146 = vmatprep.subr.mxu0 0.0
      %1147 = vmatpush1.msra.mxu0 0.0
      %1148 = vmatprep.subr.mxu0 0.0
      %1149 = vmatpush1.msra.mxu0 0.0
      %1150 = vmatprep.subr.mxu0 0.0
      %1151 = vmatpush1.msra.mxu0 0.0
      %1152 = vmatprep.subr.mxu0 0.0
      %1153 = vmatpush1.msra.mxu0 0.0
      %1154 = vmatprep.subr.mxu0 0.0
      %1155 = vmatpush1.msra.mxu0 0.0
      %1156 = vmatprep.subr.mxu0 0.0
      %1157 = vmatpush1.msra.mxu0 0.0
      %1158 = vmatprep.subr.mxu0 0.0
      %1159 = vmatpush1.msra.mxu0 0.0
      %1160 = vmatprep.subr.mxu0 0.0
      %1161 = vmatpush1.msra.mxu0 0.0
      %1162 = vmatprep.subr.mxu0 0.0
      %1163 = vmatpush1.msra.mxu0 0.0
      %1164 = vmatprep.subr.mxu0 0.0
      %1165 = vmatpush1.msra.mxu0 0.0
      %1166 = vmatprep.subr.mxu0 0.0
      %1167 = vmatpush1.msra.mxu0 0.0
      %1168 = vmatprep.subr.mxu0 0.0
      %1169 = vmatpush1.msra.mxu0 0.0
      %1170 = vmatprep.subr.mxu0 0.0
      %1171 = vmatpush1.msra.mxu0 0.0
      %1172 = vmatprep.subr.mxu0 0.0
      %1173 = vmatpush1.msra.mxu0 0.0
      %1174 = vmatprep.subr.mxu0 0.0
      %1175 = vmatpush1.msra.mxu0 0.0
      %1176 = vmatprep.subr.mxu0 0.0
      %1177 = vmatpush1.msra.mxu0 0.0
      %1178 = vmatprep.subr.mxu0 0.0
      %1179 = vmatpush1.msra.mxu0 0.0
      %1180 = vmatprep.subr.mxu0 0.0
      %1181 = vmatpush1.msra.mxu0 0.0
      %1182 = vmatprep.subr.mxu0 0.0
      %1183 = vmatpush1.msra.mxu0 0.0
      %1184 = vmatprep.subr.mxu0 0.0
      %1185 = vmatpush1.msra.mxu0 0.0
      %1186 = vmatprep.subr.mxu0 0.0
      %1187 = vmatpush1.msra.mxu0 0.0
      %1188 = vmatprep.subr.mxu0 0.0
      %1189 = vmatpush1.msra.mxu0 0.0
      %1190 = vmatprep.subr.mxu0 0.0
      %1191 = vmatpush1.msra.mxu0 0.0
      %1192 = vmatprep.mubr.f32.mxu0 0.0
      %1193 = vmatmul.mubr.f32.gmra.mrb[0].mxu0 %v1105
      %v1194 = vpop.f32.mrb[0].mxu0
      %v1195 = vadd.f32 0.0, %v1194
      %v1196 = vpop.f32.mrb[0].mxu0
      %1197 = vmatprep.mubr.f32.mxu0 0.0
      %1198 = vmatmul.mubr.f32.gmra.mrb[0].mxu0 %v1108
      %v1199 = vpop.f32.mrb[0].mxu0
      %v1200 = vadd.f32 0.0, %v1199
      %v1201 = vpop.f32.mrb[0].mxu0
      %1202 = vmatprep.mubr.f32.mxu0 0.0
      %1203 = vmatmul.mubr.f32.gmra.mrb[0].mxu0 %v1111
      %v1204 = vpop.f32.mrb[0].mxu0
      %v1205 = vadd.f32 0.0, %v1204
      %v1206 = vpop.f32.mrb[0].mxu0
      %1207 = vmatprep.mubr.f32.mxu0 0.0
      %1208 = vmatmul.mubr.f32.gmra.mrb[0].mxu0 %v1114
      %v1209 = vpop.f32.mrb[0].mxu0
      %v1210 = vadd.f32 0.0, %v1209
      %v1211 = vpop.f32.mrb[0].mxu0
      %1212 = vmatprep.mubr.f32.mxu0 0.0
      %1213 = vmatmul.mubr.f32.gmra.mrb[0].mxu0 %v1117
      %v1214 = vpop.f32.mrb[0].mxu0
      %v1215 = vadd.f32 0.0, %v1214
      %v1216 = vpop.f32.mrb[0].mxu0
      %1217 = vmatprep.mubr.f32.mxu0 0.0
      %1218 = vmatmul.mubr.f32.gmra.mrb[0].mxu0 %v1120
      %v1219 = vpop.f32.mrb[0].mxu0
      %v1220 = vadd.f32 0.0, %v1219
      %v1221 = vpop.f32.mrb[0].mxu0
      %1222 = vmatprep.mubr.f32.mxu0 0.0
      %1223 = vmatmul.mubr.f32.gmra.mrb[0].mxu0 %v1123
      %v1224 = vpop.f32.mrb[0].mxu0
      %v1225 = vadd.f32 0.0, %v1224
      %v1226 = vpop.f32.mrb[0].mxu0
      %1227 = vmatprep.mubr.f32.mxu0 0.0
      %1228 = vmatmul.mubr.f32.gmra.mrb[0].mxu0 %v1126
      %v1229 = vpop.f32.mrb[0].mxu0
      %v1230 = vadd.f32 0.0, %v1229
      %v1231 = vpop.f32.mrb[0].mxu0
      %1232 = vdwg.mxu0
      %s1233 = scalar_lea.vmem [#allocation2], 64
      %v1234 = vld [vmem:[%s1233] sm:$0xff]
      %v1235 = vld [vmem:[%s1233 + $0x8] sm:$0xff]
      %v1236 = vld [vmem:[%s1233 + $0x10] sm:$0xff]
      %v1237 = vld [vmem:[%s1233 + $0x18] sm:$0xff]
      %v1238 = vld [vmem:[%s1233 + $0x20] sm:$0xff]
      %v1239 = vld [vmem:[%s1233 + $0x28] sm:$0xff]
      %v1240 = vld [vmem:[%s1233 + $0x30] sm:$0xff]
      %v1241 = vld [vmem:[%s1233 + $0x38] sm:$0xff]
      %v1242 = vadd.f32 %v1234, %v1195
      %v1243 = vadd.f32 %v1235, %v1200
      %v1244 = vadd.f32 %v1236, %v1205
      %v1245 = vadd.f32 %v1237, %v1210
      %v1246 = vadd.f32 %v1238, %v1215
      %v1247 = vadd.f32 %v1239, %v1220
      %v1248 = vadd.f32 %v1240, %v1225
      %v1249 = vadd.f32 %v1241, %v1230
      %1250 = vst.msk [vmem:[%s1233] sm:$0xff] %vm465, %v1242
      %1251 = vst.msk [vmem:[%s1233 + $0x8] sm:$0xff] %vm465, %v1243
      %1252 = vst.msk [vmem:[%s1233 + $0x10] sm:$0xff] %vm465, %v1244
      %1253 = vst.msk [vmem:[%s1233 + $0x18] sm:$0xff] %vm465, %v1245
      %1254 = vst.msk [vmem:[%s1233 + $0x20] sm:$0xff] %vm465, %v1246
      %1255 = vst.msk [vmem:[%s1233 + $0x28] sm:$0xff] %vm465, %v1247
      %1256 = vst.msk [vmem:[%s1233 + $0x30] sm:$0xff] %vm465, %v1248
      %1257 = vst.msk [vmem:[%s1233 + $0x38] sm:$0xff] %vm465, %v1249
      %v1258 = vld [vmem:[%s970 + $0x2] sm:$0xff]
      %v1259 = vld [vmem:[%s970 + $0x12] sm:$0xff]
      %v1260 = vld [vmem:[%s970 + $0x22] sm:$0xff]
      %v1261 = vld [vmem:[%s970 + $0x32] sm:$0xff]
      %v1262 = vld [vmem:[%s970 + $0x42] sm:$0xff]
      %v1263 = vld [vmem:[%s970 + $0x52] sm:$0xff]
      %v1264 = vld [vmem:[%s970 + $0x62] sm:$0xff]
      %v1265 = vld [vmem:[%s970 + $0x72] sm:$0xff]
      %1266 = vrot.lane.b32.xlu0 %v659, 4
      %v1267 = vpop.permute.xlu0 %1266
      %1268 = vrot.lane.b32.xlu0 %v660, 4
      %v1269 = vpop.permute.xlu0 %1268
      %1270 = vrot.lane.b32.xlu0 %v661, 4
      %v1271 = vpop.permute.xlu0 %1270
      %1272 = vrot.lane.b32.xlu0 %v662, 4
      %v1273 = vpop.permute.xlu0 %1272
      %1274 = vrot.lane.b32.xlu0 %v663, 4
      %v1275 = vpop.permute.xlu0 %1274
      %1276 = vrot.lane.b32.xlu0 %v664, 4
      %v1277 = vpop.permute.xlu0 %1276
      %1278 = vrot.lane.b32.xlu0 %v665, 4
      %v1279 = vpop.permute.xlu0 %1278
      %1280 = vrot.lane.b32.xlu0 %v666, 4
      %v1281 = vpop.permute.xlu0 %1280
      %1290 = vrot.lane.b32.xlu0 %v979, 8
      %v1291 = vpop.permute.xlu0 %1290
      %1292 = vrot.lane.b32.xlu0 %v980, 8
      %v1293 = vpop.permute.xlu0 %1292
      %1294 = vrot.lane.b32.xlu0 %v981, 8
      %v1295 = vpop.permute.xlu0 %1294
      %1296 = vrot.lane.b32.xlu0 %v982, 8
      %v1297 = vpop.permute.xlu0 %1296
      %1298 = vrot.lane.b32.xlu0 %v983, 8
      %v1299 = vpop.permute.xlu0 %1298
      %1300 = vrot.lane.b32.xlu0 %v984, 8
      %v1301 = vpop.permute.xlu0 %1300
      %1302 = vrot.lane.b32.xlu0 %v985, 8
      %v1303 = vpop.permute.xlu0 %1302
      %1304 = vrot.lane.b32.xlu0 %v986, 8
      %v1305 = vpop.permute.xlu0 %1304
      %1322 = vrot.lane.b32.xlu0 %v1258, 12
      %v1323 = vpop.permute.xlu0 %1322
      %1324 = vrot.lane.b32.xlu0 %v1259, 12
      %v1325 = vpop.permute.xlu0 %1324
      %1326 = vrot.lane.b32.xlu0 %v1260, 12
      %v1327 = vpop.permute.xlu0 %1326
      %1328 = vrot.lane.b32.xlu0 %v1261, 12
      %v1329 = vpop.permute.xlu0 %1328
      %1330 = vrot.lane.b32.xlu0 %v1262, 12
      %v1331 = vpop.permute.xlu0 %1330
      %1332 = vrot.lane.b32.xlu0 %v1263, 12
      %v1333 = vpop.permute.xlu0 %1332
      %1334 = vrot.lane.b32.xlu0 %v1264, 12
      %v1335 = vpop.permute.xlu0 %1334
      %1336 = vrot.lane.b32.xlu0 %v1265, 12
      %v1337 = vpop.permute.xlu0 %1336
      %v1346 = vsel %vm465, %v361, %v1267
      %v1347 = vsel %vm465, %v362, %v1269
      %v1348 = vsel %vm465, %v363, %v1271
      %v1349 = vsel %vm465, %v364, %v1273
      %v1350 = vsel %vm465, %v365, %v1275
      %v1351 = vsel %vm465, %v366, %v1277
      %v1352 = vsel %vm465, %v367, %v1279
      %v1353 = vsel %vm465, %v368, %v1281
      %v1354 = vsel %vm474, %v1346, %v1291
      %v1355 = vsel %vm474, %v1347, %v1293
      %v1356 = vsel %vm474, %v1348, %v1295
      %v1357 = vsel %vm474, %v1349, %v1297
      %v1358 = vsel %vm474, %v1350, %v1299
      %v1359 = vsel %vm474, %v1351, %v1301
      %v1360 = vsel %vm474, %v1352, %v1303
      %v1361 = vsel %vm474, %v1353, %v1305
      %v1362 = vsel %vm483, %v1354, %v1323
      %v1363 = vsel %vm483, %v1355, %v1325
      %v1364 = vsel %vm483, %v1356, %v1327
      %v1365 = vsel %vm483, %v1357, %v1329
      %v1366 = vsel %vm483, %v1358, %v1331
      %v1367 = vsel %vm483, %v1359, %v1333
      %v1368 = vsel %vm483, %v1360, %v1335
      %v1369 = vsel %vm483, %v1361, %v1337
      %s1370 = sadd.s32 %s492, 3
      %s1371 = smul.u32 %s1370, 16
      %s1372 = scalar_lea.vmem %s3, %s1371
      %v1373 = vld [vmem:[%s1372] sm:$0xff]
      %v1374 = vld [vmem:[%s1372 + $0x8] sm:$0xff]
      %v1376 = vsel %vm497, %v1362, 0
      %v1379 = vsel %vm497, %v1363, 0
      %v1382 = vsel %vm497, %v1364, 0
      %v1385 = vsel %vm497, %v1365, 0
      %v1388 = vsel %vm497, %v1366, 0
      %v1391 = vsel %vm497, %v1367, 0
      %v1394 = vsel %vm497, %v1368, 0
      %v1397 = vsel %vm497, %v1369, 0
      %1399 = vmatprep.subr.mxu0 0.0
      %1400 = vmatpush1.msra.mxu0 %v1373
      %1401 = vmatprep.subr.mxu0 0.0
      %1402 = vmatpush1.msra.mxu0 %v1374
      %1403 = vmatprep.subr.mxu0 0.0
      %1404 = vmatpush1.msra.mxu0 0.0
      %1405 = vmatprep.subr.mxu0 0.0
      %1406 = vmatpush1.msra.mxu0 0.0
      %1407 = vmatprep.subr.mxu0 0.0
      %1408 = vmatpush1.msra.mxu0 0.0
      %1409 = vmatprep.subr.mxu0 0.0
      %1410 = vmatpush1.msra.mxu0 0.0
      %1411 = vmatprep.subr.mxu0 0.0
      %1412 = vmatpush1.msra.mxu0 0.0
      %1413 = vmatprep.subr.mxu0 0.0
      %1414 = vmatpush1.msra.mxu0 0.0
      %1415 = vmatprep.subr.mxu0 0.0
      %1416 = vmatpush1.msra.mxu0 0.0
      %1417 = vmatprep.subr.mxu0 0.0
      %1418 = vmatpush1.msra.mxu0 0.0
      %1419 = vmatprep.subr.mxu0 0.0
      %1420 = vmatpush1.msra.mxu0 0.0
      %1421 = vmatprep.subr.mxu0 0.0
      %1422 = vmatpush1.msra.mxu0 0.0
      %1423 = vmatprep.subr.mxu0 0.0
      %1424 = vmatpush1.msra.mxu0 0.0
      %1425 = vmatprep.subr.mxu0 0.0
      %1426 = vmatpush1.msra.mxu0 0.0
      %1427 = vmatprep.subr.mxu0 0.0
      %1428 = vmatpush1.msra.mxu0 0.0
      %1429 = vmatprep.subr.mxu0 0.0
      %1430 = vmatpush1.msra.mxu0 0.0
      %1431 = vmatprep.subr.mxu0 0.0
      %1432 = vmatpush1.msra.mxu0 0.0
      %1433 = vmatprep.subr.mxu0 0.0
      %1434 = vmatpush1.msra.mxu0 0.0
      %1435 = vmatprep.subr.mxu0 0.0
      %1436 = vmatpush1.msra.mxu0 0.0
      %1437 = vmatprep.subr.mxu0 0.0
      %1438 = vmatpush1.msra.mxu0 0.0
      %1439 = vmatprep.subr.mxu0 0.0
      %1440 = vmatpush1.msra.mxu0 0.0
      %1441 = vmatprep.subr.mxu0 0.0
      %1442 = vmatpush1.msra.mxu0 0.0
      %1443 = vmatprep.subr.mxu0 0.0
      %1444 = vmatpush1.msra.mxu0 0.0
      %1445 = vmatprep.subr.mxu0 0.0
      %1446 = vmatpush1.msra.mxu0 0.0
      %1447 = vmatprep.subr.mxu0 0.0
      %1448 = vmatpush1.msra.mxu0 0.0
      %1449 = vmatprep.subr.mxu0 0.0
      %1450 = vmatpush1.msra.mxu0 0.0
      %1451 = vmatprep.subr.mxu0 0.0
      %1452 = vmatpush1.msra.mxu0 0.0
      %1453 = vmatprep.subr.mxu0 0.0
      %1454 = vmatpush1.msra.mxu0 0.0
      %1455 = vmatprep.subr.mxu0 0.0
      %1456 = vmatpush1.msra.mxu0 0.0
      %1457 = vmatprep.subr.mxu0 0.0
      %1458 = vmatpush1.msra.mxu0 0.0
      %1459 = vmatprep.subr.mxu0 0.0
      %1460 = vmatpush1.msra.mxu0 0.0
      %1461 = vmatprep.subr.mxu0 0.0
      %1462 = vmatpush1.msra.mxu0 0.0
      %1463 = vmatprep.mubr.f32.mxu0 0.0
      %1464 = vmatmul.mubr.f32.gmra.mrb[0].mxu0 %v1376
      %v1465 = vpop.f32.mrb[0].mxu0
      %v1466 = vadd.f32 0.0, %v1465
      %v1467 = vpop.f32.mrb[0].mxu0
      %1468 = vmatprep.mubr.f32.mxu0 0.0
      %1469 = vmatmul.mubr.f32.gmra.mrb[0].mxu0 %v1379
      %v1470 = vpop.f32.mrb[0].mxu0
      %v1471 = vadd.f32 0.0, %v1470
      %v1472 = vpop.f32.mrb[0].mxu0
      %1473 = vmatprep.mubr.f32.mxu0 0.0
      %1474 = vmatmul.mubr.f32.gmra.mrb[0].mxu0 %v1382
      %v1475 = vpop.f32.mrb[0].mxu0
      %v1476 = vadd.f32 0.0, %v1475
      %v1477 = vpop.f32.mrb[0].mxu0
      %1478 = vmatprep.mubr.f32.mxu0 0.0
      %1479 = vmatmul.mubr.f32.gmra.mrb[0].mxu0 %v1385
      %v1480 = vpop.f32.mrb[0].mxu0
      %v1481 = vadd.f32 0.0, %v1480
      %v1482 = vpop.f32.mrb[0].mxu0
      %1483 = vmatprep.mubr.f32.mxu0 0.0
      %1484 = vmatmul.mubr.f32.gmra.mrb[0].mxu0 %v1388
      %v1485 = vpop.f32.mrb[0].mxu0
      %v1486 = vadd.f32 0.0, %v1485
      %v1487 = vpop.f32.mrb[0].mxu0
      %1488 = vmatprep.mubr.f32.mxu0 0.0
      %1489 = vmatmul.mubr.f32.gmra.mrb[0].mxu0 %v1391
      %v1490 = vpop.f32.mrb[0].mxu0
      %v1491 = vadd.f32 0.0, %v1490
      %v1492 = vpop.f32.mrb[0].mxu0
      %1493 = vmatprep.mubr.f32.mxu0 0.0
      %1494 = vmatmul.mubr.f32.gmra.mrb[0].mxu0 %v1394
      %v1495 = vpop.f32.mrb[0].mxu0
      %v1496 = vadd.f32 0.0, %v1495
      %v1497 = vpop.f32.mrb[0].mxu0
      %1498 = vmatprep.mubr.f32.mxu0 0.0
      %1499 = vmatmul.mubr.f32.gmra.mrb[0].mxu0 %v1397
      %v1500 = vpop.f32.mrb[0].mxu0
      %v1501 = vadd.f32 0.0, %v1500
      %v1502 = vpop.f32.mrb[0].mxu0
      %1503 = vdwg.mxu0
      %v1504 = vld [vmem:[%s1233] sm:$0xff]
      %v1505 = vld [vmem:[%s1233 + $0x8] sm:$0xff]
      %v1506 = vld [vmem:[%s1233 + $0x10] sm:$0xff]
      %v1507 = vld [vmem:[%s1233 + $0x18] sm:$0xff]
      %v1508 = vld [vmem:[%s1233 + $0x20] sm:$0xff]
      %v1509 = vld [vmem:[%s1233 + $0x28] sm:$0xff]
      %v1510 = vld [vmem:[%s1233 + $0x30] sm:$0xff]
      %v1511 = vld [vmem:[%s1233 + $0x38] sm:$0xff]
      %1520 = vrot.lane.b32.xlu0 %v1466, 4
      %v1521 = vpop.permute.xlu0 %1520
      %1522 = vrot.lane.b32.xlu0 %v1471, 4
      %v1523 = vpop.permute.xlu0 %1522
      %1524 = vrot.lane.b32.xlu0 %v1476, 4
      %v1525 = vpop.permute.xlu0 %1524
      %1526 = vrot.lane.b32.xlu0 %v1481, 4
      %v1527 = vpop.permute.xlu0 %1526
      %1528 = vrot.lane.b32.xlu0 %v1486, 4
      %v1529 = vpop.permute.xlu0 %1528
      %1530 = vrot.lane.b32.xlu0 %v1491, 4
      %v1531 = vpop.permute.xlu0 %1530
      %1532 = vrot.lane.b32.xlu0 %v1496, 4
      %v1533 = vpop.permute.xlu0 %1532
      %1534 = vrot.lane.b32.xlu0 %v1501, 4
      %v1535 = vpop.permute.xlu0 %1534
      %v1544 = vadd.f32 %v1504, %v1521
      %v1545 = vadd.f32 %v1505, %v1523
      %v1546 = vadd.f32 %v1506, %v1525
      %v1547 = vadd.f32 %v1507, %v1527
      %v1548 = vadd.f32 %v1508, %v1529
      %v1549 = vadd.f32 %v1509, %v1531
      %v1550 = vadd.f32 %v1510, %v1533
      %v1551 = vadd.f32 %v1511, %v1535
      %1552 = vst.msk [vmem:[%s1233] sm:$0xff] %vm961, %v1544
      %1553 = vst.msk [vmem:[%s1233 + $0x8] sm:$0xff] %vm961, %v1545
      %1554 = vst.msk [vmem:[%s1233 + $0x10] sm:$0xff] %vm961, %v1546
      %1555 = vst.msk [vmem:[%s1233 + $0x18] sm:$0xff] %vm961, %v1547
      %1556 = vst.msk [vmem:[%s1233 + $0x20] sm:$0xff] %vm961, %v1548
      %1557 = vst.msk [vmem:[%s1233 + $0x28] sm:$0xff] %vm961, %v1549
      %1558 = vst.msk [vmem:[%s1233 + $0x30] sm:$0xff] %vm961, %v1550
      %1559 = vst.msk [vmem:[%s1233 + $0x38] sm:$0xff] %vm961, %v1551
      %p1560 = scmp.eq.s32.totalorder %s35, 1
      // Predicated region
      $region37: #{tpu_custom_call.1} parent=31 // pred_check
        %p1561 = pneg %p1560
      $region38: #{tpu_custom_call.1} parent=31 // pred_check_branch
        %1563 = sbr.rel (%p1561) target = $region40
      $region39: #{tpu_custom_call.1} parent=31 // pred_region
        %v1564 = vld [vmem:[#allocation2] sm:$0xff]
        %v1565 = vld [vmem:[#allocation2 + $0x8] sm:$0xff]
        %v1566 = vld [vmem:[#allocation2 + $0x10] sm:$0xff]
        %v1567 = vld [vmem:[#allocation2 + $0x18] sm:$0xff]
        %v1568 = vld [vmem:[#allocation2 + $0x20] sm:$0xff]
        %v1569 = vld [vmem:[#allocation2 + $0x28] sm:$0xff]
        %v1570 = vld [vmem:[#allocation2 + $0x30] sm:$0xff]
        %v1571 = vld [vmem:[#allocation2 + $0x38] sm:$0xff]
        %v1572 = vld [vmem:[%s1233] sm:$0xff]
        %v1573 = vld [vmem:[%s1233 + $0x8] sm:$0xff]
        %v1574 = vld [vmem:[%s1233 + $0x10] sm:$0xff]
        %v1575 = vld [vmem:[%s1233 + $0x18] sm:$0xff]
        %v1576 = vld [vmem:[%s1233 + $0x20] sm:$0xff]
        %v1577 = vld [vmem:[%s1233 + $0x28] sm:$0xff]
        %v1578 = vld [vmem:[%s1233 + $0x30] sm:$0xff]
        %v1579 = vld [vmem:[%s1233 + $0x38] sm:$0xff]
        %v1580 = vld [vmem:[%s4] sm:$0x1]
        %v1582 = vlaneseq
        %v1583 = vshrl.u32 %v1582, 7
        %v1584 = vsub.s32 0, %v1583
        %v1585 = vrot.slane %v1580, %v1584
        %v1587 = vadd.f32 %v1564, %v1585
        %v1588 = vadd.f32 %v1572, %v1585
        %v1589 = vadd.f32 %v1565, %v1585
        %v1590 = vadd.f32 %v1573, %v1585
        %v1591 = vadd.f32 %v1566, %v1585
        %v1592 = vadd.f32 %v1574, %v1585
        %v1593 = vadd.f32 %v1567, %v1585
        %v1594 = vadd.f32 %v1575, %v1585
        %v1595 = vadd.f32 %v1568, %v1585
        %v1596 = vadd.f32 %v1576, %v1585
        %v1597 = vadd.f32 %v1569, %v1585
        %v1598 = vadd.f32 %v1577, %v1585
        %v1599 = vadd.f32 %v1570, %v1585
        %v1600 = vadd.f32 %v1578, %v1585
        %v1601 = vadd.f32 %v1571, %v1585
        %v1602 = vadd.f32 %v1579, %v1585
        %1603 = vst.msk [vmem:[%s305] sm:$0xff] %vm474, %v1587
        %1604 = vst.msk [vmem:[%s305 + $0x8] sm:$0xff] %vm474, %v1588
        %1605 = vst.msk [vmem:[%s305 + $0x10] sm:$0xff] %vm474, %v1589
        %1606 = vst.msk [vmem:[%s305 + $0x18] sm:$0xff] %vm474, %v1590
        %1607 = vst.msk [vmem:[%s305 + $0x20] sm:$0xff] %vm474, %v1591
        %1608 = vst.msk [vmem:[%s305 + $0x28] sm:$0xff] %vm474, %v1592
        %1609 = vst.msk [vmem:[%s305 + $0x30] sm:$0xff] %vm474, %v1593
        %1610 = vst.msk [vmem:[%s305 + $0x38] sm:$0xff] %vm474, %v1594
        %1611 = vst.msk [vmem:[%s305 + $0x40] sm:$0xff] %vm474, %v1595
        %1612 = vst.msk [vmem:[%s305 + $0x48] sm:$0xff] %vm474, %v1596
        %1613 = vst.msk [vmem:[%s305 + $0x50] sm:$0xff] %vm474, %v1597
        %1614 = vst.msk [vmem:[%s305 + $0x58] sm:$0xff] %vm474, %v1598
        %1615 = vst.msk [vmem:[%s305 + $0x60] sm:$0xff] %vm474, %v1599
        %1616 = vst.msk [vmem:[%s305 + $0x68] sm:$0xff] %vm474, %v1600
        %1617 = vst.msk [vmem:[%s305 + $0x70] sm:$0xff] %vm474, %v1601
        %1618 = vst.msk [vmem:[%s305 + $0x78] sm:$0xff] %vm474, %v1602
      $region40: #{tpu_custom_call.1} parent=31 // pred_fallthru
        _
      %s1619 = smul.u32 16, %s34
      %p1620 = scmp.lt.s32.totalorder %s32, 1
      %s1621 = scalar_select %p1620, %s32, 1
      %p1622 = scmp.lt.s32.totalorder %s33, 4
      %s1623 = scalar_select %p1622, %s33, 4
      %p1624 = scmp.lt.s32.totalorder %s1619, 15
      %s1625 = scalar_select %p1624, %s1619, 15
      %s1626 = smul.addr %s1623, 16
      %s1627 = sadd.s32 %s1625, %s1626
      %s1628 = smul.addr %s1621, 80
      %s1629 = sadd.s32 %s1627, %s1628
      %s1630 = smul.addr %s1629, 8
      %s1631 = scalar_lea.vmem %s5, %s1630
      // Predicated region
      $region41: #{tpu_custom_call.1} parent=31 // pred_check
        %p1632 = pneg %p162
      $region42: #{tpu_custom_call.1} parent=31 // pred_check_branch
        %1634 = sbr.rel (%p1632) target = $region44
      $region43: #{tpu_custom_call.1} parent=31 // pred_region
        %s1635 = smul.u32 16, %s34
      $region44: #{tpu_custom_call.1} parent=31 // pred_fallthru
        _
    $region32: #{tpu_custom_call.1} parent=5 // pred_fallthru
      _
    %p1636 = scmp.le.s32.totalorder 2, %s21
    // Predicated region
    $region45: #{tpu_custom_call.1} parent=5 // pred_check
      %p1637 = pneg %p1636
    $region46: #{tpu_custom_call.1} parent=5 // pred_check_branch
      %1639 = sbr.rel (%p1637) target = $region48
    $region47: #{tpu_custom_call.1} parent=5 // pred_region
      %s1640 = ssub.s32 %s21, 2
      // Predicated region
      $region49: #{tpu_custom_call.1} parent=47 // pred_check
        %p1641 = pneg %p168
      $region50: #{tpu_custom_call.1} parent=47 // pred_check_branch
        %1643 = sbr.rel (%p1641) target = $region52
      $region51: #{tpu_custom_call.1} parent=47 // pred_region
        %s1644 = smul.u32 16, %s38
        %p1645 = scmp.lt.s32.totalorder %s36, 1
        %s1646 = scalar_select %p1645, %s36, 1
        %p1647 = scmp.lt.s32.totalorder %s37, 4
        %s1648 = scalar_select %p1647, %s37, 4
        %p1649 = scmp.lt.s32.totalorder %s1644, 15
        %s1650 = scalar_select %p1649, %s1644, 15
        %s1651 = smul.addr %s1648, 16
        %s1652 = sadd.s32 %s1650, %s1651
        %s1653 = smul.addr %s1646, 80
        %s1654 = sadd.s32 %s1652, %s1653
        %s1655 = smul.addr %s1654, 8
        %s1656 = scalar_lea.vmem %s5, %s1655
      $region52: #{tpu_custom_call.1} parent=47 // pred_fallthru
        _
    $region48: #{tpu_custom_call.1} parent=5 // pred_fallthru
      _
  $region6: #{tpu_custom_call.1} parent=0 // loop_footer
    %s25 = sadd.s32 1, %s21
  $region7: #{tpu_custom_call.1} parent=0 // loop_footer_branch
    %20 = sbr.rel target = $region3
  $region8: #{tpu_custom_call.1} parent=0 // loop_exit
    _

</llo_original>
